<compile_context>
chip_gen: v6e
topology: v6e:2x2x1
jax: 0.10.0
libtpu: 0.0.40
codegen_flags: <defaults>
</compile_context>

<pallas_src>
from functools import partial

import jax
import jax.numpy as jnp
from jax.experimental import pallas as pl
from jax.experimental.pallas import tpu as pltpu


# ----------------------------------------------------------------------------
# Fused forward kernel (one batch block per grid step)
# ----------------------------------------------------------------------------
def _fused_kernel(xs1_ref, fpack_ref, wpack_ref, wfc_ref, bsum_ref,
                  out_ref, h1g_ref, xs2_ref, *,
                  np_, g, c1, c2, hid, k1, k2, offsets, b_blk):
    f32 = jnp.float32
    bf16 = jnp.bfloat16

    # ---- static slices of the packed parameter arrays (hoisted loads) -----
    bdmask = fpack_ref[0:c2, 0:c2 * hid]              # (c2, c2*hid) block-diag mask
    ring = fpack_ref[c2:c2 + 1, 0:np_]                # (1, NP) interior (ring) mask
    br = c2 + 1
    bfc = fpack_ref[br:br + 1, 0:hid]                 # (1, hid)
    bmlp = fpack_ref[br:br + 1, hid:2 * hid]          # (1, hid)
    boutp = fpack_ref[br:br + 1, 2 * hid:2 * hid + 128]  # (1, 128)

    r0 = 0
    w1s = wpack_ref[r0:r0 + c1, 0:k1]                 # (c1, 9C+1)   bf16
    r0 += c1
    w2s = wpack_ref[r0:r0 + c2, 0:k2]                 # (c2, 9c1+1)  bf16
    r0 += c2
    wmlp = wpack_ref[r0:r0 + hid, 0:hid]              # (hid, hid)   bf16
    r0 += hid
    woutp = wpack_ref[r0:r0 + hid, 0:128]             # (hid, 128)   bf16

    wfc = wfc_ref[...]                                # (NP, c2*hid) bf16
    bsum = bsum_ref[...]                              # (c2*hid, hid) f32 selection

    # ---- per-step scratch init (guards + constant ones row only) -----------
    # Re-done every step: the parallel grid axis may be split across cores and
    # each core owns its own VMEM scratch.  Cost: two (c1,128) stores.
    zg = jnp.zeros((c1, g), bf16)
    h1g_ref[:, 0:g] = zg
    h1g_ref[:, g + np_:np_ + 2 * g] = zg
    xs2_ref[k2 - 1:k2, :] = jnp.ones((1, np_), bf16)  # folds conv2 bias into dot

    for i in range(b_blk):
        # ---- conv1: ONE MXU dot over the wrapper-built tap stack -----------
        xs1 = xs1_ref[i]                                         # (k1, NP) bf16
        h1 = jnp.maximum(
            jnp.dot(w1s, xs1, preferred_element_type=f32), 0.0) * ring
        # lane-aligned interior store into the guarded flat buffer (g == 128)
        h1g_ref[:, g:g + np_] = h1.astype(bf16)

        # ---- stack the 9 shifted conv2 taps into the contraction dim -------
        for t, off in enumerate(offsets):
            xs2_ref[t * c1:(t + 1) * c1, :] = h1g_ref[:, g + off:g + off + np_]

        # ---- conv2: ONE MXU dot (bias via the ones row).  Padding-ring -----
        # columns of h2 hold garbage, but wfc has exact zeros on those rows.
        h2 = jnp.maximum(
            jnp.dot(w2s, xs2_ref[...], preferred_element_type=f32), 0.0)

        # ---- CNNBase fc: channel-blocked dot, then block-diagonal ----------
        # extraction via mask * reduce * selection-matmul (no 32-way loop).
        d = jnp.dot(h2.astype(bf16), wfc, preferred_element_type=f32)  # (c2, c2*hid)
        colsum = jnp.sum(d * bdmask, axis=0, keepdims=True)            # (1, c2*hid)
        hfc = jnp.maximum(
            jnp.dot(colsum, bsum, preferred_element_type=f32) + bfc, 0.0)

        # ---- MLP hidden + ReLU, output linear (action dim padded to 128) ---
        hm = jnp.maximum(
            jnp.dot(hfc.astype(bf16), wmlp, preferred_element_type=f32) + bmlp,
            0.0)
        out = jnp.dot(hm.astype(bf16), woutp, preferred_element_type=f32) + boutp
        out_ref[i] = out.astype(out_ref.dtype)                          # (1, 128)


# ----------------------------------------------------------------------------
# One-time parameter preparation (PyTorch layouts -> kernel layouts)
# ----------------------------------------------------------------------------
def _prepare_kernel_params(params, map_shape, hidden_size, action_space):
    f32, bf16 = jnp.float32, jnp.bfloat16
    C, H, W = map_shape
    hp, wp = H + 2, W + 2
    np_ = hp * wp
    c1 = params["conv1_w"].shape[0]
    c2 = params["conv2_w"].shape[0]
    hid = hidden_size
    k1 = 9 * C + 1
    k2 = 9 * c1 + 1
    assert action_space <= 128

    # conv weights stacked along the contraction dim (tap-major, cin-minor),
    # bias folded in as a trailing column (multiplied by the ones row).
    w1s = jnp.transpose(params["conv1_w"], (0, 2, 3, 1)).reshape(c1, 9 * C)
    w1s = jnp.concatenate([w1s, params["conv1_b"].reshape(c1, 1)], axis=1)
    w2s = jnp.transpose(params["conv2_w"], (0, 2, 3, 1)).reshape(c2, 9 * c1)
    w2s = jnp.concatenate([w2s, params["conv2_b"].reshape(c2, 1)], axis=1)

    # fc weight (hidden, C2*H*W), channel-major flatten -> (NP, C2*hidden),
    # spatially zero-padded so the padding-ring rows are EXACT zeros (this is
    # what makes the conv2 ring garbage harmless).
    fcw = params["fc_w"].reshape(hid, c2, H, W)
    fcw = jnp.pad(fcw, ((0, 0), (0, 0), (1, 1), (1, 1))).reshape(hid, c2, np_)
    wfcs = jnp.transpose(fcw, (2, 1, 0)).reshape(np_, c2 * hid).astype(bf16)

    # output weight / bias padded to a lane-dense 128-wide action dim.
    wout = jnp.pad(params["out_w"].T, ((0, 0), (0, 128 - action_space)))
    bout = jnp.pad(params["out_b"].reshape(1, -1),
                   ((0, 0), (0, 128 - action_space)))

    # bf16 weight pack: rows [w1s ; w2s ; mlp_w.T ; out_w.T(padded)]
    wcols = max(k1, k2, hid, 128)

    def _row(m):
        return jnp.pad(m, ((0, 0), (0, wcols - m.shape[1])))

    wpack = jnp.concatenate(
        [_row(w1s), _row(w2s), _row(params["mlp_w"].T), _row(wout)],
        axis=0).astype(bf16)

    # f32 pack: block-diagonal mask / interior ring mask / biases.
    fcols = max(c2 * hid, np_, 2 * hid + 128)
    bdmask = jnp.repeat(jnp.eye(c2, dtype=f32), hid, axis=1)        # (c2, c2*hid)
    bdmask = jnp.pad(bdmask, ((0, 0), (0, fcols - c2 * hid)))
    ring = jnp.pad(jnp.ones((H, W), f32), ((1, 1), (1, 1))).reshape(1, np_)
    ring_row = jnp.pad(ring, ((0, 0), (0, fcols - np_)))
    bias_row = jnp.zeros((1, fcols), f32)
    bias_row = bias_row.at[0, 0:hid].set(params["fc_b"])
    bias_row = bias_row.at[0, hid:2 * hid].set(params["mlp_b"])
    bias_row = bias_row.at[0, 2 * hid:2 * hid + 128].set(bout[0])
    fpack = jnp.concatenate([bdmask, ring_row, bias_row], axis=0)   # (c2+2, fcols)

    # selection matrix folding the c2 diagonal blocks back down to (1, hid).
    bsum = jnp.tile(jnp.eye(hid, dtype=f32), (c2, 1))               # (c2*hid, hid)

    return {"fpack": fpack, "wpack": wpack, "wfcs": wfcs, "bsum": bsum}


# ----------------------------------------------------------------------------
# Forward (jit-able): one fused XLA prologue (pad + conv1 tap-stack) + one
# fused pallas_call for the whole network.
# ----------------------------------------------------------------------------
def dqn_map_net_forward(kparams, obs, obs_map, edges=None, edges_feature=None,
                        *, action_space, grid_steps=2):
    del obs, edges, edges_feature          # unused by the PyTorch forward path
    B, C, H, W = obs_map.shape
    hp, wp = H + 2, W + 2
    np_ = hp * wp
    g = 128                                # guard width; 128 => aligned stores

    bsum = kparams["bsum"]
    wpack = kparams["wpack"]
    hid = bsum.shape[1]
    c2 = bsum.shape[0] // hid
    c1 = wpack.shape[0] - c2 - 2 * hid
    k1 = 9 * C + 1
    k2 = 9 * c1 + 1
    assert kparams["wfcs"].shape[0] == np_

    # grid_steps=2 -> v7x splits the batch across both TensorCores; on
    # single-core v5e/v6e pass grid_steps=1 to avoid the extra step overhead.
    n_steps = grid_steps if (grid_steps >= 1 and B % grid_steps == 0) else 1
    b_blk = B // n_steps

    # Prologue (one fused XLA op): zero-pad, build the conv1 tap stack with a
    # trailing ones row (folds the conv1 bias), cast to bf16 for the MXU.
    x = obs_map.astype(jnp.float32)
    xp2 = jnp.pad(x, ((0, 0), (0, 0), (2, 2), (2, 2)))          # (B, C, H+4, W+4)
    taps = [xp2[:, :, dy:dy + hp, dx:dx + wp].reshape(B, C, np_)
            for dy in range(3) for dx in range(3)]
    ones = jnp.ones((B, 1, np_), jnp.float32)
    xs1 = jnp.concatenate(taps + [ones], axis=1).astype(jnp.bfloat16)  # (B,k1,NP)

    offsets = tuple((dy - 1) * wp + (dx - 1)
                    for dy in range(3) for dx in range(3))

    kernel = partial(_fused_kernel, np_=np_, g=g, c1=c1, c2=c2, hid=hid,
                     k1=k1, k2=k2, offsets=offsets, b_blk=b_blk)

    out = pl.pallas_call(
        kernel,
        out_shape=jax.ShapeDtypeStruct((B, 1, 128), jnp.float32),
        grid_spec=pltpu.PrefetchScalarGridSpec(
            num_scalar_prefetch=0,
            grid=(n_steps,),
            in_specs=[
                pl.BlockSpec((b_blk, k1, np_), lambda b: (b, 0, 0)),   # tap stack
                pl.BlockSpec(kparams["fpack"].shape, lambda b: (0, 0)),  # f32 pack
                pl.BlockSpec(wpack.shape, lambda b: (0, 0)),             # bf16 pack
                pl.BlockSpec(kparams["wfcs"].shape, lambda b: (0, 0)),   # fc weight
                pl.BlockSpec(bsum.shape, lambda b: (0, 0)),              # selection
            ],
            out_specs=pl.BlockSpec((b_blk, 1, 128), lambda b: (b, 0, 0)),
            scratch_shapes=[
                pltpu.VMEM((c1, np_ + 2 * g), jnp.bfloat16),   # guarded h1
                pltpu.VMEM((k2, np_), jnp.bfloat16),           # conv2 tap stack
            ]),
        compiler_params=pltpu.CompilerParams(
            dimension_semantics=("parallel",)),    # batch over v7x's 2 TCs
    )(xs1, kparams["fpack"], wpack, kparams["wfcs"], bsum)

    return out[:, 0, :action_space], [None]


# ----------------------------------------------------------------------------
# Deterministic synthetic parameters (PyTorch layouts) + pure-JAX reference
# ----------------------------------------------------------------------------
def init_params(key, hidden_size, map_shape, action_space):
    C, H, W = map_shape
    ks = jax.random.split(key, 10)

    def rnd(k, shape, scale):
        return (scale * jax.random.normal(k, shape)).astype(jnp.float32)

    return {
        # PyTorch layouts: conv (Cout, Cin, kh, kw); Linear (out_f, in_f)
        "conv1_w": rnd(ks[0], (16, C, 3, 3), 0.1),
        "conv1_b": rnd(ks[1], (16,), 0.1),
        "conv2_w": rnd(ks[2], (32, 16, 3, 3), 0.1),
        "conv2_b": rnd(ks[3], (32,), 0.1),
        "fc_w":    rnd(ks[4], (hidden_size, 32 * H * W), 0.02),
        "fc_b":    rnd(ks[5], (hidden_size,), 0.02),
        "mlp_w":   rnd(ks[6], (hidden_size, hidden_size), 0.1),
        "mlp_b":   rnd(ks[7], (hidden_size,), 0.1),
        "out_w":   rnd(ks[8], (action_space, hidden_size), 0.1),
        "out_b":   rnd(ks[9], (action_space,), 0.1),
    }


def reference_forward(params, obs_map):
    """Plain-JAX (XLA) reference with the same bf16-rounded matmul operands."""
    f32, bf16 = jnp.float32, jnp.bfloat16

    def rb(t):  # round to bf16 (matches the kernel's MXU operand precision)
        return t.astype(bf16).astype(f32)

    dn = ("NCHW", "OIHW", "NCHW")
    x = rb(obs_map.astype(f32))
    y1 = jax.lax.conv_general_dilated(x, rb(params["conv1_w"]), (1, 1), "SAME",
                                      dimension_numbers=dn)
    h1 = jnp.maximum(y1 + rb(params["conv1_b"])[None, :, None, None], 0.0)
    y2 = jax.lax.conv_general_dilated(rb(h1), rb(params["conv2_w"]), (1, 1),
                                      "SAME", dimension_numbers=dn)
    h2 = jnp.maximum(y2 + rb(params["conv2_b"])[None, :, None, None], 0.0)
    flat = h2.reshape(h2.shape[0], -1)
    hfc = jnp.maximum(rb(flat) @ rb(params["fc_w"]).T + params["fc_b"], 0.0)
    hm = jnp.maximum(rb(hfc) @ rb(params["mlp_w"]).T + params["mlp_b"], 0.0)
    return rb(hm) @ rb(params["out_w"]).T + params["out_b"]


# ----------------------------------------------------------------------------
if __name__ == "__main__":
    hidden_size = 32
    map_shape = (4, 16, 16)        # (C, H, W)
    action_space = 5
    batch = 2
    obs_length = 8

    key = jax.random.PRNGKey(0)
    kp, ko, km = jax.random.split(key, 3)

    params = init_params(kp, hidden_size, map_shape, action_space)
    obs = jax.random.normal(ko, (batch, obs_length), dtype=jnp.float32)
    obs_map = jax.random.normal(km, (batch,) + map_shape, dtype=jnp.float32)

    # One-time weight layout prep (hoisted out of the per-call forward).
    kparams = _prepare_kernel_params(params, map_shape, hidden_size,
                                     action_space)
    fwd = jax.jit(partial(dqn_map_net_forward, action_space=action_space,
                          grid_steps=2))

    out, extra = fwd(kparams, obs, obs_map)
    out = jax.block_until_ready(out)

    assert out.shape == (batch, action_space)
    assert extra == [None]

    ref = reference_forward(params, obs_map)
    err = float(jnp.max(jnp.abs(out - ref)))
    assert err < 2e-2, f"mismatch vs reference: max abs err = {err}"

    print("KERNEL_OK")
</pallas_src>

<mosaic_0001>
module attributes {stable_mosaic.version = 11 : i64} {
  func.func @_fused_kernel(%arg0: i32, %arg1: memref<1x37x324xbf16, #tpu.memory_space<vmem>>, %arg2: memref<34x1024xf32, #tpu.memory_space<vmem>>, %arg3: memref<112x145xbf16, #tpu.memory_space<vmem>>, %arg4: memref<324x1024xbf16, #tpu.memory_space<vmem>>, %arg5: memref<1024x32xf32, #tpu.memory_space<vmem>>, %arg6: memref<1x1x128xf32, #tpu.memory_space<vmem>>, %arg7: memref<16x580xbf16, #tpu.memory_space<vmem>>, %arg8: memref<145x324xbf16, #tpu.memory_space<vmem>>) attributes {dimension_semantics = [#tpu.dimension_semantics<parallel>], iteration_bounds = array<i64: 2>, scalar_prefetch = 0 : i64, scratch_operands = 2 : i64, tpu.core_type = #tpu.core_type<tc>, window_params = [{transform_indices = @transform_0, window_bounds = array<i64: 1, 37, 324>}, {pipeline_mode = #tpu.pipeline_mode<synchronous>, transform_indices = @transform_1, window_bounds = array<i64: 34, 1024>}, {pipeline_mode = #tpu.pipeline_mode<synchronous>, transform_indices = @transform_2, window_bounds = array<i64: 112, 145>}, {pipeline_mode = #tpu.pipeline_mode<synchronous>, transform_indices = @transform_3, window_bounds = array<i64: 324, 1024>}, {pipeline_mode = #tpu.pipeline_mode<synchronous>, transform_indices = @transform_4, window_bounds = array<i64: 1024, 32>}, {transform_indices = @transform_5, window_bounds = array<i64: 1, 1, 128>}]} {
    %c0 = arith.constant 0 : index
    %c0_0 = arith.constant 0 : index
    %0 = vector.load %arg2[%c0, %c0_0] : memref<34x1024xf32, #tpu.memory_space<vmem>>, vector<32x1024xf32>
    %c32 = arith.constant 32 : index
    %c0_1 = arith.constant 0 : index
    %1 = vector.load %arg2[%c32, %c0_1] : memref<34x1024xf32, #tpu.memory_space<vmem>>, vector<1x324xf32>
    %c33 = arith.constant 33 : index
    %c0_2 = arith.constant 0 : index
    %2 = vector.load %arg2[%c33, %c0_2] : memref<34x1024xf32, #tpu.memory_space<vmem>>, vector<1x32xf32>
    %c33_3 = arith.constant 33 : index
    %c32_4 = arith.constant 32 : index
    %3 = vector.load %arg2[%c33_3, %c32_4] : memref<34x1024xf32, #tpu.memory_space<vmem>>, vector<1x32xf32>
    %c33_5 = arith.constant 33 : index
    %c64 = arith.constant 64 : index
    %4 = vector.load %arg2[%c33_5, %c64] : memref<34x1024xf32, #tpu.memory_space<vmem>>, vector<1x128xf32>
    %c0_6 = arith.constant 0 : index
    %c0_7 = arith.constant 0 : index
    %5 = vector.load %arg3[%c0_6, %c0_7] : memref<112x145xbf16, #tpu.memory_space<vmem>>, vector<16x37xbf16>
    %c16 = arith.constant 16 : index
    %c0_8 = arith.constant 0 : index
    %6 = vector.load %arg3[%c16, %c0_8] : memref<112x145xbf16, #tpu.memory_space<vmem>>, vector<32x145xbf16>
    %c48 = arith.constant 48 : index
    %c0_9 = arith.constant 0 : index
    %7 = vector.load %arg3[%c48, %c0_9] : memref<112x145xbf16, #tpu.memory_space<vmem>>, vector<32x32xbf16>
    %c80 = arith.constant 80 : index
    %c0_10 = arith.constant 0 : index
    %8 = vector.load %arg3[%c80, %c0_10] : memref<112x145xbf16, #tpu.memory_space<vmem>>, vector<32x128xbf16>
    %c0_11 = arith.constant 0 : index
    %c0_12 = arith.constant 0 : index
    %9 = vector.load %arg4[%c0_11, %c0_12] : memref<324x1024xbf16, #tpu.memory_space<vmem>>, vector<324x1024xbf16>
    %c0_13 = arith.constant 0 : index
    %c0_14 = arith.constant 0 : index
    %10 = vector.load %arg5[%c0_13, %c0_14] : memref<1024x32xf32, #tpu.memory_space<vmem>>, vector<1024x32xf32>
    %cst = arith.constant 0.000000e+00 : bf16
    %11 = vector.broadcast %cst : bf16 to vector<16x128xbf16>
    %c0_15 = arith.constant 0 : index
    %c0_16 = arith.constant 0 : index
    %12 = vector.load %arg7[%c0_15, %c0_16] : memref<16x580xbf16, #tpu.memory_space<vmem>>, vector<16x128xbf16>
    tpu.vector_store %arg7[%c0_15, %c0_16], %11 {strides = array<i32>} : memref<16x580xbf16, #tpu.memory_space<vmem>>, vector<16x128xbf16>,
    %c0_17 = arith.constant 0 : index
    %c452 = arith.constant 452 : index
    %13 = vector.load %arg7[%c0_17, %c452] : memref<16x580xbf16, #tpu.memory_space<vmem>>, vector<16x128xbf16>
    tpu.vector_store %arg7[%c0_17, %c452], %11 {strides = array<i32>} : memref<16x580xbf16, #tpu.memory_space<vmem>>, vector<16x128xbf16>,
    %cst_18 = arith.constant 1.000000e+00 : bf16
    %14 = vector.broadcast %cst_18 : bf16 to vector<1x324xbf16>
    %c144 = arith.constant 144 : index
    %c0_19 = arith.constant 0 : index
    %15 = vector.load %arg8[%c144, %c0_19] : memref<145x324xbf16, #tpu.memory_space<vmem>>, vector<1x324xbf16>
    tpu.vector_store %arg8[%c144, %c0_19], %14 {strides = array<i32>} : memref<145x324xbf16, #tpu.memory_space<vmem>>, vector<1x324xbf16>,
    %c0_20 = arith.constant 0 : index
    %c0_21 = arith.constant 0 : index
    %c0_22 = arith.constant 0 : index
    %16 = vector.load %arg1[%c0_20, %c0_21, %c0_22] : memref<1x37x324xbf16, #tpu.memory_space<vmem>>, vector<1x37x324xbf16>
    %17 = vector.shape_cast %16 : vector<1x37x324xbf16> to vector<37x324xbf16>
    %cst_23 = arith.constant dense<0.000000e+00> : vector<16x324xf32>
    %18 = tpu.matmul %5, %17, %cst_23 {dimension_numbers = #tpu.dot_dimension_numbers<[1], [0], [0], [1], [0, 0, 1, 1], [], []>} : vector<16x37xbf16>, vector<37x324xbf16>, vector<16x324xf32> -> vector<16x324xf32>
    %cst_24 = arith.constant 0.000000e+00 : f32
    %19 = vector.broadcast %cst_24 : f32 to vector<16x324xf32>
    %20 = arith.maximumf %18, %19 : vector<16x324xf32>
    %21 = vector.broadcast %1 : vector<1x324xf32> to vector<16x324xf32>
    %22 = arith.mulf %20, %21 : vector<16x324xf32>
    %23 = arith.truncf %22 : vector<16x324xf32> to vector<16x324xbf16>
    %c0_25 = arith.constant 0 : index
    %c128 = arith.constant 128 : index
    %24 = vector.load %arg7[%c0_25, %c128] : memref<16x580xbf16, #tpu.memory_space<vmem>>, vector<16x324xbf16>
    tpu.vector_store %arg7[%c0_25, %c128], %23 {strides = array<i32>} : memref<16x580xbf16, #tpu.memory_space<vmem>>, vector<16x324xbf16>,
    %c0_26 = arith.constant 0 : index
    %c109 = arith.constant 109 : index
    %25 = vector.load %arg7[%c0_26, %c109] : memref<16x580xbf16, #tpu.memory_space<vmem>>, vector<16x324xbf16>
    %c0_27 = arith.constant 0 : index
    %c0_28 = arith.constant 0 : index
    %26 = vector.load %arg8[%c0_27, %c0_28] : memref<145x324xbf16, #tpu.memory_space<vmem>>, vector<16x324xbf16>
    tpu.vector_store %arg8[%c0_27, %c0_28], %25 {strides = array<i32>} : memref<145x324xbf16, #tpu.memory_space<vmem>>, vector<16x324xbf16>,
    %c0_29 = arith.constant 0 : index
    %c110 = arith.constant 110 : index
    %27 = vector.load %arg7[%c0_29, %c110] : memref<16x580xbf16, #tpu.memory_space<vmem>>, vector<16x324xbf16>
    %c16_30 = arith.constant 16 : index
    %c0_31 = arith.constant 0 : index
    %28 = vector.load %arg8[%c16_30, %c0_31] : memref<145x324xbf16, #tpu.memory_space<vmem>>, vector<16x324xbf16>
    tpu.vector_store %arg8[%c16_30, %c0_31], %27 {strides = array<i32>} : memref<145x324xbf16, #tpu.memory_space<vmem>>, vector<16x324xbf16>,
    %c0_32 = arith.constant 0 : index
    %c111 = arith.constant 111 : index
    %29 = vector.load %arg7[%c0_32, %c111] : memref<16x580xbf16, #tpu.memory_space<vmem>>, vector<16x324xbf16>
    %c32_33 = arith.constant 32 : index
    %c0_34 = arith.constant 0 : index
    %30 = vector.load %arg8[%c32_33, %c0_34] : memref<145x324xbf16, #tpu.memory_space<vmem>>, vector<16x324xbf16>
    tpu.vector_store %arg8[%c32_33, %c0_34], %29 {strides = array<i32>} : memref<145x324xbf16, #tpu.memory_space<vmem>>, vector<16x324xbf16>,
    %c0_35 = arith.constant 0 : index
    %c127 = arith.constant 127 : index
    %31 = vector.load %arg7[%c0_35, %c127] : memref<16x580xbf16, #tpu.memory_space<vmem>>, vector<16x324xbf16>
    %c48_36 = arith.constant 48 : index
    %c0_37 = arith.constant 0 : index
    %32 = vector.load %arg8[%c48_36, %c0_37] : memref<145x324xbf16, #tpu.memory_space<vmem>>, vector<16x324xbf16>
    tpu.vector_store %arg8[%c48_36, %c0_37], %31 {strides = array<i32>} : memref<145x324xbf16, #tpu.memory_space<vmem>>, vector<16x324xbf16>,
    %c0_38 = arith.constant 0 : index
    %c128_39 = arith.constant 128 : index
    %33 = vector.load %arg7[%c0_38, %c128_39] : memref<16x580xbf16, #tpu.memory_space<vmem>>, vector<16x324xbf16>
    %c64_40 = arith.constant 64 : index
    %c0_41 = arith.constant 0 : index
    %34 = vector.load %arg8[%c64_40, %c0_41] : memref<145x324xbf16, #tpu.memory_space<vmem>>, vector<16x324xbf16>
    tpu.vector_store %arg8[%c64_40, %c0_41], %33 {strides = array<i32>} : memref<145x324xbf16, #tpu.memory_space<vmem>>, vector<16x324xbf16>,
    %c0_42 = arith.constant 0 : index
    %c129 = arith.constant 129 : index
    %35 = vector.load %arg7[%c0_42, %c129] : memref<16x580xbf16, #tpu.memory_space<vmem>>, vector<16x324xbf16>
    %c80_43 = arith.constant 80 : index
    %c0_44 = arith.constant 0 : index
    %36 = vector.load %arg8[%c80_43, %c0_44] : memref<145x324xbf16, #tpu.memory_space<vmem>>, vector<16x324xbf16>
    tpu.vector_store %arg8[%c80_43, %c0_44], %35 {strides = array<i32>} : memref<145x324xbf16, #tpu.memory_space<vmem>>, vector<16x324xbf16>,
    %c0_45 = arith.constant 0 : index
    %c145 = arith.constant 145 : index
    %37 = vector.load %arg7[%c0_45, %c145] : memref<16x580xbf16, #tpu.memory_space<vmem>>, vector<16x324xbf16>
    %c96 = arith.constant 96 : index
    %c0_46 = arith.constant 0 : index
    %38 = vector.load %arg8[%c96, %c0_46] : memref<145x324xbf16, #tpu.memory_space<vmem>>, vector<16x324xbf16>
    tpu.vector_store %arg8[%c96, %c0_46], %37 {strides = array<i32>} : memref<145x324xbf16, #tpu.memory_space<vmem>>, vector<16x324xbf16>,
    %c0_47 = arith.constant 0 : index
    %c146 = arith.constant 146 : index
    %39 = vector.load %arg7[%c0_47, %c146] : memref<16x580xbf16, #tpu.memory_space<vmem>>, vector<16x324xbf16>
    %c112 = arith.constant 112 : index
    %c0_48 = arith.constant 0 : index
    %40 = vector.load %arg8[%c112, %c0_48] : memref<145x324xbf16, #tpu.memory_space<vmem>>, vector<16x324xbf16>
    tpu.vector_store %arg8[%c112, %c0_48], %39 {strides = array<i32>} : memref<145x324xbf16, #tpu.memory_space<vmem>>, vector<16x324xbf16>,
    %c0_49 = arith.constant 0 : index
    %c147 = arith.constant 147 : index
    %41 = vector.load %arg7[%c0_49, %c147] : memref<16x580xbf16, #tpu.memory_space<vmem>>, vector<16x324xbf16>
    %c128_50 = arith.constant 128 : index
    %c0_51 = arith.constant 0 : index
    %42 = vector.load %arg8[%c128_50, %c0_51] : memref<145x324xbf16, #tpu.memory_space<vmem>>, vector<16x324xbf16>
    tpu.vector_store %arg8[%c128_50, %c0_51], %41 {strides = array<i32>} : memref<145x324xbf16, #tpu.memory_space<vmem>>, vector<16x324xbf16>,
    %c0_52 = arith.constant 0 : index
    %c0_53 = arith.constant 0 : index
    %43 = vector.load %arg8[%c0_52, %c0_53] : memref<145x324xbf16, #tpu.memory_space<vmem>>, vector<145x324xbf16>
    %cst_54 = arith.constant dense<0.000000e+00> : vector<32x324xf32>
    %44 = tpu.matmul %6, %43, %cst_54 {dimension_numbers = #tpu.dot_dimension_numbers<[1], [0], [0], [1], [0, 0, 1, 1], [], []>} : vector<32x145xbf16>, vector<145x324xbf16>, vector<32x324xf32> -> vector<32x324xf32>
    %cst_55 = arith.constant 0.000000e+00 : f32
    %45 = vector.broadcast %cst_55 : f32 to vector<32x324xf32>
    %46 = arith.maximumf %44, %45 : vector<32x324xf32>
    %47 = arith.truncf %46 : vector<32x324xf32> to vector<32x324xbf16>
    %cst_56 = arith.constant dense<0.000000e+00> : vector<32x1024xf32>
    %48 = tpu.matmul %47, %9, %cst_56 {dimension_numbers = #tpu.dot_dimension_numbers<[1], [0], [0], [1], [0, 0, 1, 1], [], []>} : vector<32x324xbf16>, vector<324x1024xbf16>, vector<32x1024xf32> -> vector<32x1024xf32>
    %49 = arith.mulf %48, %0 : vector<32x1024xf32>
    %cst_57 = arith.constant dense<0.000000e+00> : vector<1024xf32>
    %50 = vector.multi_reduction <add>, %49, %cst_57 [0] : vector<32x1024xf32> to vector<1024xf32>
    %51 = vector.shape_cast %50 : vector<1024xf32> to vector<1x1024xf32>
    %cst_58 = arith.constant dense<0.000000e+00> : vector<1x32xf32>
    %52 = tpu.matmul %51, %10, %cst_58 {dimension_numbers = #tpu.dot_dimension_numbers<[1], [0], [0], [1], [0, 0, 1, 1], [], []>} : vector<1x1024xf32>, vector<1024x32xf32>, vector<1x32xf32> -> vector<1x32xf32>
    %53 = arith.addf %52, %2 : vector<1x32xf32>
    %cst_59 = arith.constant 0.000000e+00 : f32
    %54 = vector.broadcast %cst_59 : f32 to vector<1x32xf32>
    %55 = arith.maximumf %53, %54 : vector<1x32xf32>
    %56 = arith.truncf %55 : vector<1x32xf32> to vector<1x32xbf16>
    %cst_60 = arith.constant dense<0.000000e+00> : vector<1x32xf32>
    %57 = tpu.matmul %56, %7, %cst_60 {dimension_numbers = #tpu.dot_dimension_numbers<[1], [0], [0], [1], [0, 0, 1, 1], [], []>} : vector<1x32xbf16>, vector<32x32xbf16>, vector<1x32xf32> -> vector<1x32xf32>
    %58 = arith.addf %57, %3 : vector<1x32xf32>
    %cst_61 = arith.constant 0.000000e+00 : f32
    %59 = vector.broadcast %cst_61 : f32 to vector<1x32xf32>
    %60 = arith.maximumf %58, %59 : vector<1x32xf32>
    %61 = arith.truncf %60 : vector<1x32xf32> to vector<1x32xbf16>
    %cst_62 = arith.constant dense<0.000000e+00> : vector<1x128xf32>
    %62 = tpu.matmul %61, %8, %cst_62 {dimension_numbers = #tpu.dot_dimension_numbers<[1], [0], [0], [1], [0, 0, 1, 1], [], []>} : vector<1x32xbf16>, vector<32x128xbf16>, vector<1x128xf32> -> vector<1x128xf32>
    %63 = arith.addf %62, %4 : vector<1x128xf32>
    %c0_63 = arith.constant 0 : index
    %c0_64 = arith.constant 0 : index
    %c0_65 = arith.constant 0 : index
    %64 = vector.load %arg6[%c0_63, %c0_64, %c0_65] : memref<1x1x128xf32, #tpu.memory_space<vmem>>, vector<1x1x128xf32>
    %65 = vector.shape_cast %64 : vector<1x1x128xf32> to vector<1x128xf32>
    %66 = vector.shape_cast %63 : vector<1x128xf32> to vector<1x1x128xf32>
    tpu.vector_store %arg6[%c0_63, %c0_64, %c0_65], %66 {strides = array<i32>} : memref<1x1x128xf32, #tpu.memory_space<vmem>>, vector<1x1x128xf32>,
    return
  }
  func.func @transform_0(%arg0: i32) -> (i32, i32, i32) {
    %c0_i32 = arith.constant 0 : i32
    %c0_i32_0 = arith.constant 0 : i32
    %c0_i32_1 = arith.constant 0 : i32
    return %arg0, %c0_i32, %c0_i32_0 : i32, i32, i32
  }
  func.func @transform_1(%arg0: i32) -> (i32, i32) {
    %c0_i32 = arith.constant 0 : i32
    %c0_i32_0 = arith.constant 0 : i32
    %c0_i32_1 = arith.constant 0 : i32
    return %c0_i32, %c0_i32_0 : i32, i32
  }
  func.func @transform_2(%arg0: i32) -> (i32, i32) {
    %c0_i32 = arith.constant 0 : i32
    %c0_i32_0 = arith.constant 0 : i32
    %c0_i32_1 = arith.constant 0 : i32
    return %c0_i32, %c0_i32_0 : i32, i32
  }
  func.func @transform_3(%arg0: i32) -> (i32, i32) {
    %c0_i32 = arith.constant 0 : i32
    %c0_i32_0 = arith.constant 0 : i32
    %c0_i32_1 = arith.constant 0 : i32
    return %c0_i32, %c0_i32_0 : i32, i32
  }
  func.func @transform_4(%arg0: i32) -> (i32, i32) {
    %c0_i32 = arith.constant 0 : i32
    %c0_i32_0 = arith.constant 0 : i32
    %c0_i32_1 = arith.constant 0 : i32
    return %c0_i32, %c0_i32_0 : i32, i32
  }
  func.func @transform_5(%arg0: i32) -> (i32, i32, i32) {
    %c0_i32 = arith.constant 0 : i32
    %c0_i32_0 = arith.constant 0 : i32
    %c0_i32_1 = arith.constant 0 : i32
    return %arg0, %c0_i32, %c0_i32_0 : i32, i32, i32
  }
}

</mosaic_0001>

<llo_original>
// kernel: dqn_map_net_forward.1
$region0: #{dqn_map_net_forward.1}
  #allocation0 [shape = 'u32[]', space=smem, size = 0x4, offset = 0x4, fixed_abs, tag = 'smem constant byte address 0x4 - core index']
  #allocation1 [shape = 'u32[144,128]{1,0:T(1,128)}', space=vmem, size = 0x12000, scoped, tag = 'internal scratch']
  #allocation2 [shape = 'bf16[16,580]{1,0:T(8,128)(2,1)}', space=vmem, size = 0x5000, scoped, tag = 'scratch operand']
  #allocation3 [shape = 'bf16[145,324]{1,0:T(8,128)(2,1)}', space=vmem, size = 0x1c800, scoped, tag = 'scratch operand']
  %s0 = inlined_call_operand.vmem [shape: bf16[2,37,324], index: 0, kind: input, shape index: {}]
  %s1 = inlined_call_operand.vmem [shape: f32[34,1024], index: 1, kind: input, shape index: {}]
  %s2 = inlined_call_operand.vmem [shape: bf16[112,145], index: 2, kind: input, shape index: {}]
  %s3 = inlined_call_operand.vmem [shape: bf16[324,1024], index: 3, kind: input, shape index: {}]
  %s4 = inlined_call_operand.vmem [shape: f32[1024,32], index: 4, kind: input, shape index: {}]
  %s5 = inlined_call_operand.hbm [shape: f32[2,1,128], index: 5, kind: output, shape index: {}]
  %s6 = sld [smem:[#allocation0]]
  $region53: #{dqn_map_net_forward.1} parent=0
    _
  %s8 = ssub.s32 1, %s6
  %s9 = scalar_select 0, %s8, %s6
  $region1: #{dqn_map_net_forward.1} parent=0
    #allocation4 [shape = 'u8[1024]{0}', space=vmem, size = 0x400, scoped, tag = 'output window, operand 0']
    #allocation5 [shape = 's32[2]{0}', space=sflag, size = 0x8, scoped, tag = 'scoped memory for dqn_map_net_forward.1']
    %10 = vsyncpa [#allocation5], 0
    %s11 = scalar_lea.sflag [#allocation5], 1
    %12 = vsyncpa %s11, 0
    loop: start=0, step=1, limit=4
    $region2: #{dqn_map_net_forward.1} parent=1 // loop_pre_header
      _
    $region3: #{dqn_map_net_forward.1} parent=1 // loop_header
      %s14 = sphi 0, %s18
      %p15 = scmp.ge.s32.totalorder %s14, 4
      %s24 = sphi 0, %s26
      %s27 = sphi 0, %s24
      %s28 = sphi 0, %s27
      %s44 = sphi 0, %s28
      %s48 = sphi 0, %s48
      %s50 = sphi 0, %s48
      %s51 = sphi 0, %s50
      %s65 = sphi 0, %s51
      %s69 = sphi 0, %s69
      %s71 = sphi 0, %s69
      %s72 = sphi 0, %s71
      %s86 = sphi 0, %s72
      %s90 = sphi 0, %s90
      %s92 = sphi 0, %s90
      %s93 = sphi 0, %s92
      %s107 = sphi 0, %s93
      %s111 = sphi 0, %s111
      %s113 = sphi 0, %s111
      %s114 = sphi 0, %s113
      %s128 = sphi 0, %s114
      %s134 = sphi 0, %s136
      %s137 = sphi 0, %s134
      %s138 = sphi 0, %s137
      %s154 = sphi 0, %s138
    $region4: #{dqn_map_net_forward.1} parent=1 // loop_header_branch
      %17 = sbr.rel (%p15) target = $region8
    $region5: #{dqn_map_net_forward.1} parent=1 // loop_body
      %s19 = ssub.s32 %s14, 1
      %s20 = ssub.s32 %s14, 2
      %s21 = sadd.s32 %s14, 1
      %s22 = ssub.s32 %s14, %s21
      %p23 = scmp.eq.s32.totalorder %s22, 0
      %s25 = sadd.s32 %s24, 1
      %s26 = scalar_select %p23, %s24, %s25
      %p29 = pneg %p23
      %p30 = scmp.eq.s32.totalorder %s14, 1
      %p31 = por %p29, %p30
      %p32 = scmp.ne.s32.totalorder %s24, %s27
      %p33 = scmp.eq.s32.totalorder %s14, 0
      %p34 = por %p32, %p33
      %p35 = scmp.ne.s32.totalorder %s24, %s27
      %p36 = scmp.eq.s32.totalorder %s19, 1
      %p37 = por %p35, %p36
      %p38 = scmp.ne.s32.totalorder %s27, %s28
      %p39 = scmp.eq.s32.totalorder %s19, 0
      %p40 = por %p38, %p39
      %p41 = scmp.ne.s32.totalorder %s27, %s28
      %p42 = scmp.eq.s32.totalorder %s20, 1
      %p43 = por %p41, %p42
      %p45 = scmp.ne.s32.totalorder %s28, %s44
      %p46 = scmp.eq.s32.totalorder %s20, 0
      %p47 = por %p45, %p46
      %s49 = sadd.s32 %s48, 1
      %p52 = scmp.eq.s32.totalorder %s14, 1
      %p53 = scmp.ne.s32.totalorder %s48, %s50
      %p54 = scmp.eq.s32.totalorder %s14, 0
      %p55 = por %p53, %p54
      %p56 = scmp.ne.s32.totalorder %s48, %s50
      %p57 = scmp.eq.s32.totalorder %s19, 1
      %p58 = por %p56, %p57
      %p59 = scmp.ne.s32.totalorder %s50, %s51
      %p60 = scmp.eq.s32.totalorder %s19, 0
      %p61 = por %p59, %p60
      %p62 = scmp.ne.s32.totalorder %s50, %s51
      %p63 = scmp.eq.s32.totalorder %s20, 1
      %p64 = por %p62, %p63
      %p66 = scmp.ne.s32.totalorder %s51, %s65
      %p67 = scmp.eq.s32.totalorder %s20, 0
      %p68 = por %p66, %p67
      %s70 = sadd.s32 %s69, 1
      %p73 = scmp.eq.s32.totalorder %s14, 1
      %p74 = scmp.ne.s32.totalorder %s69, %s71
      %p75 = scmp.eq.s32.totalorder %s14, 0
      %p76 = por %p74, %p75
      %p77 = scmp.ne.s32.totalorder %s69, %s71
      %p78 = scmp.eq.s32.totalorder %s19, 1
      %p79 = por %p77, %p78
      %p80 = scmp.ne.s32.totalorder %s71, %s72
      %p81 = scmp.eq.s32.totalorder %s19, 0
      %p82 = por %p80, %p81
      %p83 = scmp.ne.s32.totalorder %s71, %s72
      %p84 = scmp.eq.s32.totalorder %s20, 1
      %p85 = por %p83, %p84
      %p87 = scmp.ne.s32.totalorder %s72, %s86
      %p88 = scmp.eq.s32.totalorder %s20, 0
      %p89 = por %p87, %p88
      %s91 = sadd.s32 %s90, 1
      %p94 = scmp.eq.s32.totalorder %s14, 1
      %p95 = scmp.ne.s32.totalorder %s90, %s92
      %p96 = scmp.eq.s32.totalorder %s14, 0
      %p97 = por %p95, %p96
      %p98 = scmp.ne.s32.totalorder %s90, %s92
      %p99 = scmp.eq.s32.totalorder %s19, 1
      %p100 = por %p98, %p99
      %p101 = scmp.ne.s32.totalorder %s92, %s93
      %p102 = scmp.eq.s32.totalorder %s19, 0
      %p103 = por %p101, %p102
      %p104 = scmp.ne.s32.totalorder %s92, %s93
      %p105 = scmp.eq.s32.totalorder %s20, 1
      %p106 = por %p104, %p105
      %p108 = scmp.ne.s32.totalorder %s93, %s107
      %p109 = scmp.eq.s32.totalorder %s20, 0
      %p110 = por %p108, %p109
      %s112 = sadd.s32 %s111, 1
      %p115 = scmp.eq.s32.totalorder %s14, 1
      %p116 = scmp.ne.s32.totalorder %s111, %s113
      %p117 = scmp.eq.s32.totalorder %s14, 0
      %p118 = por %p116, %p117
      %p119 = scmp.ne.s32.totalorder %s111, %s113
      %p120 = scmp.eq.s32.totalorder %s19, 1
      %p121 = por %p119, %p120
      %p122 = scmp.ne.s32.totalorder %s113, %s114
      %p123 = scmp.eq.s32.totalorder %s19, 0
      %p124 = por %p122, %p123
      %p125 = scmp.ne.s32.totalorder %s113, %s114
      %p126 = scmp.eq.s32.totalorder %s20, 1
      %p127 = por %p125, %p126
      %p129 = scmp.ne.s32.totalorder %s114, %s128
      %p130 = scmp.eq.s32.totalorder %s20, 0
      %p131 = por %p129, %p130
      %s132 = ssub.s32 %s14, %s21
      %p133 = scmp.eq.s32.totalorder %s132, 0
      %s135 = sadd.s32 %s134, 1
      %s136 = scalar_select %p133, %s134, %s135
      %p139 = pneg %p133
      %p140 = scmp.eq.s32.totalorder %s14, 1
      %p141 = por %p139, %p140
      %p142 = scmp.ne.s32.totalorder %s134, %s137
      %p143 = scmp.eq.s32.totalorder %s14, 0
      %p144 = por %p142, %p143
      %p145 = scmp.ne.s32.totalorder %s134, %s137
      %p146 = scmp.eq.s32.totalorder %s19, 1
      %p147 = por %p145, %p146
      %p148 = scmp.ne.s32.totalorder %s137, %s138
      %p149 = scmp.eq.s32.totalorder %s19, 0
      %p150 = por %p148, %p149
      %p151 = scmp.ne.s32.totalorder %s137, %s138
      %p152 = scmp.eq.s32.totalorder %s20, 1
      %p153 = por %p151, %p152
      %p155 = scmp.ne.s32.totalorder %s138, %s154
      %p156 = scmp.eq.s32.totalorder %s20, 0
      %p157 = por %p155, %p156
      %p158 = scmp.le.s32.totalorder 1, %s14
      %p159 = scmp.lt.s32.totalorder %s14, 3
      %p160 = pnand %p158, %p159
      %p161 = pneg %p160
      // Predicated region
      $region9: #{dqn_map_net_forward.1} parent=5 // pred_check
        _
      $region10: #{dqn_map_net_forward.1} parent=5 // pred_check_branch
        %163 = sbr.rel (%p160) target = $region12
      $region11: #{dqn_map_net_forward.1} parent=5 // pred_region
        %s164 = ssub.s32 %s14, 1
        // Predicated region
        $region13: #{dqn_map_net_forward.1} parent=11 // pred_check
          %p165 = pneg %p61
        $region14: #{dqn_map_net_forward.1} parent=11 // pred_check_branch
          %167 = sbr.rel (%p165) target = $region16
        $region15: #{dqn_map_net_forward.1} parent=11 // pred_region
          _
        $region16: #{dqn_map_net_forward.1} parent=11 // pred_fallthru
          _
        // Predicated region
        $region17: #{dqn_map_net_forward.1} parent=11 // pred_check
          %p168 = pneg %p82
        $region18: #{dqn_map_net_forward.1} parent=11 // pred_check_branch
          %170 = sbr.rel (%p168) target = $region20
        $region19: #{dqn_map_net_forward.1} parent=11 // pred_region
          _
        $region20: #{dqn_map_net_forward.1} parent=11 // pred_fallthru
          _
        // Predicated region
        $region21: #{dqn_map_net_forward.1} parent=11 // pred_check
          %p171 = pneg %p103
        $region22: #{dqn_map_net_forward.1} parent=11 // pred_check_branch
          %173 = sbr.rel (%p171) target = $region24
        $region23: #{dqn_map_net_forward.1} parent=11 // pred_region
          _
        $region24: #{dqn_map_net_forward.1} parent=11 // pred_fallthru
          _
        // Predicated region
        $region25: #{dqn_map_net_forward.1} parent=11 // pred_check
          %p174 = pneg %p124
        $region26: #{dqn_map_net_forward.1} parent=11 // pred_check_branch
          %176 = sbr.rel (%p174) target = $region28
        $region27: #{dqn_map_net_forward.1} parent=11 // pred_region
          _
        $region28: #{dqn_map_net_forward.1} parent=11 // pred_fallthru
          _
      $region12: #{dqn_map_net_forward.1} parent=5 // pred_fallthru
        _
      %p177 = scmp.lt.s32.totalorder %s14, 2
      // Predicated region
      $region29: #{dqn_map_net_forward.1} parent=5 // pred_check
        %p178 = pneg %p177
      $region30: #{dqn_map_net_forward.1} parent=5 // pred_check_branch
        %180 = sbr.rel (%p178) target = $region32
      $region31: #{dqn_map_net_forward.1} parent=5 // pred_region
        // Predicated region
        $region33: #{dqn_map_net_forward.1} parent=31 // pred_check
          %p181 = pneg %p34
        $region34: #{dqn_map_net_forward.1} parent=31 // pred_check_branch
          %183 = sbr.rel (%p181) target = $region36
        $region35: #{dqn_map_net_forward.1} parent=31 // pred_region
          %p184 = scmp.lt.s32.totalorder %s14, 1
          %s185 = scalar_select %p184, %s14, 1
          %s186 = smul.addr %s185, 15
          %s187 = smul.addr %s186, 4
          %s188 = scalar_lea.vmem %s0, %s187
        $region36: #{dqn_map_net_forward.1} parent=31 // pred_fallthru
          _
      $region32: #{dqn_map_net_forward.1} parent=5 // pred_fallthru
        _
      %p189 = scmp.le.s32.totalorder 1, %s14
      %p190 = scmp.lt.s32.totalorder %s14, 3
      %p191 = pnand %p189, %p190
      %p192 = pneg %p191
      // Predicated region
      $region37: #{dqn_map_net_forward.1} parent=5 // pred_check
        _
      $region38: #{dqn_map_net_forward.1} parent=5 // pred_check_branch
        %194 = sbr.rel (%p191) target = $region40
      $region39: #{dqn_map_net_forward.1} parent=5 // pred_region
        %s195 = ssub.s32 %s14, 1
        %p196 = scmp.lt.s32.totalorder %s19, 1
        %s197 = scalar_select %p196, %s19, 1
        %s198 = smul.addr %s197, 15
        %s199 = smul.addr %s198, 4
        %s200 = scalar_lea.vmem %s0, %s199
        %p201 = pneg %p40
        %p202 = pneg %p37
        %p203 = pneg %p61
        %p204 = pneg %p58
        %p205 = pneg %p82
        %p206 = pneg %p79
        %p207 = pneg %p103
        %p208 = pneg %p100
        %p209 = pneg %p124
        %p210 = pneg %p121
        %p211 = pneg %p150
        %p212 = pneg %p147
        %s213 = sand.u32 %s137, 1
        %s214 = scalar_lea.sflag [#allocation5], %s213
        %s215 = sand.u32 %s137, 1
        %s216 = scalar_lea.vmem [#allocation4], %s215
        %p217 = scmp.lt.s32.totalorder %s19, 1
        %s218 = scalar_select %p217, %s19, 1
        %s219 = smul.addr %s218, 15
        %s220 = smul.addr %s219, 4
        %s221 = scalar_lea.vmem %s0, %s220
        %v224 = vld [vmem:[%s1] sm:$0xff]
        %v225 = vld [vmem:[%s1 + $0x8] sm:$0xff]
        %v226 = vld [vmem:[%s1 + $0x10] sm:$0xff]
        %v227 = vld [vmem:[%s1 + $0x18] sm:$0xff]
        %v228 = vld [vmem:[%s1 + $0x20] sm:$0xff]
        %v229 = vld [vmem:[%s1 + $0x28] sm:$0xff]
        %v230 = vld [vmem:[%s1 + $0x30] sm:$0xff]
        %v231 = vld [vmem:[%s1 + $0x38] sm:$0xff]
        %v232 = vld [vmem:[%s1 + $0x40] sm:$0xff]
        %v233 = vld [vmem:[%s1 + $0x48] sm:$0xff]
        %v234 = vld [vmem:[%s1 + $0x50] sm:$0xff]
        %v235 = vld [vmem:[%s1 + $0x58] sm:$0xff]
        %v236 = vld [vmem:[%s1 + $0x60] sm:$0xff]
        %v237 = vld [vmem:[%s1 + $0x68] sm:$0xff]
        %v238 = vld [vmem:[%s1 + $0x70] sm:$0xff]
        %v239 = vld [vmem:[%s1 + $0x78] sm:$0xff]
        %v240 = vld [vmem:[%s1 + $0x80] sm:$0xff]
        %v241 = vld [vmem:[%s1 + $0x88] sm:$0xff]
        %v242 = vld [vmem:[%s1 + $0x90] sm:$0xff]
        %v243 = vld [vmem:[%s1 + $0x98] sm:$0xff]
        %v244 = vld [vmem:[%s1 + $0xa0] sm:$0xff]
        %v245 = vld [vmem:[%s1 + $0xa8] sm:$0xff]
        %v246 = vld [vmem:[%s1 + $0xb0] sm:$0xff]
        %v247 = vld [vmem:[%s1 + $0xb8] sm:$0xff]
        %v248 = vld [vmem:[%s1 + $0xc0] sm:$0xff]
        %v249 = vld [vmem:[%s1 + $0xc8] sm:$0xff]
        %v250 = vld [vmem:[%s1 + $0xd0] sm:$0xff]
        %v251 = vld [vmem:[%s1 + $0xd8] sm:$0xff]
        %v252 = vld [vmem:[%s1 + $0xe0] sm:$0xff]
        %v253 = vld [vmem:[%s1 + $0xe8] sm:$0xff]
        %v254 = vld [vmem:[%s1 + $0xf0] sm:$0xff]
        %v255 = vld [vmem:[%s1 + $0xf8] sm:$0xff]
        %s256 = scalar_lea.vmem %s1, 256
        %v257 = vld [vmem:[%s256] ss:$8 sm:$0x7]
        %v258 = vld [vmem:[%s1 + $0x101] ss:$0 sm:$0xff]
        %v259 = vld [vmem:[%s1 + $0x109] ss:$0 sm:$0xff]
        %v260 = vld [vmem:[%s2] sm:$0xf]
        %v261 = vld [vmem:[%s2 + $0x8] sm:$0xf]
        %v262 = vld [vmem:[%s2 + $0x10] sm:$0xff]
        %v263 = vld [vmem:[%s2 + $0x18] sm:$0xff]
        %v264 = vld [vmem:[%s2 + $0x20] sm:$0xff]
        %v265 = vld [vmem:[%s2 + $0x28] sm:$0xff]
        %v266 = vld [vmem:[%s2 + $0x30] sm:$0xf]
        %v267 = vld [vmem:[%s2 + $0x38] sm:$0xf]
        %v268 = vld [vmem:[%s2 + $0x40] sm:$0xf]
        %v269 = vld [vmem:[%s2 + $0x48] sm:$0xf]
        %v270 = vld [vmem:[%s2 + $0x50] sm:$0xf]
        %v271 = vld [vmem:[%s2 + $0x58] sm:$0xf]
        %v272 = vld [vmem:[%s2 + $0x60] sm:$0xf]
        %v273 = vld [vmem:[%s2 + $0x68] sm:$0xf]
        %v274 = vld [vmem:[%s3] sm:$0xff]
        %v275 = vld [vmem:[%s3 + $0x8] sm:$0xff]
        %v276 = vld [vmem:[%s3 + $0x10] sm:$0xff]
        %v277 = vld [vmem:[%s3 + $0x18] sm:$0xff]
        %v278 = vld [vmem:[%s3 + $0x20] sm:$0xff]
        %v279 = vld [vmem:[%s3 + $0x28] sm:$0xff]
        %v280 = vld [vmem:[%s3 + $0x30] sm:$0xff]
        %v281 = vld [vmem:[%s3 + $0x38] sm:$0xff]
        %v282 = vld [vmem:[%s3 + $0x40] sm:$0xff]
        %v283 = vld [vmem:[%s3 + $0x48] sm:$0xff]
        %v284 = vld [vmem:[%s3 + $0x50] sm:$0xff]
        %v285 = vld [vmem:[%s3 + $0x58] sm:$0xff]
        %v286 = vld [vmem:[%s3 + $0x60] sm:$0xff]
        %v287 = vld [vmem:[%s3 + $0x68] sm:$0xff]
        %v288 = vld [vmem:[%s3 + $0x70] sm:$0xff]
        %v289 = vld [vmem:[%s3 + $0x78] sm:$0xff]
        %v290 = vld [vmem:[%s3 + $0x80] sm:$0xff]
        %v291 = vld [vmem:[%s3 + $0x88] sm:$0xff]
        %v292 = vld [vmem:[%s3 + $0x90] sm:$0xff]
        %v293 = vld [vmem:[%s3 + $0x98] sm:$0xff]
        %v294 = vld [vmem:[%s3 + $0xa0] sm:$0xff]
        %v295 = vld [vmem:[%s3 + $0xa8] sm:$0xff]
        %v296 = vld [vmem:[%s3 + $0xb0] sm:$0xff]
        %v297 = vld [vmem:[%s3 + $0xb8] sm:$0xff]
        %v298 = vld [vmem:[%s3 + $0xc0] sm:$0xff]
        %v299 = vld [vmem:[%s3 + $0xc8] sm:$0xff]
        %v300 = vld [vmem:[%s3 + $0xd0] sm:$0xff]
        %v301 = vld [vmem:[%s3 + $0xd8] sm:$0xff]
        %v302 = vld [vmem:[%s3 + $0xe0] sm:$0xff]
        %v303 = vld [vmem:[%s3 + $0xe8] sm:$0xff]
        %v304 = vld [vmem:[%s3 + $0xf0] sm:$0xff]
        %v305 = vld [vmem:[%s3 + $0xf8] sm:$0xff]
        %v306 = vld [vmem:[%s3 + $0x100] sm:$0xff]
        %v307 = vld [vmem:[%s3 + $0x108] sm:$0xff]
        %v308 = vld [vmem:[%s3 + $0x110] sm:$0xff]
        %v309 = vld [vmem:[%s3 + $0x118] sm:$0xff]
        %v310 = vld [vmem:[%s3 + $0x120] sm:$0xff]
        %v311 = vld [vmem:[%s3 + $0x128] sm:$0xff]
        %v312 = vld [vmem:[%s3 + $0x130] sm:$0xff]
        %v313 = vld [vmem:[%s3 + $0x138] sm:$0xff]
        %v314 = vld [vmem:[%s3 + $0x140] sm:$0xff]
        %v315 = vld [vmem:[%s3 + $0x148] sm:$0xff]
        %v316 = vld [vmem:[%s3 + $0x150] sm:$0xff]
        %v317 = vld [vmem:[%s3 + $0x158] sm:$0xff]
        %v318 = vld [vmem:[%s3 + $0x160] sm:$0xff]
        %v319 = vld [vmem:[%s3 + $0x168] sm:$0xff]
        %v320 = vld [vmem:[%s3 + $0x170] sm:$0xff]
        %v321 = vld [vmem:[%s3 + $0x178] sm:$0xff]
        %v322 = vld [vmem:[%s3 + $0x180] sm:$0xff]
        %v323 = vld [vmem:[%s3 + $0x188] sm:$0xff]
        %v324 = vld [vmem:[%s3 + $0x190] sm:$0xff]
        %v325 = vld [vmem:[%s3 + $0x198] sm:$0xff]
        %v326 = vld [vmem:[%s3 + $0x1a0] sm:$0xff]
        %v327 = vld [vmem:[%s3 + $0x1a8] sm:$0xff]
        %v328 = vld [vmem:[%s3 + $0x1b0] sm:$0xff]
        %v329 = vld [vmem:[%s3 + $0x1b8] sm:$0xff]
        %v330 = vld [vmem:[%s3 + $0x1c0] sm:$0xff]
        %v331 = vld [vmem:[%s3 + $0x1c8] sm:$0xff]
        %v332 = vld [vmem:[%s3 + $0x1d0] sm:$0xff]
        %v333 = vld [vmem:[%s3 + $0x1d8] sm:$0xff]
        %v334 = vld [vmem:[%s3 + $0x1e0] sm:$0xff]
        %v335 = vld [vmem:[%s3 + $0x1e8] sm:$0xff]
        %v336 = vld [vmem:[%s3 + $0x1f0] sm:$0xff]
        %v337 = vld [vmem:[%s3 + $0x1f8] sm:$0xff]
        %v338 = vld [vmem:[%s3 + $0x200] sm:$0xff]
        %v339 = vld [vmem:[%s3 + $0x208] sm:$0xff]
        %v340 = vld [vmem:[%s3 + $0x210] sm:$0xff]
        %v341 = vld [vmem:[%s3 + $0x218] sm:$0xff]
        %v342 = vld [vmem:[%s3 + $0x220] sm:$0xff]
        %v343 = vld [vmem:[%s3 + $0x228] sm:$0xff]
        %v344 = vld [vmem:[%s3 + $0x230] sm:$0xff]
        %v345 = vld [vmem:[%s3 + $0x238] sm:$0xff]
        %v346 = vld [vmem:[%s3 + $0x240] sm:$0xff]
        %v347 = vld [vmem:[%s3 + $0x248] sm:$0xff]
        %v348 = vld [vmem:[%s3 + $0x250] sm:$0xff]
        %v349 = vld [vmem:[%s3 + $0x258] sm:$0xff]
        %v350 = vld [vmem:[%s3 + $0x260] sm:$0xff]
        %v351 = vld [vmem:[%s3 + $0x268] sm:$0xff]
        %v352 = vld [vmem:[%s3 + $0x270] sm:$0xff]
        %v353 = vld [vmem:[%s3 + $0x278] sm:$0xff]
        %v354 = vld [vmem:[%s3 + $0x280] sm:$0xff]
        %v355 = vld [vmem:[%s3 + $0x288] sm:$0xff]
        %v356 = vld [vmem:[%s3 + $0x290] sm:$0xff]
        %v357 = vld [vmem:[%s3 + $0x298] sm:$0xff]
        %v358 = vld [vmem:[%s3 + $0x2a0] sm:$0xff]
        %v359 = vld [vmem:[%s3 + $0x2a8] sm:$0xff]
        %v360 = vld [vmem:[%s3 + $0x2b0] sm:$0xff]
        %v361 = vld [vmem:[%s3 + $0x2b8] sm:$0xff]
        %v362 = vld [vmem:[%s3 + $0x2c0] sm:$0xff]
        %v363 = vld [vmem:[%s3 + $0x2c8] sm:$0xff]
        %v364 = vld [vmem:[%s3 + $0x2d0] sm:$0xff]
        %v365 = vld [vmem:[%s3 + $0x2d8] sm:$0xff]
        %v366 = vld [vmem:[%s3 + $0x2e0] sm:$0xff]
        %v367 = vld [vmem:[%s3 + $0x2e8] sm:$0xff]
        %v368 = vld [vmem:[%s3 + $0x2f0] sm:$0xff]
        %v369 = vld [vmem:[%s3 + $0x2f8] sm:$0xff]
        %v370 = vld [vmem:[%s3 + $0x300] sm:$0xff]
        %v371 = vld [vmem:[%s3 + $0x308] sm:$0xff]
        %v372 = vld [vmem:[%s3 + $0x310] sm:$0xff]
        %v373 = vld [vmem:[%s3 + $0x318] sm:$0xff]
        %v374 = vld [vmem:[%s3 + $0x320] sm:$0xff]
        %v375 = vld [vmem:[%s3 + $0x328] sm:$0xff]
        %v376 = vld [vmem:[%s3 + $0x330] sm:$0xff]
        %v377 = vld [vmem:[%s3 + $0x338] sm:$0xff]
        %v378 = vld [vmem:[%s3 + $0x340] sm:$0xff]
        %v379 = vld [vmem:[%s3 + $0x348] sm:$0xff]
        %v380 = vld [vmem:[%s3 + $0x350] sm:$0xff]
        %v381 = vld [vmem:[%s3 + $0x358] sm:$0xff]
        %v382 = vld [vmem:[%s3 + $0x360] sm:$0xff]
        %v383 = vld [vmem:[%s3 + $0x368] sm:$0xff]
        %v384 = vld [vmem:[%s3 + $0x370] sm:$0xff]
        %v385 = vld [vmem:[%s3 + $0x378] sm:$0xff]
        %v386 = vld [vmem:[%s3 + $0x380] sm:$0xff]
        %v387 = vld [vmem:[%s3 + $0x388] sm:$0xff]
        %v388 = vld [vmem:[%s3 + $0x390] sm:$0xff]
        %v389 = vld [vmem:[%s3 + $0x398] sm:$0xff]
        %v390 = vld [vmem:[%s3 + $0x3a0] sm:$0xff]
        %v391 = vld [vmem:[%s3 + $0x3a8] sm:$0xff]
        %v392 = vld [vmem:[%s3 + $0x3b0] sm:$0xff]
        %v393 = vld [vmem:[%s3 + $0x3b8] sm:$0xff]
        %v394 = vld [vmem:[%s3 + $0x3c0] sm:$0xff]
        %v395 = vld [vmem:[%s3 + $0x3c8] sm:$0xff]
        %v396 = vld [vmem:[%s3 + $0x3d0] sm:$0xff]
        %v397 = vld [vmem:[%s3 + $0x3d8] sm:$0xff]
        %v398 = vld [vmem:[%s3 + $0x3e0] sm:$0xff]
        %v399 = vld [vmem:[%s3 + $0x3e8] sm:$0xff]
        %v400 = vld [vmem:[%s3 + $0x3f0] sm:$0xff]
        %v401 = vld [vmem:[%s3 + $0x3f8] sm:$0xff]
        %v402 = vld [vmem:[%s3 + $0x400] sm:$0xff]
        %v403 = vld [vmem:[%s3 + $0x408] sm:$0xff]
        %v404 = vld [vmem:[%s3 + $0x410] sm:$0xff]
        %v405 = vld [vmem:[%s3 + $0x418] sm:$0xff]
        %v406 = vld [vmem:[%s3 + $0x420] sm:$0xff]
        %v407 = vld [vmem:[%s3 + $0x428] sm:$0xff]
        %v408 = vld [vmem:[%s3 + $0x430] sm:$0xff]
        %v409 = vld [vmem:[%s3 + $0x438] sm:$0xff]
        %v410 = vld [vmem:[%s3 + $0x440] sm:$0xff]
        %v411 = vld [vmem:[%s3 + $0x448] sm:$0xff]
        %v412 = vld [vmem:[%s3 + $0x450] sm:$0xff]
        %v413 = vld [vmem:[%s3 + $0x458] sm:$0xff]
        %v414 = vld [vmem:[%s3 + $0x460] sm:$0xff]
        %v415 = vld [vmem:[%s3 + $0x468] sm:$0xff]
        %v416 = vld [vmem:[%s3 + $0x470] sm:$0xff]
        %v417 = vld [vmem:[%s3 + $0x478] sm:$0xff]
        %v418 = vld [vmem:[%s3 + $0x480] sm:$0xff]
        %v419 = vld [vmem:[%s3 + $0x488] sm:$0xff]
        %v420 = vld [vmem:[%s3 + $0x490] sm:$0xff]
        %v421 = vld [vmem:[%s3 + $0x498] sm:$0xff]
        %v422 = vld [vmem:[%s3 + $0x4a0] sm:$0xff]
        %v423 = vld [vmem:[%s3 + $0x4a8] sm:$0xff]
        %v424 = vld [vmem:[%s3 + $0x4b0] sm:$0xff]
        %v425 = vld [vmem:[%s3 + $0x4b8] sm:$0xff]
        %v426 = vld [vmem:[%s3 + $0x4c0] sm:$0xff]
        %v427 = vld [vmem:[%s3 + $0x4c8] sm:$0xff]
        %v428 = vld [vmem:[%s3 + $0x4d0] sm:$0xff]
        %v429 = vld [vmem:[%s3 + $0x4d8] sm:$0xff]
        %v430 = vld [vmem:[%s3 + $0x4e0] sm:$0xff]
        %v431 = vld [vmem:[%s3 + $0x4e8] sm:$0xff]
        %v432 = vld [vmem:[%s3 + $0x4f0] sm:$0xff]
        %v433 = vld [vmem:[%s3 + $0x4f8] sm:$0xff]
        %v434 = vld [vmem:[%s3 + $0x500] sm:$0x33]
        %v435 = vld [vmem:[%s3 + $0x508] sm:$0x33]
        %v436 = vld [vmem:[%s3 + $0x510] sm:$0x33]
        %v437 = vld [vmem:[%s3 + $0x518] sm:$0x33]
        %v438 = vld [vmem:[%s4] sm:$0xff]
        %v439 = vld [vmem:[%s4 + $0x8] sm:$0xff]
        %v440 = vld [vmem:[%s4 + $0x10] sm:$0xff]
        %v441 = vld [vmem:[%s4 + $0x18] sm:$0xff]
        %v442 = vld [vmem:[%s4 + $0x20] sm:$0xff]
        %v443 = vld [vmem:[%s4 + $0x28] sm:$0xff]
        %v444 = vld [vmem:[%s4 + $0x30] sm:$0xff]
        %v445 = vld [vmem:[%s4 + $0x38] sm:$0xff]
        %v446 = vld [vmem:[%s4 + $0x40] sm:$0xff]
        %v447 = vld [vmem:[%s4 + $0x48] sm:$0xff]
        %v448 = vld [vmem:[%s4 + $0x50] sm:$0xff]
        %v449 = vld [vmem:[%s4 + $0x58] sm:$0xff]
        %v450 = vld [vmem:[%s4 + $0x60] sm:$0xff]
        %v451 = vld [vmem:[%s4 + $0x68] sm:$0xff]
        %v452 = vld [vmem:[%s4 + $0x70] sm:$0xff]
        %v453 = vld [vmem:[%s4 + $0x78] sm:$0xff]
        %v454 = vld [vmem:[%s4 + $0x80] sm:$0xff]
        %v455 = vld [vmem:[%s4 + $0x88] sm:$0xff]
        %v456 = vld [vmem:[%s4 + $0x90] sm:$0xff]
        %v457 = vld [vmem:[%s4 + $0x98] sm:$0xff]
        %v458 = vld [vmem:[%s4 + $0xa0] sm:$0xff]
        %v459 = vld [vmem:[%s4 + $0xa8] sm:$0xff]
        %v460 = vld [vmem:[%s4 + $0xb0] sm:$0xff]
        %v461 = vld [vmem:[%s4 + $0xb8] sm:$0xff]
        %v462 = vld [vmem:[%s4 + $0xc0] sm:$0xff]
        %v463 = vld [vmem:[%s4 + $0xc8] sm:$0xff]
        %v464 = vld [vmem:[%s4 + $0xd0] sm:$0xff]
        %v465 = vld [vmem:[%s4 + $0xd8] sm:$0xff]
        %v466 = vld [vmem:[%s4 + $0xe0] sm:$0xff]
        %v467 = vld [vmem:[%s4 + $0xe8] sm:$0xff]
        %v468 = vld [vmem:[%s4 + $0xf0] sm:$0xff]
        %v469 = vld [vmem:[%s4 + $0xf8] sm:$0xff]
        %v470 = vld [vmem:[%s4 + $0x100] sm:$0xff]
        %v471 = vld [vmem:[%s4 + $0x108] sm:$0xff]
        %v472 = vld [vmem:[%s4 + $0x110] sm:$0xff]
        %v473 = vld [vmem:[%s4 + $0x118] sm:$0xff]
        %v474 = vld [vmem:[%s4 + $0x120] sm:$0xff]
        %v475 = vld [vmem:[%s4 + $0x128] sm:$0xff]
        %v476 = vld [vmem:[%s4 + $0x130] sm:$0xff]
        %v477 = vld [vmem:[%s4 + $0x138] sm:$0xff]
        %v478 = vld [vmem:[%s4 + $0x140] sm:$0xff]
        %v479 = vld [vmem:[%s4 + $0x148] sm:$0xff]
        %v480 = vld [vmem:[%s4 + $0x150] sm:$0xff]
        %v481 = vld [vmem:[%s4 + $0x158] sm:$0xff]
        %v482 = vld [vmem:[%s4 + $0x160] sm:$0xff]
        %v483 = vld [vmem:[%s4 + $0x168] sm:$0xff]
        %v484 = vld [vmem:[%s4 + $0x170] sm:$0xff]
        %v485 = vld [vmem:[%s4 + $0x178] sm:$0xff]
        %v486 = vld [vmem:[%s4 + $0x180] sm:$0xff]
        %v487 = vld [vmem:[%s4 + $0x188] sm:$0xff]
        %v488 = vld [vmem:[%s4 + $0x190] sm:$0xff]
        %v489 = vld [vmem:[%s4 + $0x198] sm:$0xff]
        %v490 = vld [vmem:[%s4 + $0x1a0] sm:$0xff]
        %v491 = vld [vmem:[%s4 + $0x1a8] sm:$0xff]
        %v492 = vld [vmem:[%s4 + $0x1b0] sm:$0xff]
        %v493 = vld [vmem:[%s4 + $0x1b8] sm:$0xff]
        %v494 = vld [vmem:[%s4 + $0x1c0] sm:$0xff]
        %v495 = vld [vmem:[%s4 + $0x1c8] sm:$0xff]
        %v496 = vld [vmem:[%s4 + $0x1d0] sm:$0xff]
        %v497 = vld [vmem:[%s4 + $0x1d8] sm:$0xff]
        %v498 = vld [vmem:[%s4 + $0x1e0] sm:$0xff]
        %v499 = vld [vmem:[%s4 + $0x1e8] sm:$0xff]
        %v500 = vld [vmem:[%s4 + $0x1f0] sm:$0xff]
        %v501 = vld [vmem:[%s4 + $0x1f8] sm:$0xff]
        %v502 = vld [vmem:[%s4 + $0x200] sm:$0xff]
        %v503 = vld [vmem:[%s4 + $0x208] sm:$0xff]
        %v504 = vld [vmem:[%s4 + $0x210] sm:$0xff]
        %v505 = vld [vmem:[%s4 + $0x218] sm:$0xff]
        %v506 = vld [vmem:[%s4 + $0x220] sm:$0xff]
        %v507 = vld [vmem:[%s4 + $0x228] sm:$0xff]
        %v508 = vld [vmem:[%s4 + $0x230] sm:$0xff]
        %v509 = vld [vmem:[%s4 + $0x238] sm:$0xff]
        %v510 = vld [vmem:[%s4 + $0x240] sm:$0xff]
        %v511 = vld [vmem:[%s4 + $0x248] sm:$0xff]
        %v512 = vld [vmem:[%s4 + $0x250] sm:$0xff]
        %v513 = vld [vmem:[%s4 + $0x258] sm:$0xff]
        %v514 = vld [vmem:[%s4 + $0x260] sm:$0xff]
        %v515 = vld [vmem:[%s4 + $0x268] sm:$0xff]
        %v516 = vld [vmem:[%s4 + $0x270] sm:$0xff]
        %v517 = vld [vmem:[%s4 + $0x278] sm:$0xff]
        %v518 = vld [vmem:[%s4 + $0x280] sm:$0xff]
        %v519 = vld [vmem:[%s4 + $0x288] sm:$0xff]
        %v520 = vld [vmem:[%s4 + $0x290] sm:$0xff]
        %v521 = vld [vmem:[%s4 + $0x298] sm:$0xff]
        %v522 = vld [vmem:[%s4 + $0x2a0] sm:$0xff]
        %v523 = vld [vmem:[%s4 + $0x2a8] sm:$0xff]
        %v524 = vld [vmem:[%s4 + $0x2b0] sm:$0xff]
        %v525 = vld [vmem:[%s4 + $0x2b8] sm:$0xff]
        %v526 = vld [vmem:[%s4 + $0x2c0] sm:$0xff]
        %v527 = vld [vmem:[%s4 + $0x2c8] sm:$0xff]
        %v528 = vld [vmem:[%s4 + $0x2d0] sm:$0xff]
        %v529 = vld [vmem:[%s4 + $0x2d8] sm:$0xff]
        %v530 = vld [vmem:[%s4 + $0x2e0] sm:$0xff]
        %v531 = vld [vmem:[%s4 + $0x2e8] sm:$0xff]
        %v532 = vld [vmem:[%s4 + $0x2f0] sm:$0xff]
        %v533 = vld [vmem:[%s4 + $0x2f8] sm:$0xff]
        %v534 = vld [vmem:[%s4 + $0x300] sm:$0xff]
        %v535 = vld [vmem:[%s4 + $0x308] sm:$0xff]
        %v536 = vld [vmem:[%s4 + $0x310] sm:$0xff]
        %v537 = vld [vmem:[%s4 + $0x318] sm:$0xff]
        %v538 = vld [vmem:[%s4 + $0x320] sm:$0xff]
        %v539 = vld [vmem:[%s4 + $0x328] sm:$0xff]
        %v540 = vld [vmem:[%s4 + $0x330] sm:$0xff]
        %v541 = vld [vmem:[%s4 + $0x338] sm:$0xff]
        %v542 = vld [vmem:[%s4 + $0x340] sm:$0xff]
        %v543 = vld [vmem:[%s4 + $0x348] sm:$0xff]
        %v544 = vld [vmem:[%s4 + $0x350] sm:$0xff]
        %v545 = vld [vmem:[%s4 + $0x358] sm:$0xff]
        %v546 = vld [vmem:[%s4 + $0x360] sm:$0xff]
        %v547 = vld [vmem:[%s4 + $0x368] sm:$0xff]
        %v548 = vld [vmem:[%s4 + $0x370] sm:$0xff]
        %v549 = vld [vmem:[%s4 + $0x378] sm:$0xff]
        %v550 = vld [vmem:[%s4 + $0x380] sm:$0xff]
        %v551 = vld [vmem:[%s4 + $0x388] sm:$0xff]
        %v552 = vld [vmem:[%s4 + $0x390] sm:$0xff]
        %v553 = vld [vmem:[%s4 + $0x398] sm:$0xff]
        %v554 = vld [vmem:[%s4 + $0x3a0] sm:$0xff]
        %v555 = vld [vmem:[%s4 + $0x3a8] sm:$0xff]
        %v556 = vld [vmem:[%s4 + $0x3b0] sm:$0xff]
        %v557 = vld [vmem:[%s4 + $0x3b8] sm:$0xff]
        %v558 = vld [vmem:[%s4 + $0x3c0] sm:$0xff]
        %v559 = vld [vmem:[%s4 + $0x3c8] sm:$0xff]
        %v560 = vld [vmem:[%s4 + $0x3d0] sm:$0xff]
        %v561 = vld [vmem:[%s4 + $0x3d8] sm:$0xff]
        %v562 = vld [vmem:[%s4 + $0x3e0] sm:$0xff]
        %v563 = vld [vmem:[%s4 + $0x3e8] sm:$0xff]
        %v564 = vld [vmem:[%s4 + $0x3f0] sm:$0xff]
        %v565 = vld [vmem:[%s4 + $0x3f8] sm:$0xff]
        %566 = vst [vmem:[#allocation2] sm:$0xf] 0
        %567 = vst [vmem:[#allocation2 + $0x14] sm:$0xf] 0
        %vm568 = vcmask 1044000
        %vm569 = vcmask 556036
        %vm570 = vmor %vm569, %vm568
        %571 = vst.msk [vmem:[#allocation2 + $0xc] sm:$0xff] %vm570, 0
        %572 = vst.msk [vmem:[#allocation2 + $0x20] sm:$0xff] %vm570, 0
        %vm573 = vcmask 1040384
        %vm574 = vsmask.f32 256
        %vm575 = vmand %vm573, %vm574
        %vm576 = vcmask 1044484
        %vm577 = vsmask.f32 4352
        %vm578 = vmand %vm576, %vm577
        %vm579 = vmor %vm578, %vm575
        %v580 = vld [vmem:[#allocation3 + $0xd8] sm:$0x11]
        %v581 = vsel %vm579, 1065369472, %v580
        %582 = vst [vmem:[#allocation3 + $0xd8] sm:$0x11] %v581
        %vm583 = vcmask 548864
        %vm584 = vmand %vm583, %vm574
        %v585 = vld [vmem:[#allocation3 + $0xe0] sm:$0x1]
        %v586 = vsel %vm584, 1065369472, %v585
        %587 = vst [vmem:[#allocation3 + $0xe0] sm:$0x1] %v586
        %v588 = vld [vmem:[%s221] sm:$0xff]
        %v589 = vld [vmem:[%s221 + $0x8] sm:$0xf]
        %v590 = vld [vmem:[%s221 + $0xc] sm:$0xff]
        %v591 = vld [vmem:[%s221 + $0x14] sm:$0xf]
        %v592 = vld [vmem:[%s221 + $0x18] sm:$0xff]
        %v593 = vld [vmem:[%s221 + $0x20] sm:$0xf]
        %v594 = vld [vmem:[%s221 + $0x24] sm:$0xff]
        %v595 = vld [vmem:[%s221 + $0x2c] sm:$0xf]
        %v596 = vld [vmem:[%s221 + $0x30] sm:$0x77]
        %v597 = vld [vmem:[%s221 + $0x38] sm:$0x7]
        %v600 = vunpack.c.l.b16 %v260
        %v601 = vunpack.c.l.b16 %v261
        %v602 = vpack.c.b16 %v601, %v600
        %v613 = vunpack.c.l.b16 %v588
        %v614 = vunpack.c.h.b16 %v588
        %v615 = vunpack.c.l.b16 %v589
        %v616 = vunpack.c.l.b16 %v590
        %v617 = vunpack.c.h.b16 %v590
        %v618 = vunpack.c.l.b16 %v591
        %v619 = vunpack.c.l.b16 %v592
        %v620 = vunpack.c.h.b16 %v592
        %v621 = vunpack.c.l.b16 %v593
        %v622 = vunpack.c.l.b16 %v594
        %v623 = vunpack.c.h.b16 %v594
        %v624 = vunpack.c.l.b16 %v595
        %v625 = vunpack.c.l.b16 %v596
        %v626 = vunpack.c.h.b16 %v596
        %v627 = vunpack.c.l.b16 %v597
        %v628 = vpack.c.b16 %v616, %v613
        %v629 = vpack.c.b16 %v617, %v614
        %v630 = vpack.c.b16 %v618, %v615
        %v631 = vpack.c.b16 %v622, %v619
        %v632 = vpack.c.b16 %v623, %v620
        %v633 = vpack.c.b16 %v624, %v621
        %v634 = vpack.c.b16 %v625, %v625
        %v635 = vpack.c.b16 %v626, %v626
        %v636 = vpack.c.b16 %v627, %v627
        %vm643 = vcmask 302080
        %v645 = vsel %vm643, %v602, 0
        %vm647 = vcmask 1041408
        %vm648 = vcmask 1042432
        %v649 = vsel %vm647, 4294967295, 65535
        %v650 = vsel %vm648, %v649, 0
        %v652 = vand.u32 %v634, %v650
        %v655 = vand.u32 %v635, %v650
        %v658 = vand.u32 %v636, %v650
        %660 = vmatprep.subr.bf16.mxu0 0
        %661 = vmatpush1.bf16.msra.mxu0 0
        %662 = vmatprep.subr.bf16.mxu0 0
        %663 = vmatpush1.bf16.msra.mxu0 0
        %664 = vmatprep.subr.bf16.mxu0 0
        %665 = vmatpush1.bf16.msra.mxu0 0
        %666 = vmatprep.subr.bf16.mxu0 0
        %667 = vmatpush1.bf16.msra.mxu0 0
        %668 = vmatprep.subr.bf16.mxu0 0
        %669 = vmatpush1.bf16.msra.mxu0 0
        %670 = vmatprep.subr.bf16.mxu0 %v655
        %671 = vmatpush1.bf16.msra.mxu0 %v652
        %672 = vmatprep.subr.bf16.mxu0 %v632
        %673 = vmatpush1.bf16.msra.mxu0 %v631
        %674 = vmatprep.subr.bf16.mxu0 %v629
        %675 = vmatpush1.bf16.msra.mxu0 %v628
        %676 = vmatprep.subr.bf16.mxu0 0
        %677 = vmatpush2.bf16.msra.mxu0 0
        %678 = vmatprep.subr.bf16.mxu0 0
        %679 = vmatpush2.bf16.msra.mxu0 0
        %680 = vmatprep.subr.bf16.mxu0 0
        %681 = vmatpush2.bf16.msra.mxu0 0
        %682 = vmatprep.subr.bf16.mxu0 0
        %683 = vmatpush2.bf16.msra.mxu0 0
        %684 = vmatprep.subr.bf16.mxu0 0
        %685 = vmatpush2.bf16.msra.mxu0 0
        %686 = vmatprep.subr.bf16.mxu0 0
        %687 = vmatpush2.bf16.msra.mxu0 0
        %688 = vmatprep.subr.bf16.mxu0 0
        %689 = vmatpush2.bf16.msra.mxu0 0
        %690 = vmatprep.subr.bf16.mxu0 0
        %691 = vmatpush2.bf16.msra.mxu0 0
        %692 = vmatprep.mubr.bf16.mxu0 0
        %693 = vmatmul.mubr.bf16.gmra.mxu0 %v645
        %v694 = vpop.f32.mrf.mxu0
        %v695 = vadd.f32 0.0, %v694
        %v696 = vpop.f32.mrf.mxu0
        %v697 = vadd.f32 0.0, %v696
        %v698 = vpop.f32.mrf.mxu0
        %v699 = vadd.f32 0.0, %v698
        %v700 = vpop.f32.mrf.mxu0
        %v701 = vadd.f32 0.0, %v700
        %702 = vdwg.mxu0
        %703 = vmatprep.subr.bf16.mxu0 0
        %704 = vmatpush1.bf16.msra.mxu0 0
        %705 = vmatprep.subr.bf16.mxu0 0
        %706 = vmatpush1.bf16.msra.mxu0 0
        %707 = vmatprep.subr.bf16.mxu0 0
        %708 = vmatpush1.bf16.msra.mxu0 0
        %709 = vmatprep.subr.bf16.mxu0 0
        %710 = vmatpush1.bf16.msra.mxu0 0
        %711 = vmatprep.subr.bf16.mxu0 0
        %712 = vmatpush1.bf16.msra.mxu0 0
        %713 = vmatprep.subr.bf16.mxu0 0
        %714 = vmatpush1.bf16.msra.mxu0 %v658
        %715 = vmatprep.subr.bf16.mxu0 0
        %716 = vmatpush1.bf16.msra.mxu0 %v633
        %717 = vmatprep.subr.bf16.mxu0 0
        %718 = vmatpush1.bf16.msra.mxu0 %v630
        %719 = vmatprep.subr.bf16.mxu0 0
        %720 = vmatpush2.bf16.msra.mxu0 0
        %721 = vmatprep.subr.bf16.mxu0 0
        %722 = vmatpush2.bf16.msra.mxu0 0
        %723 = vmatprep.subr.bf16.mxu0 0
        %724 = vmatpush2.bf16.msra.mxu0 0
        %725 = vmatprep.subr.bf16.mxu0 0
        %726 = vmatpush2.bf16.msra.mxu0 0
        %727 = vmatprep.subr.bf16.mxu0 0
        %728 = vmatpush2.bf16.msra.mxu0 0
        %729 = vmatprep.subr.bf16.mxu0 0
        %730 = vmatpush2.bf16.msra.mxu0 0
        %731 = vmatprep.subr.bf16.mxu0 0
        %732 = vmatpush2.bf16.msra.mxu0 0
        %733 = vmatprep.subr.bf16.mxu0 0
        %734 = vmatpush2.bf16.msra.mxu0 0
        %735 = vmatprep.mubr.bf16.mxu0 0
        %736 = vmatmul.mubr.bf16.gmra.mxu0 %v645
        %v737 = vpop.f32.mrf.mxu0
        %v738 = vadd.f32 0.0, %v737
        %v739 = vpop.f32.mrf.mxu0
        %v740 = vpop.f32.mrf.mxu0
        %v741 = vadd.f32 0.0, %v740
        %v742 = vpop.f32.mrf.mxu0
        %743 = vdwg.mxu0
        %v744 = vmax.f32 %v695, 0.0
        %v745 = vmax.f32 %v697, 0.0
        %v746 = vmax.f32 %v738, 0.0
        %v747 = vmax.f32 %v699, 0.0
        %v748 = vmax.f32 %v701, 0.0
        %v749 = vmax.f32 %v741, 0.0
        %v751 = vlaneseq
        %v752 = vshrl.u32 %v751, 7
        %v753 = vsub.s32 0, %v752
        %v754 = vrot.slane %v257, %v753
        %v755 = vlaneseq
        %v756 = vshrl.u32 %v755, 7
        %v757 = vsub.s32 1, %v756
        %v758 = vrot.slane %v257, %v757
        %v759 = vlaneseq
        %v760 = vshrl.u32 %v759, 7
        %v761 = vsub.s32 2, %v760
        %v762 = vrot.slane %v257, %v761
        %v766 = vmul.f32 %v744, %v754
        %v767 = vmul.f32 %v745, %v758
        %v768 = vmul.f32 %v746, %v762
        %v769 = vmul.f32 %v747, %v754
        %v770 = vmul.f32 %v748, %v758
        %v771 = vmul.f32 %v749, %v762
        %v772 = vpack.c.bf16 %v769, %v766
        %v773 = vpack.c.bf16 %v770, %v767
        %v774 = vpack.c.bf16 %v771, %v768
        %v778 = vunpack.c.l.b16 %v772
        %v779 = vunpack.c.l.b16 %v773
        %v780 = vunpack.c.l.b16 %v774
        %v781 = vunpack.c.h.b16 %v772
        %v782 = vunpack.c.h.b16 %v773
        %v783 = vunpack.c.h.b16 %v774
        %v784 = vpack.c.b16 %v779, %v778
        %v785 = vpack.c.b16 %v780, %v780
        %v786 = vpack.c.b16 %v782, %v781
        %v787 = vpack.c.b16 %v783, %v783
        %792 = vst [vmem:[#allocation2 + $0x4] sm:$0xff] %v784
        %vm793 = vcmask 551936
        %794 = vst.msk [vmem:[#allocation2 + $0xc] sm:$0xf] %vm793, %v785
        %795 = vst [vmem:[#allocation2 + $0x18] sm:$0xff] %v786
        %796 = vst.msk [vmem:[#allocation2 + $0x20] sm:$0xf] %vm793, %v787
        %v797 = vld [vmem:[#allocation2] sm:$0xff]
        %v798 = vld [vmem:[#allocation2 + $0x8] sm:$0xff]
        %v799 = vld [vmem:[#allocation2 + $0x14] sm:$0xff]
        %v800 = vld [vmem:[#allocation2 + $0x1c] sm:$0xff]
        %805 = vrot.lane.b32.xlu0 %v797, 19
        %v806 = vpop.permute.xlu0 %805
        %807 = vrot.lane.b32.xlu0 %v798, 19
        %v808 = vpop.permute.xlu0 %807
        %809 = vrot.lane.b32.xlu0 %v799, 19
        %v810 = vpop.permute.xlu0 %809
        %811 = vrot.lane.b32.xlu0 %v800, 19
        %v812 = vpop.permute.xlu0 %811
        %v813 = vrot.slane %v806, 4
        %v814 = vrot.slane %v808, 4
        %v815 = vrot.slane %v810, 4
        %v816 = vrot.slane %v812, 4
        %vm817 = vcmask 1043456
        %v818 = vsel %vm817, %v813, %v814
        %vm819 = vcmask 154624
        %v820 = vsel %vm819, %v806, %v818
        %v821 = vsel %vm819, %v808, %v814
        %v822 = vsel %vm817, %v815, %v816
        %v823 = vsel %vm819, %v810, %v822
        %v824 = vsel %vm819, %v812, %v816
        %829 = vst [vmem:[#allocation3] sm:$0xff] %v820
        %830 = vst.msk [vmem:[#allocation3 + $0x8] sm:$0xf] %vm793, %v821
        %831 = vst [vmem:[#allocation3 + $0xc] sm:$0xff] %v823
        %832 = vst.msk [vmem:[#allocation3 + $0x14] sm:$0xf] %vm793, %v824
        %v833 = vld [vmem:[#allocation2] sm:$0xff]
        %v834 = vld [vmem:[#allocation2 + $0x8] sm:$0xff]
        %v835 = vld [vmem:[#allocation2 + $0x14] sm:$0xff]
        %v836 = vld [vmem:[#allocation2 + $0x1c] sm:$0xff]
        %841 = vrot.lane.b32.xlu0 %v833, 18
        %v842 = vpop.permute.xlu0 %841
        %843 = vrot.lane.b32.xlu0 %v834, 18
        %v844 = vpop.permute.xlu0 %843
        %845 = vrot.lane.b32.xlu0 %v835, 18
        %v846 = vpop.permute.xlu0 %845
        %847 = vrot.lane.b32.xlu0 %v836, 18
        %v848 = vpop.permute.xlu0 %847
        %v849 = vrot.slane %v842, 4
        %v850 = vrot.slane %v844, 4
        %v851 = vrot.slane %v846, 4
        %v852 = vrot.slane %v848, 4
        %v853 = vsel %vm817, %v849, %v850
        %vm854 = vcmask 146432
        %v855 = vsel %vm854, %v842, %v853
        %v856 = vsel %vm854, %v844, %v850
        %v857 = vsel %vm817, %v851, %v852
        %v858 = vsel %vm854, %v846, %v857
        %v859 = vsel %vm854, %v848, %v852
        %864 = vst [vmem:[#allocation3 + $0x18] sm:$0xff] %v855
        %865 = vst.msk [vmem:[#allocation3 + $0x20] sm:$0xf] %vm793, %v856
        %866 = vst [vmem:[#allocation3 + $0x24] sm:$0xff] %v858
        %867 = vst.msk [vmem:[#allocation3 + $0x2c] sm:$0xf] %vm793, %v859
        %v868 = vld [vmem:[#allocation2] sm:$0xff]
        %v869 = vld [vmem:[#allocation2 + $0x8] sm:$0xff]
        %v870 = vld [vmem:[#allocation2 + $0x14] sm:$0xff]
        %v871 = vld [vmem:[#allocation2 + $0x1c] sm:$0xff]
        %876 = vrot.lane.b32.xlu0 %v868, 17
        %v877 = vpop.permute.xlu0 %876
        %878 = vrot.lane.b32.xlu0 %v869, 17
        %v879 = vpop.permute.xlu0 %878
        %880 = vrot.lane.b32.xlu0 %v870, 17
        %v881 = vpop.permute.xlu0 %880
        %882 = vrot.lane.b32.xlu0 %v871, 17
        %v883 = vpop.permute.xlu0 %882
        %v884 = vrot.slane %v877, 4
        %v885 = vrot.slane %v879, 4
        %v886 = vrot.slane %v881, 4
        %v887 = vrot.slane %v883, 4
        %v888 = vsel %vm817, %v884, %v885
        %vm889 = vcmask 138240
        %v890 = vsel %vm889, %v877, %v888
        %v891 = vsel %vm889, %v879, %v885
        %v892 = vsel %vm817, %v886, %v887
        %v893 = vsel %vm889, %v881, %v892
        %v894 = vsel %vm889, %v883, %v887
        %899 = vst [vmem:[#allocation3 + $0x30] sm:$0xff] %v890
        %900 = vst.msk [vmem:[#allocation3 + $0x38] sm:$0xf] %vm793, %v891
        %901 = vst [vmem:[#allocation3 + $0x3c] sm:$0xff] %v893
        %902 = vst.msk [vmem:[#allocation3 + $0x44] sm:$0xf] %vm793, %v894
        %v903 = vld [vmem:[#allocation2] sm:$0xff]
        %v904 = vld [vmem:[#allocation2 + $0x8] sm:$0xff]
        %v905 = vld [vmem:[#allocation2 + $0x14] sm:$0xff]
        %v906 = vld [vmem:[#allocation2 + $0x1c] sm:$0xff]
        %911 = vrot.lane.b32.xlu0 %v903, 1
        %v912 = vpop.permute.xlu0 %911
        %913 = vrot.lane.b32.xlu0 %v904, 1
        %v914 = vpop.permute.xlu0 %913
        %915 = vrot.lane.b32.xlu0 %v905, 1
        %v916 = vpop.permute.xlu0 %915
        %917 = vrot.lane.b32.xlu0 %v906, 1
        %v918 = vpop.permute.xlu0 %917
        %v919 = vrot.slane %v912, 4
        %v920 = vrot.slane %v914, 4
        %v921 = vrot.slane %v916, 4
        %v922 = vrot.slane %v918, 4
        %v923 = vsel %vm817, %v919, %v920
        %vm924 = vcmask 7168
        %v925 = vsel %vm924, %v912, %v923
        %v926 = vsel %vm924, %v914, %v920
        %v927 = vsel %vm817, %v921, %v922
        %v928 = vsel %vm924, %v916, %v927
        %v929 = vsel %vm924, %v918, %v922
        %934 = vst [vmem:[#allocation3 + $0x48] sm:$0xff] %v925
        %935 = vst.msk [vmem:[#allocation3 + $0x50] sm:$0xf] %vm793, %v926
        %936 = vst [vmem:[#allocation3 + $0x54] sm:$0xff] %v928
        %937 = vst.msk [vmem:[#allocation3 + $0x5c] sm:$0xf] %vm793, %v929
        %v938 = vld [vmem:[#allocation2 + $0x4] sm:$0xff]
        %v939 = vld [vmem:[#allocation2 + $0xc] sm:$0xf]
        %v940 = vld [vmem:[#allocation2 + $0x18] sm:$0xff]
        %v941 = vld [vmem:[#allocation2 + $0x20] sm:$0xf]
        %942 = vst [vmem:[#allocation3 + $0x60] sm:$0xff] %v938
        %943 = vst.msk [vmem:[#allocation3 + $0x68] sm:$0xf] %vm793, %v939
        %944 = vst [vmem:[#allocation3 + $0x6c] sm:$0xff] %v940
        %945 = vst.msk [vmem:[#allocation3 + $0x74] sm:$0xf] %vm793, %v941
        %v946 = vld [vmem:[#allocation2 + $0x4] sm:$0xff]
        %v947 = vld [vmem:[#allocation2 + $0xc] sm:$0xf]
        %v948 = vld [vmem:[#allocation2 + $0x18] sm:$0xff]
        %v949 = vld [vmem:[#allocation2 + $0x20] sm:$0xf]
        %954 = vrot.lane.b32.xlu0 %v946, 127
        %v955 = vpop.permute.xlu0 %954
        %956 = vrot.lane.b32.xlu0 %v947, 127
        %v957 = vpop.permute.xlu0 %956
        %958 = vrot.lane.b32.xlu0 %v948, 127
        %v959 = vpop.permute.xlu0 %958
        %960 = vrot.lane.b32.xlu0 %v949, 127
        %v961 = vpop.permute.xlu0 %960
        %v962 = vrot.slane %v955, 4
        %v963 = vrot.slane %v957, 4
        %v964 = vrot.slane %v959, 4
        %v965 = vrot.slane %v961, 4
        %v966 = vsel %vm817, %v962, %v963
        %vm967 = vcmask 1039360
        %v968 = vsel %vm967, %v955, %v966
        %v969 = vsel %vm817, %v964, %v965
        %v970 = vsel %vm967, %v959, %v969
        %975 = vst [vmem:[#allocation3 + $0x78] sm:$0xff] %v968
        %976 = vst.msk [vmem:[#allocation3 + $0x80] sm:$0xf] %vm793, %v957
        %977 = vst [vmem:[#allocation3 + $0x84] sm:$0xff] %v970
        %978 = vst.msk [vmem:[#allocation3 + $0x8c] sm:$0xf] %vm793, %v961
        %v979 = vld [vmem:[#allocation2 + $0x4] sm:$0xff]
        %v980 = vld [vmem:[#allocation2 + $0xc] sm:$0xf]
        %v981 = vld [vmem:[#allocation2 + $0x18] sm:$0xff]
        %v982 = vld [vmem:[#allocation2 + $0x20] sm:$0xf]
        %987 = vrot.lane.b32.xlu0 %v979, 111
        %v988 = vpop.permute.xlu0 %987
        %989 = vrot.lane.b32.xlu0 %v980, 111
        %v990 = vpop.permute.xlu0 %989
        %991 = vrot.lane.b32.xlu0 %v981, 111
        %v992 = vpop.permute.xlu0 %991
        %993 = vrot.lane.b32.xlu0 %v982, 111
        %v994 = vpop.permute.xlu0 %993
        %v995 = vrot.slane %v988, 4
        %v996 = vrot.slane %v990, 4
        %v997 = vrot.slane %v992, 4
        %v998 = vrot.slane %v994, 4
        %v999 = vsel %vm817, %v995, %v996
        %vm1000 = vcmask 908288
        %v1001 = vsel %vm1000, %v988, %v999
        %v1002 = vsel %vm817, %v997, %v998
        %v1003 = vsel %vm1000, %v992, %v1002
        %1008 = vst [vmem:[#allocation3 + $0x90] sm:$0xff] %v1001
        %1009 = vst.msk [vmem:[#allocation3 + $0x98] sm:$0xf] %vm793, %v990
        %1010 = vst [vmem:[#allocation3 + $0x9c] sm:$0xff] %v1003
        %1011 = vst.msk [vmem:[#allocation3 + $0xa4] sm:$0xf] %vm793, %v994
        %v1012 = vld [vmem:[#allocation2 + $0x4] sm:$0xff]
        %v1013 = vld [vmem:[#allocation2 + $0xc] sm:$0xf]
        %v1014 = vld [vmem:[#allocation2 + $0x18] sm:$0xff]
        %v1015 = vld [vmem:[#allocation2 + $0x20] sm:$0xf]
        %1020 = vrot.lane.b32.xlu0 %v1012, 110
        %v1021 = vpop.permute.xlu0 %1020
        %1022 = vrot.lane.b32.xlu0 %v1013, 110
        %v1023 = vpop.permute.xlu0 %1022
        %1024 = vrot.lane.b32.xlu0 %v1014, 110
        %v1025 = vpop.permute.xlu0 %1024
        %1026 = vrot.lane.b32.xlu0 %v1015, 110
        %v1027 = vpop.permute.xlu0 %1026
        %v1028 = vrot.slane %v1021, 4
        %v1029 = vrot.slane %v1023, 4
        %v1030 = vrot.slane %v1025, 4
        %v1031 = vrot.slane %v1027, 4
        %v1032 = vsel %vm817, %v1028, %v1029
        %vm1033 = vcmask 900096
        %v1034 = vsel %vm1033, %v1021, %v1032
        %v1035 = vsel %vm817, %v1030, %v1031
        %v1036 = vsel %vm1033, %v1025, %v1035
        %1041 = vst [vmem:[#allocation3 + $0xa8] sm:$0xff] %v1034
        %1042 = vst.msk [vmem:[#allocation3 + $0xb0] sm:$0xf] %vm793, %v1023
        %1043 = vst [vmem:[#allocation3 + $0xb4] sm:$0xff] %v1036
        %1044 = vst.msk [vmem:[#allocation3 + $0xbc] sm:$0xf] %vm793, %v1027
        %v1045 = vld [vmem:[#allocation2 + $0x4] sm:$0xff]
        %v1046 = vld [vmem:[#allocation2 + $0xc] sm:$0xf]
        %v1047 = vld [vmem:[#allocation2 + $0x18] sm:$0xff]
        %v1048 = vld [vmem:[#allocation2 + $0x20] sm:$0xf]
        %1053 = vrot.lane.b32.xlu0 %v1045, 109
        %v1054 = vpop.permute.xlu0 %1053
        %1055 = vrot.lane.b32.xlu0 %v1046, 109
        %v1056 = vpop.permute.xlu0 %1055
        %1057 = vrot.lane.b32.xlu0 %v1047, 109
        %v1058 = vpop.permute.xlu0 %1057
        %1059 = vrot.lane.b32.xlu0 %v1048, 109
        %v1060 = vpop.permute.xlu0 %1059
        %v1061 = vrot.slane %v1054, 4
        %v1062 = vrot.slane %v1056, 4
        %v1063 = vrot.slane %v1058, 4
        %v1064 = vrot.slane %v1060, 4
        %v1065 = vsel %vm817, %v1061, %v1062
        %vm1066 = vcmask 891904
        %v1067 = vsel %vm1066, %v1054, %v1065
        %v1068 = vsel %vm817, %v1063, %v1064
        %v1069 = vsel %vm1066, %v1058, %v1068
        %1074 = vst [vmem:[#allocation3 + $0xc0] sm:$0xff] %v1067
        %1075 = vst.msk [vmem:[#allocation3 + $0xc8] sm:$0xf] %vm793, %v1056
        %1076 = vst [vmem:[#allocation3 + $0xcc] sm:$0xff] %v1069
        %1077 = vst.msk [vmem:[#allocation3 + $0xd4] sm:$0xf] %vm793, %v1060
        %v1078 = vld [vmem:[#allocation3] sm:$0xff]
        %v1079 = vld [vmem:[#allocation3 + $0x8] sm:$0xf]
        %v1080 = vld [vmem:[#allocation3 + $0xc] sm:$0xff]
        %v1081 = vld [vmem:[#allocation3 + $0x14] sm:$0xf]
        %v1082 = vld [vmem:[#allocation3 + $0x18] sm:$0xff]
        %v1083 = vld [vmem:[#allocation3 + $0x20] sm:$0xf]
        %v1084 = vld [vmem:[#allocation3 + $0x24] sm:$0xff]
        %v1085 = vld [vmem:[#allocation3 + $0x2c] sm:$0xf]
        %v1086 = vld [vmem:[#allocation3 + $0x30] sm:$0xff]
        %v1087 = vld [vmem:[#allocation3 + $0x38] sm:$0xf]
        %v1088 = vld [vmem:[#allocation3 + $0x3c] sm:$0xff]
        %v1089 = vld [vmem:[#allocation3 + $0x44] sm:$0xf]
        %v1090 = vld [vmem:[#allocation3 + $0x48] sm:$0xff]
        %v1091 = vld [vmem:[#allocation3 + $0x50] sm:$0xf]
        %v1092 = vld [vmem:[#allocation3 + $0x54] sm:$0xff]
        %v1093 = vld [vmem:[#allocation3 + $0x5c] sm:$0xf]
        %v1094 = vld [vmem:[#allocation3 + $0x60] sm:$0xff]
        %v1095 = vld [vmem:[#allocation3 + $0x68] sm:$0xf]
        %v1096 = vld [vmem:[#allocation3 + $0x6c] sm:$0xff]
        %v1097 = vld [vmem:[#allocation3 + $0x74] sm:$0xf]
        %v1098 = vld [vmem:[#allocation3 + $0x78] sm:$0xff]
        %v1099 = vld [vmem:[#allocation3 + $0x80] sm:$0xf]
        %v1100 = vld [vmem:[#allocation3 + $0x84] sm:$0xff]
        %v1101 = vld [vmem:[#allocation3 + $0x8c] sm:$0xf]
        %v1102 = vld [vmem:[#allocation3 + $0x90] sm:$0xff]
        %v1103 = vld [vmem:[#allocation3 + $0x98] sm:$0xf]
        %v1104 = vld [vmem:[#allocation3 + $0x9c] sm:$0xff]
        %v1105 = vld [vmem:[#allocation3 + $0xa4] sm:$0xf]
        %v1106 = vld [vmem:[#allocation3 + $0xa8] sm:$0xff]
        %v1107 = vld [vmem:[#allocation3 + $0xb0] sm:$0xf]
        %v1108 = vld [vmem:[#allocation3 + $0xb4] sm:$0xff]
        %v1109 = vld [vmem:[#allocation3 + $0xbc] sm:$0xf]
        %v1110 = vld [vmem:[#allocation3 + $0xc0] sm:$0xff]
        %v1111 = vld [vmem:[#allocation3 + $0xc8] sm:$0xf]
        %v1112 = vld [vmem:[#allocation3 + $0xcc] sm:$0xff]
        %v1113 = vld [vmem:[#allocation3 + $0xd4] sm:$0xf]
        %v1114 = vld [vmem:[#allocation3 + $0xd8] sm:$0x11]
        %v1115 = vld [vmem:[#allocation3 + $0xe0] sm:$0x1]
        %v1120 = vunpack.c.l.b16 %v262
        %v1121 = vunpack.c.h.b16 %v262
        %v1122 = vunpack.c.l.b16 %v263
        %v1123 = vunpack.c.h.b16 %v263
        %v1124 = vunpack.c.l.b16 %v264
        %v1125 = vunpack.c.h.b16 %v264
        %v1126 = vunpack.c.l.b16 %v265
        %v1127 = vunpack.c.h.b16 %v265
        %v1128 = vpack.c.b16 %v1122, %v1120
        %v1129 = vpack.c.b16 %v1123, %v1121
        %v1130 = vpack.c.b16 %v1126, %v1124
        %v1131 = vpack.c.b16 %v1127, %v1125
        %v1172 = vunpack.c.l.b16 %v1078
        %v1173 = vunpack.c.h.b16 %v1078
        %v1174 = vunpack.c.l.b16 %v1079
        %v1175 = vunpack.c.l.b16 %v1080
        %v1176 = vunpack.c.h.b16 %v1080
        %v1177 = vunpack.c.l.b16 %v1081
        %v1178 = vunpack.c.l.b16 %v1082
        %v1179 = vunpack.c.h.b16 %v1082
        %v1180 = vunpack.c.l.b16 %v1083
        %v1181 = vunpack.c.l.b16 %v1084
        %v1182 = vunpack.c.h.b16 %v1084
        %v1183 = vunpack.c.l.b16 %v1085
        %v1184 = vunpack.c.l.b16 %v1086
        %v1185 = vunpack.c.h.b16 %v1086
        %v1186 = vunpack.c.l.b16 %v1087
        %v1187 = vunpack.c.l.b16 %v1088
        %v1188 = vunpack.c.h.b16 %v1088
        %v1189 = vunpack.c.l.b16 %v1089
        %v1190 = vunpack.c.l.b16 %v1090
        %v1191 = vunpack.c.h.b16 %v1090
        %v1192 = vunpack.c.l.b16 %v1091
        %v1193 = vunpack.c.l.b16 %v1092
        %v1194 = vunpack.c.h.b16 %v1092
        %v1195 = vunpack.c.l.b16 %v1093
        %v1196 = vunpack.c.l.b16 %v1094
        %v1197 = vunpack.c.h.b16 %v1094
        %v1198 = vunpack.c.l.b16 %v1095
        %v1199 = vunpack.c.l.b16 %v1096
        %v1200 = vunpack.c.h.b16 %v1096
        %v1201 = vunpack.c.l.b16 %v1097
        %v1202 = vunpack.c.l.b16 %v1098
        %v1203 = vunpack.c.h.b16 %v1098
        %v1204 = vunpack.c.l.b16 %v1099
        %v1205 = vunpack.c.l.b16 %v1100
        %v1206 = vunpack.c.h.b16 %v1100
        %v1207 = vunpack.c.l.b16 %v1101
        %v1208 = vunpack.c.l.b16 %v1102
        %v1209 = vunpack.c.h.b16 %v1102
        %v1210 = vunpack.c.l.b16 %v1103
        %v1211 = vunpack.c.l.b16 %v1104
        %v1212 = vunpack.c.h.b16 %v1104
        %v1213 = vunpack.c.l.b16 %v1105
        %v1214 = vunpack.c.l.b16 %v1106
        %v1215 = vunpack.c.h.b16 %v1106
        %v1216 = vunpack.c.l.b16 %v1107
        %v1217 = vunpack.c.l.b16 %v1108
        %v1218 = vunpack.c.h.b16 %v1108
        %v1219 = vunpack.c.l.b16 %v1109
        %v1220 = vunpack.c.l.b16 %v1110
        %v1221 = vunpack.c.h.b16 %v1110
        %v1222 = vunpack.c.l.b16 %v1111
        %v1223 = vunpack.c.l.b16 %v1112
        %v1224 = vunpack.c.h.b16 %v1112
        %v1225 = vunpack.c.l.b16 %v1113
        %v1226 = vunpack.c.l.b16 %v1114
        %v1227 = vunpack.c.h.b16 %v1114
        %v1228 = vunpack.c.l.b16 %v1115
        %v1229 = vpack.c.b16 %v1175, %v1172
        %v1230 = vpack.c.b16 %v1176, %v1173
        %v1231 = vpack.c.b16 %v1177, %v1174
        %v1232 = vpack.c.b16 %v1181, %v1178
        %v1233 = vpack.c.b16 %v1182, %v1179
        %v1234 = vpack.c.b16 %v1183, %v1180
        %v1235 = vpack.c.b16 %v1187, %v1184
        %v1236 = vpack.c.b16 %v1188, %v1185
        %v1237 = vpack.c.b16 %v1189, %v1186
        %v1238 = vpack.c.b16 %v1193, %v1190
        %v1239 = vpack.c.b16 %v1194, %v1191
        %v1240 = vpack.c.b16 %v1195, %v1192
        %v1241 = vpack.c.b16 %v1199, %v1196
        %v1242 = vpack.c.b16 %v1200, %v1197
        %v1243 = vpack.c.b16 %v1201, %v1198
        %v1244 = vpack.c.b16 %v1205, %v1202
        %v1245 = vpack.c.b16 %v1206, %v1203
        %v1246 = vpack.c.b16 %v1207, %v1204
        %v1247 = vpack.c.b16 %v1211, %v1208
        %v1248 = vpack.c.b16 %v1212, %v1209
        %v1249 = vpack.c.b16 %v1213, %v1210
        %v1250 = vpack.c.b16 %v1217, %v1214
        %v1251 = vpack.c.b16 %v1218, %v1215
        %v1252 = vpack.c.b16 %v1219, %v1216
        %v1253 = vpack.c.b16 %v1223, %v1220
        %v1254 = vpack.c.b16 %v1224, %v1221
        %v1255 = vpack.c.b16 %v1225, %v1222
        %v1256 = vpack.c.b16 %v1226, %v1226
        %v1257 = vpack.c.b16 %v1227, %v1227
        %v1258 = vpack.c.b16 %v1228, %v1228
        %vm1286 = vcmask 138240
        %v1288 = vsel %vm1286, %v1129, 0
        %v1291 = vsel %vm1286, %v1131, 0
        %vm1293 = vcmask 1040384
        %v1294 = vsel 0, 4294967295, 65535
        %v1295 = vsel %vm1293, %v1294, 0
        %v1297 = vand.u32 %v1256, %v1295
        %v1300 = vand.u32 %v1257, %v1295
        %v1303 = vand.u32 %v1258, %v1295
        %1305 = vmatprep.subr.bf16.mxu0 %v1251
        %1306 = vmatpush1.bf16.msra.mxu0 %v1250
        %1307 = vmatprep.subr.bf16.mxu0 %v1248
        %1308 = vmatpush1.bf16.msra.mxu0 %v1247
        %1309 = vmatprep.subr.bf16.mxu0 %v1245
        %1310 = vmatpush1.bf16.msra.mxu0 %v1244
        %1311 = vmatprep.subr.bf16.mxu0 %v1242
        %1312 = vmatpush1.bf16.msra.mxu0 %v1241
        %1313 = vmatprep.subr.bf16.mxu0 %v1239
        %1314 = vmatpush1.bf16.msra.mxu0 %v1238
        %1315 = vmatprep.subr.bf16.mxu0 %v1236
        %1316 = vmatpush1.bf16.msra.mxu0 %v1235
        %1317 = vmatprep.subr.bf16.mxu0 %v1233
        %1318 = vmatpush1.bf16.msra.mxu0 %v1232
        %1319 = vmatprep.subr.bf16.mxu0 %v1230
        %1320 = vmatpush1.bf16.msra.mxu0 %v1229
        %1321 = vmatprep.subr.bf16.mxu0 0
        %1322 = vmatpush2.bf16.msra.mxu0 0
        %1323 = vmatprep.subr.bf16.mxu0 0
        %1324 = vmatpush2.bf16.msra.mxu0 0
        %1325 = vmatprep.subr.bf16.mxu0 0
        %1326 = vmatpush2.bf16.msra.mxu0 0
        %1327 = vmatprep.subr.bf16.mxu0 0
        %1328 = vmatpush2.bf16.msra.mxu0 0
        %1329 = vmatprep.subr.bf16.mxu0 0
        %1330 = vmatpush2.bf16.msra.mxu0 0
        %1331 = vmatprep.subr.bf16.mxu0 0
        %1332 = vmatpush2.bf16.msra.mxu0 0
        %1333 = vmatprep.subr.bf16.mxu0 %v1300
        %1334 = vmatpush2.bf16.msra.mxu0 %v1297
        %1335 = vmatprep.subr.bf16.mxu0 %v1254
        %1336 = vmatpush2.bf16.msra.mxu0 %v1253
        %1337 = vmatprep.mubr.bf16.mxu0 %v1288
        %1338 = vmatmul.mubr.bf16.gmra.mxu0 %v1128
        %v1339 = vpop.f32.mrf.mxu0
        %v1340 = vadd.f32 0.0, %v1339
        %v1341 = vpop.f32.mrf.mxu0
        %v1342 = vadd.f32 0.0, %v1341
        %v1343 = vpop.f32.mrf.mxu0
        %v1344 = vadd.f32 0.0, %v1343
        %v1345 = vpop.f32.mrf.mxu0
        %v1346 = vadd.f32 0.0, %v1345
        %1347 = vmatprep.mubr.bf16.mxu0 %v1291
        %1348 = vmatmul.mubr.bf16.gmra.mxu0 %v1130
        %v1349 = vpop.f32.mrf.mxu0
        %v1350 = vadd.f32 0.0, %v1349
        %v1351 = vpop.f32.mrf.mxu0
        %v1352 = vadd.f32 0.0, %v1351
        %v1353 = vpop.f32.mrf.mxu0
        %v1354 = vadd.f32 0.0, %v1353
        %v1355 = vpop.f32.mrf.mxu0
        %v1356 = vadd.f32 0.0, %v1355
        %1357 = vdwg.mxu0
        %1358 = vmatprep.subr.bf16.mxu0 0
        %1359 = vmatpush1.bf16.msra.mxu0 %v1252
        %1360 = vmatprep.subr.bf16.mxu0 0
        %1361 = vmatpush1.bf16.msra.mxu0 %v1249
        %1362 = vmatprep.subr.bf16.mxu0 0
        %1363 = vmatpush1.bf16.msra.mxu0 %v1246
        %1364 = vmatprep.subr.bf16.mxu0 0
        %1365 = vmatpush1.bf16.msra.mxu0 %v1243
        %1366 = vmatprep.subr.bf16.mxu0 0
        %1367 = vmatpush1.bf16.msra.mxu0 %v1240
        %1368 = vmatprep.subr.bf16.mxu0 0
        %1369 = vmatpush1.bf16.msra.mxu0 %v1237
        %1370 = vmatprep.subr.bf16.mxu0 0
        %1371 = vmatpush1.bf16.msra.mxu0 %v1234
        %1372 = vmatprep.subr.bf16.mxu0 0
        %1373 = vmatpush1.bf16.msra.mxu0 %v1231
        %1374 = vmatprep.subr.bf16.mxu0 0
        %1375 = vmatpush2.bf16.msra.mxu0 0
        %1376 = vmatprep.subr.bf16.mxu0 0
        %1377 = vmatpush2.bf16.msra.mxu0 0
        %1378 = vmatprep.subr.bf16.mxu0 0
        %1379 = vmatpush2.bf16.msra.mxu0 0
        %1380 = vmatprep.subr.bf16.mxu0 0
        %1381 = vmatpush2.bf16.msra.mxu0 0
        %1382 = vmatprep.subr.bf16.mxu0 0
        %1383 = vmatpush2.bf16.msra.mxu0 0
        %1384 = vmatprep.subr.bf16.mxu0 0
        %1385 = vmatpush2.bf16.msra.mxu0 0
        %1386 = vmatprep.subr.bf16.mxu0 0
        %1387 = vmatpush2.bf16.msra.mxu0 %v1303
        %1388 = vmatprep.subr.bf16.mxu0 0
        %1389 = vmatpush2.bf16.msra.mxu0 %v1255
        %1390 = vmatprep.mubr.bf16.mxu0 %v1288
        %1391 = vmatmul.mubr.bf16.gmra.mxu0 %v1128
        %v1392 = vpop.f32.mrf.mxu0
        %v1393 = vadd.f32 0.0, %v1392
        %v1394 = vpop.f32.mrf.mxu0
        %v1395 = vpop.f32.mrf.mxu0
        %v1396 = vadd.f32 0.0, %v1395
        %v1397 = vpop.f32.mrf.mxu0
        %1398 = vmatprep.mubr.bf16.mxu0 %v1291
        %1399 = vmatmul.mubr.bf16.gmra.mxu0 %v1130
        %v1400 = vpop.f32.mrf.mxu0
        %v1401 = vadd.f32 0.0, %v1400
        %v1402 = vpop.f32.mrf.mxu0
        %v1403 = vpop.f32.mrf.mxu0
        %v1404 = vadd.f32 0.0, %v1403
        %v1405 = vpop.f32.mrf.mxu0
        %1406 = vdwg.mxu0
        %v1407 = vmax.f32 %v1340, 0.0
        %v1408 = vmax.f32 %v1342, 0.0
        %v1409 = vmax.f32 %v1393, 0.0
        %v1410 = vmax.f32 %v1344, 0.0
        %v1411 = vmax.f32 %v1346, 0.0
        %v1412 = vmax.f32 %v1396, 0.0
        %v1413 = vmax.f32 %v1350, 0.0
        %v1414 = vmax.f32 %v1352, 0.0
        %v1415 = vmax.f32 %v1401, 0.0
        %v1416 = vmax.f32 %v1354, 0.0
        %v1417 = vmax.f32 %v1356, 0.0
        %v1418 = vmax.f32 %v1404, 0.0
        %v1419 = vpack.c.bf16 %v1410, %v1407
        %v1420 = vpack.c.bf16 %v1411, %v1408
        %v1421 = vpack.c.bf16 %v1412, %v1409
        %v1422 = vpack.c.bf16 %v1416, %v1413
        %v1423 = vpack.c.bf16 %v1417, %v1414
        %v1424 = vpack.c.bf16 %v1418, %v1415
        %v1589 = vunpack.c.l.b16 %v274
        %v1590 = vunpack.c.h.b16 %v274
        %v1591 = vunpack.c.l.b16 %v275
        %v1592 = vunpack.c.h.b16 %v275
        %v1593 = vunpack.c.l.b16 %v276
        %v1594 = vunpack.c.h.b16 %v276
        %v1595 = vunpack.c.l.b16 %v277
        %v1596 = vunpack.c.h.b16 %v277
        %v1597 = vunpack.c.l.b16 %v278
        %v1598 = vunpack.c.h.b16 %v278
        %v1599 = vunpack.c.l.b16 %v279
        %v1600 = vunpack.c.h.b16 %v279
        %v1601 = vunpack.c.l.b16 %v280
        %v1602 = vunpack.c.h.b16 %v280
        %v1603 = vunpack.c.l.b16 %v281
        %v1604 = vunpack.c.h.b16 %v281
        %v1605 = vunpack.c.l.b16 %v282
        %v1606 = vunpack.c.h.b16 %v282
        %v1607 = vunpack.c.l.b16 %v283
        %v1608 = vunpack.c.h.b16 %v283
        %v1609 = vunpack.c.l.b16 %v284
        %v1610 = vunpack.c.h.b16 %v284
        %v1611 = vunpack.c.l.b16 %v285
        %v1612 = vunpack.c.h.b16 %v285
        %v1613 = vunpack.c.l.b16 %v286
        %v1614 = vunpack.c.h.b16 %v286
        %v1615 = vunpack.c.l.b16 %v287
        %v1616 = vunpack.c.h.b16 %v287
        %v1617 = vunpack.c.l.b16 %v288
        %v1618 = vunpack.c.h.b16 %v288
        %v1619 = vunpack.c.l.b16 %v289
        %v1620 = vunpack.c.h.b16 %v289
        %v1621 = vunpack.c.l.b16 %v290
        %v1622 = vunpack.c.h.b16 %v290
        %v1623 = vunpack.c.l.b16 %v291
        %v1624 = vunpack.c.h.b16 %v291
        %v1625 = vunpack.c.l.b16 %v292
        %v1626 = vunpack.c.h.b16 %v292
        %v1627 = vunpack.c.l.b16 %v293
        %v1628 = vunpack.c.h.b16 %v293
        %v1629 = vunpack.c.l.b16 %v294
        %v1630 = vunpack.c.h.b16 %v294
        %v1631 = vunpack.c.l.b16 %v295
        %v1632 = vunpack.c.h.b16 %v295
        %v1633 = vunpack.c.l.b16 %v296
        %v1634 = vunpack.c.h.b16 %v296
        %v1635 = vunpack.c.l.b16 %v297
        %v1636 = vunpack.c.h.b16 %v297
        %v1637 = vunpack.c.l.b16 %v298
        %v1638 = vunpack.c.h.b16 %v298
        %v1639 = vunpack.c.l.b16 %v299
        %v1640 = vunpack.c.h.b16 %v299
        %v1641 = vunpack.c.l.b16 %v300
        %v1642 = vunpack.c.h.b16 %v300
        %v1643 = vunpack.c.l.b16 %v301
        %v1644 = vunpack.c.h.b16 %v301
        %v1645 = vunpack.c.l.b16 %v302
        %v1646 = vunpack.c.h.b16 %v302
        %v1647 = vunpack.c.l.b16 %v303
        %v1648 = vunpack.c.h.b16 %v303
        %v1649 = vunpack.c.l.b16 %v304
        %v1650 = vunpack.c.h.b16 %v304
        %v1651 = vunpack.c.l.b16 %v305
        %v1652 = vunpack.c.h.b16 %v305
        %v1653 = vunpack.c.l.b16 %v306
        %v1654 = vunpack.c.h.b16 %v306
        %v1655 = vunpack.c.l.b16 %v307
        %v1656 = vunpack.c.h.b16 %v307
        %v1657 = vunpack.c.l.b16 %v308
        %v1658 = vunpack.c.h.b16 %v308
        %v1659 = vunpack.c.l.b16 %v309
        %v1660 = vunpack.c.h.b16 %v309
        %v1661 = vunpack.c.l.b16 %v310
        %v1662 = vunpack.c.h.b16 %v310
        %v1663 = vunpack.c.l.b16 %v311
        %v1664 = vunpack.c.h.b16 %v311
        %v1665 = vunpack.c.l.b16 %v312
        %v1666 = vunpack.c.h.b16 %v312
        %v1667 = vunpack.c.l.b16 %v313
        %v1668 = vunpack.c.h.b16 %v313
        %v1669 = vunpack.c.l.b16 %v314
        %v1670 = vunpack.c.h.b16 %v314
        %v1671 = vunpack.c.l.b16 %v315
        %v1672 = vunpack.c.h.b16 %v315
        %v1673 = vunpack.c.l.b16 %v316
        %v1674 = vunpack.c.h.b16 %v316
        %v1675 = vunpack.c.l.b16 %v317
        %v1676 = vunpack.c.h.b16 %v317
        %v1677 = vunpack.c.l.b16 %v318
        %v1678 = vunpack.c.h.b16 %v318
        %v1679 = vunpack.c.l.b16 %v319
        %v1680 = vunpack.c.h.b16 %v319
        %v1681 = vunpack.c.l.b16 %v320
        %v1682 = vunpack.c.h.b16 %v320
        %v1683 = vunpack.c.l.b16 %v321
        %v1684 = vunpack.c.h.b16 %v321
        %v1685 = vunpack.c.l.b16 %v322
        %v1686 = vunpack.c.h.b16 %v322
        %v1687 = vunpack.c.l.b16 %v323
        %v1688 = vunpack.c.h.b16 %v323
        %v1689 = vunpack.c.l.b16 %v324
        %v1690 = vunpack.c.h.b16 %v324
        %v1691 = vunpack.c.l.b16 %v325
        %v1692 = vunpack.c.h.b16 %v325
        %v1693 = vunpack.c.l.b16 %v326
        %v1694 = vunpack.c.h.b16 %v326
        %v1695 = vunpack.c.l.b16 %v327
        %v1696 = vunpack.c.h.b16 %v327
        %v1697 = vunpack.c.l.b16 %v328
        %v1698 = vunpack.c.h.b16 %v328
        %v1699 = vunpack.c.l.b16 %v329
        %v1700 = vunpack.c.h.b16 %v329
        %v1701 = vunpack.c.l.b16 %v330
        %v1702 = vunpack.c.h.b16 %v330
        %v1703 = vunpack.c.l.b16 %v331
        %v1704 = vunpack.c.h.b16 %v331
        %v1705 = vunpack.c.l.b16 %v332
        %v1706 = vunpack.c.h.b16 %v332
        %v1707 = vunpack.c.l.b16 %v333
        %v1708 = vunpack.c.h.b16 %v333
        %v1709 = vunpack.c.l.b16 %v334
        %v1710 = vunpack.c.h.b16 %v334
        %v1711 = vunpack.c.l.b16 %v335
        %v1712 = vunpack.c.h.b16 %v335
        %v1713 = vunpack.c.l.b16 %v336
        %v1714 = vunpack.c.h.b16 %v336
        %v1715 = vunpack.c.l.b16 %v337
        %v1716 = vunpack.c.h.b16 %v337
        %v1717 = vunpack.c.l.b16 %v338
        %v1718 = vunpack.c.h.b16 %v338
        %v1719 = vunpack.c.l.b16 %v339
        %v1720 = vunpack.c.h.b16 %v339
        %v1721 = vunpack.c.l.b16 %v340
        %v1722 = vunpack.c.h.b16 %v340
        %v1723 = vunpack.c.l.b16 %v341
        %v1724 = vunpack.c.h.b16 %v341
        %v1725 = vunpack.c.l.b16 %v342
        %v1726 = vunpack.c.h.b16 %v342
        %v1727 = vunpack.c.l.b16 %v343
        %v1728 = vunpack.c.h.b16 %v343
        %v1729 = vunpack.c.l.b16 %v344
        %v1730 = vunpack.c.h.b16 %v344
        %v1731 = vunpack.c.l.b16 %v345
        %v1732 = vunpack.c.h.b16 %v345
        %v1733 = vunpack.c.l.b16 %v346
        %v1734 = vunpack.c.h.b16 %v346
        %v1735 = vunpack.c.l.b16 %v347
        %v1736 = vunpack.c.h.b16 %v347
        %v1737 = vunpack.c.l.b16 %v348
        %v1738 = vunpack.c.h.b16 %v348
        %v1739 = vunpack.c.l.b16 %v349
        %v1740 = vunpack.c.h.b16 %v349
        %v1741 = vunpack.c.l.b16 %v350
        %v1742 = vunpack.c.h.b16 %v350
        %v1743 = vunpack.c.l.b16 %v351
        %v1744 = vunpack.c.h.b16 %v351
        %v1745 = vunpack.c.l.b16 %v352
        %v1746 = vunpack.c.h.b16 %v352
        %v1747 = vunpack.c.l.b16 %v353
        %v1748 = vunpack.c.h.b16 %v353
        %v1749 = vunpack.c.l.b16 %v354
        %v1750 = vunpack.c.h.b16 %v354
        %v1751 = vunpack.c.l.b16 %v355
        %v1752 = vunpack.c.h.b16 %v355
        %v1753 = vunpack.c.l.b16 %v356
        %v1754 = vunpack.c.h.b16 %v356
        %v1755 = vunpack.c.l.b16 %v357
        %v1756 = vunpack.c.h.b16 %v357
        %v1757 = vunpack.c.l.b16 %v358
        %v1758 = vunpack.c.h.b16 %v358
        %v1759 = vunpack.c.l.b16 %v359
        %v1760 = vunpack.c.h.b16 %v359
        %v1761 = vunpack.c.l.b16 %v360
        %v1762 = vunpack.c.h.b16 %v360
        %v1763 = vunpack.c.l.b16 %v361
        %v1764 = vunpack.c.h.b16 %v361
        %v1765 = vunpack.c.l.b16 %v362
        %v1766 = vunpack.c.h.b16 %v362
        %v1767 = vunpack.c.l.b16 %v363
        %v1768 = vunpack.c.h.b16 %v363
        %v1769 = vunpack.c.l.b16 %v364
        %v1770 = vunpack.c.h.b16 %v364
        %v1771 = vunpack.c.l.b16 %v365
        %v1772 = vunpack.c.h.b16 %v365
        %v1773 = vunpack.c.l.b16 %v366
        %v1774 = vunpack.c.h.b16 %v366
        %v1775 = vunpack.c.l.b16 %v367
        %v1776 = vunpack.c.h.b16 %v367
        %v1777 = vunpack.c.l.b16 %v368
        %v1778 = vunpack.c.h.b16 %v368
        %v1779 = vunpack.c.l.b16 %v369
        %v1780 = vunpack.c.h.b16 %v369
        %v1781 = vunpack.c.l.b16 %v370
        %v1782 = vunpack.c.h.b16 %v370
        %v1783 = vunpack.c.l.b16 %v371
        %v1784 = vunpack.c.h.b16 %v371
        %v1785 = vunpack.c.l.b16 %v372
        %v1786 = vunpack.c.h.b16 %v372
        %v1787 = vunpack.c.l.b16 %v373
        %v1788 = vunpack.c.h.b16 %v373
        %v1789 = vunpack.c.l.b16 %v374
        %v1790 = vunpack.c.h.b16 %v374
        %v1791 = vunpack.c.l.b16 %v375
        %v1792 = vunpack.c.h.b16 %v375
        %v1793 = vunpack.c.l.b16 %v376
        %v1794 = vunpack.c.h.b16 %v376
        %v1795 = vunpack.c.l.b16 %v377
        %v1796 = vunpack.c.h.b16 %v377
        %v1797 = vunpack.c.l.b16 %v378
        %v1798 = vunpack.c.h.b16 %v378
        %v1799 = vunpack.c.l.b16 %v379
        %v1800 = vunpack.c.h.b16 %v379
        %v1801 = vunpack.c.l.b16 %v380
        %v1802 = vunpack.c.h.b16 %v380
        %v1803 = vunpack.c.l.b16 %v381
        %v1804 = vunpack.c.h.b16 %v381
        %v1805 = vunpack.c.l.b16 %v382
        %v1806 = vunpack.c.h.b16 %v382
        %v1807 = vunpack.c.l.b16 %v383
        %v1808 = vunpack.c.h.b16 %v383
        %v1809 = vunpack.c.l.b16 %v384
        %v1810 = vunpack.c.h.b16 %v384
        %v1811 = vunpack.c.l.b16 %v385
        %v1812 = vunpack.c.h.b16 %v385
        %v1813 = vunpack.c.l.b16 %v386
        %v1814 = vunpack.c.h.b16 %v386
        %v1815 = vunpack.c.l.b16 %v387
        %v1816 = vunpack.c.h.b16 %v387
        %v1817 = vunpack.c.l.b16 %v388
        %v1818 = vunpack.c.h.b16 %v388
        %v1819 = vunpack.c.l.b16 %v389
        %v1820 = vunpack.c.h.b16 %v389
        %v1821 = vunpack.c.l.b16 %v390
        %v1822 = vunpack.c.h.b16 %v390
        %v1823 = vunpack.c.l.b16 %v391
        %v1824 = vunpack.c.h.b16 %v391
        %v1825 = vunpack.c.l.b16 %v392
        %v1826 = vunpack.c.h.b16 %v392
        %v1827 = vunpack.c.l.b16 %v393
        %v1828 = vunpack.c.h.b16 %v393
        %v1829 = vunpack.c.l.b16 %v394
        %v1830 = vunpack.c.h.b16 %v394
        %v1831 = vunpack.c.l.b16 %v395
        %v1832 = vunpack.c.h.b16 %v395
        %v1833 = vunpack.c.l.b16 %v396
        %v1834 = vunpack.c.h.b16 %v396
        %v1835 = vunpack.c.l.b16 %v397
        %v1836 = vunpack.c.h.b16 %v397
        %v1837 = vunpack.c.l.b16 %v398
        %v1838 = vunpack.c.h.b16 %v398
        %v1839 = vunpack.c.l.b16 %v399
        %v1840 = vunpack.c.h.b16 %v399
        %v1841 = vunpack.c.l.b16 %v400
        %v1842 = vunpack.c.h.b16 %v400
        %v1843 = vunpack.c.l.b16 %v401
        %v1844 = vunpack.c.h.b16 %v401
        %v1845 = vunpack.c.l.b16 %v402
        %v1846 = vunpack.c.h.b16 %v402
        %v1847 = vunpack.c.l.b16 %v403
        %v1848 = vunpack.c.h.b16 %v403
        %v1849 = vunpack.c.l.b16 %v404
        %v1850 = vunpack.c.h.b16 %v404
        %v1851 = vunpack.c.l.b16 %v405
        %v1852 = vunpack.c.h.b16 %v405
        %v1853 = vunpack.c.l.b16 %v406
        %v1854 = vunpack.c.h.b16 %v406
        %v1855 = vunpack.c.l.b16 %v407
        %v1856 = vunpack.c.h.b16 %v407
        %v1857 = vunpack.c.l.b16 %v408
        %v1858 = vunpack.c.h.b16 %v408
        %v1859 = vunpack.c.l.b16 %v409
        %v1860 = vunpack.c.h.b16 %v409
        %v1861 = vunpack.c.l.b16 %v410
        %v1862 = vunpack.c.h.b16 %v410
        %v1863 = vunpack.c.l.b16 %v411
        %v1864 = vunpack.c.h.b16 %v411
        %v1865 = vunpack.c.l.b16 %v412
        %v1866 = vunpack.c.h.b16 %v412
        %v1867 = vunpack.c.l.b16 %v413
        %v1868 = vunpack.c.h.b16 %v413
        %v1869 = vunpack.c.l.b16 %v414
        %v1870 = vunpack.c.h.b16 %v414
        %v1871 = vunpack.c.l.b16 %v415
        %v1872 = vunpack.c.h.b16 %v415
        %v1873 = vunpack.c.l.b16 %v416
        %v1874 = vunpack.c.h.b16 %v416
        %v1875 = vunpack.c.l.b16 %v417
        %v1876 = vunpack.c.h.b16 %v417
        %v1877 = vunpack.c.l.b16 %v418
        %v1878 = vunpack.c.h.b16 %v418
        %v1879 = vunpack.c.l.b16 %v419
        %v1880 = vunpack.c.h.b16 %v419
        %v1881 = vunpack.c.l.b16 %v420
        %v1882 = vunpack.c.h.b16 %v420
        %v1883 = vunpack.c.l.b16 %v421
        %v1884 = vunpack.c.h.b16 %v421
        %v1885 = vunpack.c.l.b16 %v422
        %v1886 = vunpack.c.h.b16 %v422
        %v1887 = vunpack.c.l.b16 %v423
        %v1888 = vunpack.c.h.b16 %v423
        %v1889 = vunpack.c.l.b16 %v424
        %v1890 = vunpack.c.h.b16 %v424
        %v1891 = vunpack.c.l.b16 %v425
        %v1892 = vunpack.c.h.b16 %v425
        %v1893 = vunpack.c.l.b16 %v426
        %v1894 = vunpack.c.h.b16 %v426
        %v1895 = vunpack.c.l.b16 %v427
        %v1896 = vunpack.c.h.b16 %v427
        %v1897 = vunpack.c.l.b16 %v428
        %v1898 = vunpack.c.h.b16 %v428
        %v1899 = vunpack.c.l.b16 %v429
        %v1900 = vunpack.c.h.b16 %v429
        %v1901 = vunpack.c.l.b16 %v430
        %v1902 = vunpack.c.h.b16 %v430
        %v1903 = vunpack.c.l.b16 %v431
        %v1904 = vunpack.c.h.b16 %v431
        %v1905 = vunpack.c.l.b16 %v432
        %v1906 = vunpack.c.h.b16 %v432
        %v1907 = vunpack.c.l.b16 %v433
        %v1908 = vunpack.c.h.b16 %v433
        %v1909 = vunpack.c.l.b16 %v434
        %v1910 = vunpack.c.h.b16 %v434
        %v1911 = vunpack.c.l.b16 %v435
        %v1912 = vunpack.c.h.b16 %v435
        %v1913 = vunpack.c.l.b16 %v436
        %v1914 = vunpack.c.h.b16 %v436
        %v1915 = vunpack.c.l.b16 %v437
        %v1916 = vunpack.c.h.b16 %v437
        %v1917 = vpack.c.b16 %v1597, %v1589
        %v1918 = vpack.c.b16 %v1598, %v1590
        %v1919 = vpack.c.b16 %v1599, %v1591
        %v1920 = vpack.c.b16 %v1600, %v1592
        %v1921 = vpack.c.b16 %v1601, %v1593
        %v1922 = vpack.c.b16 %v1602, %v1594
        %v1923 = vpack.c.b16 %v1603, %v1595
        %v1924 = vpack.c.b16 %v1604, %v1596
        %v1925 = vpack.c.b16 %v1613, %v1605
        %v1926 = vpack.c.b16 %v1614, %v1606
        %v1927 = vpack.c.b16 %v1615, %v1607
        %v1928 = vpack.c.b16 %v1616, %v1608
        %v1929 = vpack.c.b16 %v1617, %v1609
        %v1930 = vpack.c.b16 %v1618, %v1610
        %v1931 = vpack.c.b16 %v1619, %v1611
        %v1932 = vpack.c.b16 %v1620, %v1612
        %v1933 = vpack.c.b16 %v1629, %v1621
        %v1934 = vpack.c.b16 %v1630, %v1622
        %v1935 = vpack.c.b16 %v1631, %v1623
        %v1936 = vpack.c.b16 %v1632, %v1624
        %v1937 = vpack.c.b16 %v1633, %v1625
        %v1938 = vpack.c.b16 %v1634, %v1626
        %v1939 = vpack.c.b16 %v1635, %v1627
        %v1940 = vpack.c.b16 %v1636, %v1628
        %v1941 = vpack.c.b16 %v1645, %v1637
        %v1942 = vpack.c.b16 %v1646, %v1638
        %v1943 = vpack.c.b16 %v1647, %v1639
        %v1944 = vpack.c.b16 %v1648, %v1640
        %v1945 = vpack.c.b16 %v1649, %v1641
        %v1946 = vpack.c.b16 %v1650, %v1642
        %v1947 = vpack.c.b16 %v1651, %v1643
        %v1948 = vpack.c.b16 %v1652, %v1644
        %v1949 = vpack.c.b16 %v1661, %v1653
        %v1950 = vpack.c.b16 %v1662, %v1654
        %v1951 = vpack.c.b16 %v1663, %v1655
        %v1952 = vpack.c.b16 %v1664, %v1656
        %v1953 = vpack.c.b16 %v1665, %v1657
        %v1954 = vpack.c.b16 %v1666, %v1658
        %v1955 = vpack.c.b16 %v1667, %v1659
        %v1956 = vpack.c.b16 %v1668, %v1660
        %v1957 = vpack.c.b16 %v1677, %v1669
        %v1958 = vpack.c.b16 %v1678, %v1670
        %v1959 = vpack.c.b16 %v1679, %v1671
        %v1960 = vpack.c.b16 %v1680, %v1672
        %v1961 = vpack.c.b16 %v1681, %v1673
        %v1962 = vpack.c.b16 %v1682, %v1674
        %v1963 = vpack.c.b16 %v1683, %v1675
        %v1964 = vpack.c.b16 %v1684, %v1676
        %v1965 = vpack.c.b16 %v1693, %v1685
        %v1966 = vpack.c.b16 %v1694, %v1686
        %v1967 = vpack.c.b16 %v1695, %v1687
        %v1968 = vpack.c.b16 %v1696, %v1688
        %v1969 = vpack.c.b16 %v1697, %v1689
        %v1970 = vpack.c.b16 %v1698, %v1690
        %v1971 = vpack.c.b16 %v1699, %v1691
        %v1972 = vpack.c.b16 %v1700, %v1692
        %v1973 = vpack.c.b16 %v1709, %v1701
        %v1974 = vpack.c.b16 %v1710, %v1702
        %v1975 = vpack.c.b16 %v1711, %v1703
        %v1976 = vpack.c.b16 %v1712, %v1704
        %v1977 = vpack.c.b16 %v1713, %v1705
        %v1978 = vpack.c.b16 %v1714, %v1706
        %v1979 = vpack.c.b16 %v1715, %v1707
        %v1980 = vpack.c.b16 %v1716, %v1708
        %v1981 = vpack.c.b16 %v1725, %v1717
        %v1982 = vpack.c.b16 %v1726, %v1718
        %v1983 = vpack.c.b16 %v1727, %v1719
        %v1984 = vpack.c.b16 %v1728, %v1720
        %v1985 = vpack.c.b16 %v1729, %v1721
        %v1986 = vpack.c.b16 %v1730, %v1722
        %v1987 = vpack.c.b16 %v1731, %v1723
        %v1988 = vpack.c.b16 %v1732, %v1724
        %v1989 = vpack.c.b16 %v1741, %v1733
        %v1990 = vpack.c.b16 %v1742, %v1734
        %v1991 = vpack.c.b16 %v1743, %v1735
        %v1992 = vpack.c.b16 %v1744, %v1736
        %v1993 = vpack.c.b16 %v1745, %v1737
        %v1994 = vpack.c.b16 %v1746, %v1738
        %v1995 = vpack.c.b16 %v1747, %v1739
        %v1996 = vpack.c.b16 %v1748, %v1740
        %v1997 = vpack.c.b16 %v1757, %v1749
        %v1998 = vpack.c.b16 %v1758, %v1750
        %v1999 = vpack.c.b16 %v1759, %v1751
        %v2000 = vpack.c.b16 %v1760, %v1752
        %v2001 = vpack.c.b16 %v1761, %v1753
        %v2002 = vpack.c.b16 %v1762, %v1754
        %v2003 = vpack.c.b16 %v1763, %v1755
        %v2004 = vpack.c.b16 %v1764, %v1756
        %v2005 = vpack.c.b16 %v1773, %v1765
        %v2006 = vpack.c.b16 %v1774, %v1766
        %v2007 = vpack.c.b16 %v1775, %v1767
        %v2008 = vpack.c.b16 %v1776, %v1768
        %v2009 = vpack.c.b16 %v1777, %v1769
        %v2010 = vpack.c.b16 %v1778, %v1770
        %v2011 = vpack.c.b16 %v1779, %v1771
        %v2012 = vpack.c.b16 %v1780, %v1772
        %v2013 = vpack.c.b16 %v1789, %v1781
        %v2014 = vpack.c.b16 %v1790, %v1782
        %v2015 = vpack.c.b16 %v1791, %v1783
        %v2016 = vpack.c.b16 %v1792, %v1784
        %v2017 = vpack.c.b16 %v1793, %v1785
        %v2018 = vpack.c.b16 %v1794, %v1786
        %v2019 = vpack.c.b16 %v1795, %v1787
        %v2020 = vpack.c.b16 %v1796, %v1788
        %v2021 = vpack.c.b16 %v1805, %v1797
        %v2022 = vpack.c.b16 %v1806, %v1798
        %v2023 = vpack.c.b16 %v1807, %v1799
        %v2024 = vpack.c.b16 %v1808, %v1800
        %v2025 = vpack.c.b16 %v1809, %v1801
        %v2026 = vpack.c.b16 %v1810, %v1802
        %v2027 = vpack.c.b16 %v1811, %v1803
        %v2028 = vpack.c.b16 %v1812, %v1804
        %v2029 = vpack.c.b16 %v1821, %v1813
        %v2030 = vpack.c.b16 %v1822, %v1814
        %v2031 = vpack.c.b16 %v1823, %v1815
        %v2032 = vpack.c.b16 %v1824, %v1816
        %v2033 = vpack.c.b16 %v1825, %v1817
        %v2034 = vpack.c.b16 %v1826, %v1818
        %v2035 = vpack.c.b16 %v1827, %v1819
        %v2036 = vpack.c.b16 %v1828, %v1820
        %v2037 = vpack.c.b16 %v1837, %v1829
        %v2038 = vpack.c.b16 %v1838, %v1830
        %v2039 = vpack.c.b16 %v1839, %v1831
        %v2040 = vpack.c.b16 %v1840, %v1832
        %v2041 = vpack.c.b16 %v1841, %v1833
        %v2042 = vpack.c.b16 %v1842, %v1834
        %v2043 = vpack.c.b16 %v1843, %v1835
        %v2044 = vpack.c.b16 %v1844, %v1836
        %v2045 = vpack.c.b16 %v1853, %v1845
        %v2046 = vpack.c.b16 %v1854, %v1846
        %v2047 = vpack.c.b16 %v1855, %v1847
        %v2048 = vpack.c.b16 %v1856, %v1848
        %v2049 = vpack.c.b16 %v1857, %v1849
        %v2050 = vpack.c.b16 %v1858, %v1850
        %v2051 = vpack.c.b16 %v1859, %v1851
        %v2052 = vpack.c.b16 %v1860, %v1852
        %v2053 = vpack.c.b16 %v1869, %v1861
        %v2054 = vpack.c.b16 %v1870, %v1862
        %v2055 = vpack.c.b16 %v1871, %v1863
        %v2056 = vpack.c.b16 %v1872, %v1864
        %v2057 = vpack.c.b16 %v1873, %v1865
        %v2058 = vpack.c.b16 %v1874, %v1866
        %v2059 = vpack.c.b16 %v1875, %v1867
        %v2060 = vpack.c.b16 %v1876, %v1868
        %v2061 = vpack.c.b16 %v1885, %v1877
        %v2062 = vpack.c.b16 %v1886, %v1878
        %v2063 = vpack.c.b16 %v1887, %v1879
        %v2064 = vpack.c.b16 %v1888, %v1880
        %v2065 = vpack.c.b16 %v1889, %v1881
        %v2066 = vpack.c.b16 %v1890, %v1882
        %v2067 = vpack.c.b16 %v1891, %v1883
        %v2068 = vpack.c.b16 %v1892, %v1884
        %v2069 = vpack.c.b16 %v1901, %v1893
        %v2070 = vpack.c.b16 %v1902, %v1894
        %v2071 = vpack.c.b16 %v1903, %v1895
        %v2072 = vpack.c.b16 %v1904, %v1896
        %v2073 = vpack.c.b16 %v1905, %v1897
        %v2074 = vpack.c.b16 %v1906, %v1898
        %v2075 = vpack.c.b16 %v1907, %v1899
        %v2076 = vpack.c.b16 %v1908, %v1900
        %v2077 = vpack.c.b16 %v1909, %v1909
        %v2078 = vpack.c.b16 %v1910, %v1910
        %v2079 = vpack.c.b16 %v1911, %v1911
        %v2080 = vpack.c.b16 %v1912, %v1912
        %v2081 = vpack.c.b16 %v1913, %v1913
        %v2082 = vpack.c.b16 %v1914, %v1914
        %v2083 = vpack.c.b16 %v1915, %v1915
        %v2084 = vpack.c.b16 %v1916, %v1916
        %vm2245 = vcmask 556032
        %v2247 = vsel %vm2245, %v1421, 0
        %v2250 = vsel %vm2245, %v1424, 0
        %v2253 = vsel %vm647, %v2077, 0
        %v2256 = vsel %vm647, %v2078, 0
        %v2259 = vsel %vm647, %v2079, 0
        %v2262 = vsel %vm647, %v2080, 0
        %v2265 = vsel %vm647, %v2081, 0
        %v2268 = vsel %vm647, %v2082, 0
        %v2271 = vsel %vm647, %v2083, 0
        %v2274 = vsel %vm647, %v2084, 0
        %2276 = vmatprep.subr.bf16.mxu0 %v1974
        %2277 = vmatpush1.bf16.msra.mxu0 %v1973
        %2278 = vmatprep.subr.bf16.mxu0 %v1966
        %2279 = vmatpush1.bf16.msra.mxu0 %v1965
        %2280 = vmatprep.subr.bf16.mxu0 %v1958
        %2281 = vmatpush1.bf16.msra.mxu0 %v1957
        %2282 = vmatprep.subr.bf16.mxu0 %v1950
        %2283 = vmatpush1.bf16.msra.mxu0 %v1949
        %2284 = vmatprep.subr.bf16.mxu0 %v1942
        %2285 = vmatpush1.bf16.msra.mxu0 %v1941
        %2286 = vmatprep.subr.bf16.mxu0 %v1934
        %2287 = vmatpush1.bf16.msra.mxu0 %v1933
        %2288 = vmatprep.subr.bf16.mxu0 %v1926
        %2289 = vmatpush1.bf16.msra.mxu0 %v1925
        %2290 = vmatprep.subr.bf16.mxu0 %v1918
        %2291 = vmatpush1.bf16.msra.mxu0 %v1917
        %2292 = vmatprep.subr.bf16.mxu0 %v2038
        %2293 = vmatpush2.bf16.msra.mxu0 %v2037
        %2294 = vmatprep.subr.bf16.mxu0 %v2030
        %2295 = vmatpush2.bf16.msra.mxu0 %v2029
        %2296 = vmatprep.subr.bf16.mxu0 %v2022
        %2297 = vmatpush2.bf16.msra.mxu0 %v2021
        %2298 = vmatprep.subr.bf16.mxu0 %v2014
        %2299 = vmatpush2.bf16.msra.mxu0 %v2013
        %2300 = vmatprep.subr.bf16.mxu0 %v2006
        %2301 = vmatpush2.bf16.msra.mxu0 %v2005
        %2302 = vmatprep.subr.bf16.mxu0 %v1998
        %2303 = vmatpush2.bf16.msra.mxu0 %v1997
        %2304 = vmatprep.subr.bf16.mxu0 %v1990
        %2305 = vmatpush2.bf16.msra.mxu0 %v1989
        %2306 = vmatprep.subr.bf16.mxu0 %v1982
        %2307 = vmatpush2.bf16.msra.mxu0 %v1981
        %2308 = vmatprep.mubr.bf16.mxu0 %v1420
        %2309 = vmatmul.mubr.bf16.gmra.mxu0 %v1419
        %v2310 = vpop.f32.mrf.mxu0
        %v2311 = vadd.f32 0.0, %v2310
        %v2312 = vpop.f32.mrf.mxu0
        %v2313 = vadd.f32 0.0, %v2312
        %v2314 = vpop.f32.mrf.mxu0
        %v2315 = vadd.f32 0.0, %v2314
        %v2316 = vpop.f32.mrf.mxu0
        %v2317 = vadd.f32 0.0, %v2316
        %2318 = vmatprep.mubr.bf16.mxu0 %v1423
        %2319 = vmatmul.mubr.bf16.gmra.mxu0 %v1422
        %v2320 = vpop.f32.mrf.mxu0
        %v2321 = vadd.f32 0.0, %v2320
        %v2322 = vpop.f32.mrf.mxu0
        %v2323 = vadd.f32 0.0, %v2322
        %v2324 = vpop.f32.mrf.mxu0
        %v2325 = vadd.f32 0.0, %v2324
        %v2326 = vpop.f32.mrf.mxu0
        %v2327 = vadd.f32 0.0, %v2326
        %2328 = vdwg.mxu0
        %2329 = vmatprep.subr.bf16.mxu0 0
        %2330 = vmatpush1.bf16.msra.mxu0 0
        %2331 = vmatprep.subr.bf16.mxu0 0
        %2332 = vmatpush1.bf16.msra.mxu0 0
        %2333 = vmatprep.subr.bf16.mxu0 0
        %2334 = vmatpush1.bf16.msra.mxu0 0
        %2335 = vmatprep.subr.bf16.mxu0 %v2256
        %2336 = vmatpush1.bf16.msra.mxu0 %v2253
        %2337 = vmatprep.subr.bf16.mxu0 %v2070
        %2338 = vmatpush1.bf16.msra.mxu0 %v2069
        %2339 = vmatprep.subr.bf16.mxu0 %v2062
        %2340 = vmatpush1.bf16.msra.mxu0 %v2061
        %2341 = vmatprep.subr.bf16.mxu0 %v2054
        %2342 = vmatpush1.bf16.msra.mxu0 %v2053
        %2343 = vmatprep.subr.bf16.mxu0 %v2046
        %2344 = vmatpush1.bf16.msra.mxu0 %v2045
        %2345 = vmatprep.subr.bf16.mxu0 0
        %2346 = vmatpush2.bf16.msra.mxu0 0
        %2347 = vmatprep.subr.bf16.mxu0 0
        %2348 = vmatpush2.bf16.msra.mxu0 0
        %2349 = vmatprep.subr.bf16.mxu0 0
        %2350 = vmatpush2.bf16.msra.mxu0 0
        %2351 = vmatprep.subr.bf16.mxu0 0
        %2352 = vmatpush2.bf16.msra.mxu0 0
        %2353 = vmatprep.subr.bf16.mxu0 0
        %2354 = vmatpush2.bf16.msra.mxu0 0
        %2355 = vmatprep.subr.bf16.mxu0 0
        %2356 = vmatpush2.bf16.msra.mxu0 0
        %2357 = vmatprep.subr.bf16.mxu0 0
        %2358 = vmatpush2.bf16.msra.mxu0 0
        %2359 = vmatprep.subr.bf16.mxu0 0
        %2360 = vmatpush2.bf16.msra.mxu0 0
        %2361 = vmatprep.mubr.bf16.mxu0 0
        %2362 = vmatmul.mubr.bf16.gmra.mxu0 %v2247
        %v2363 = vpop.f32.mrf.mxu0
        %v2364 = vadd.f32 %v2311, %v2363
        %v2365 = vpop.f32.mrf.mxu0
        %v2366 = vadd.f32 %v2313, %v2365
        %v2367 = vpop.f32.mrf.mxu0
        %v2368 = vadd.f32 %v2315, %v2367
        %v2369 = vpop.f32.mrf.mxu0
        %v2370 = vadd.f32 %v2317, %v2369
        %2371 = vmatprep.mubr.bf16.mxu0 0
        %2372 = vmatmul.mubr.bf16.gmra.mxu0 %v2250
        %v2373 = vpop.f32.mrf.mxu0
        %v2374 = vadd.f32 %v2321, %v2373
        %v2375 = vpop.f32.mrf.mxu0
        %v2376 = vadd.f32 %v2323, %v2375
        %v2377 = vpop.f32.mrf.mxu0
        %v2378 = vadd.f32 %v2325, %v2377
        %v2379 = vpop.f32.mrf.mxu0
        %v2380 = vadd.f32 %v2327, %v2379
        %2381 = vdwg.mxu0
        %2382 = vmatprep.subr.bf16.mxu0 %v1976
        %2383 = vmatpush1.bf16.msra.mxu0 %v1975
        %2384 = vmatprep.subr.bf16.mxu0 %v1968
        %2385 = vmatpush1.bf16.msra.mxu0 %v1967
        %2386 = vmatprep.subr.bf16.mxu0 %v1960
        %2387 = vmatpush1.bf16.msra.mxu0 %v1959
        %2388 = vmatprep.subr.bf16.mxu0 %v1952
        %2389 = vmatpush1.bf16.msra.mxu0 %v1951
        %2390 = vmatprep.subr.bf16.mxu0 %v1944
        %2391 = vmatpush1.bf16.msra.mxu0 %v1943
        %2392 = vmatprep.subr.bf16.mxu0 %v1936
        %2393 = vmatpush1.bf16.msra.mxu0 %v1935
        %2394 = vmatprep.subr.bf16.mxu0 %v1928
        %2395 = vmatpush1.bf16.msra.mxu0 %v1927
        %2396 = vmatprep.subr.bf16.mxu0 %v1920
        %2397 = vmatpush1.bf16.msra.mxu0 %v1919
        %2398 = vmatprep.subr.bf16.mxu0 %v2040
        %2399 = vmatpush2.bf16.msra.mxu0 %v2039
        %2400 = vmatprep.subr.bf16.mxu0 %v2032
        %2401 = vmatpush2.bf16.msra.mxu0 %v2031
        %2402 = vmatprep.subr.bf16.mxu0 %v2024
        %2403 = vmatpush2.bf16.msra.mxu0 %v2023
        %2404 = vmatprep.subr.bf16.mxu0 %v2016
        %2405 = vmatpush2.bf16.msra.mxu0 %v2015
        %2406 = vmatprep.subr.bf16.mxu0 %v2008
        %2407 = vmatpush2.bf16.msra.mxu0 %v2007
        %2408 = vmatprep.subr.bf16.mxu0 %v2000
        %2409 = vmatpush2.bf16.msra.mxu0 %v1999
        %2410 = vmatprep.subr.bf16.mxu0 %v1992
        %2411 = vmatpush2.bf16.msra.mxu0 %v1991
        %2412 = vmatprep.subr.bf16.mxu0 %v1984
        %2413 = vmatpush2.bf16.msra.mxu0 %v1983
        %2414 = vmatprep.mubr.bf16.mxu0 %v1420
        %2415 = vmatmul.mubr.bf16.gmra.mxu0 %v1419
        %v2416 = vpop.f32.mrf.mxu0
        %v2417 = vadd.f32 0.0, %v2416
        %v2418 = vpop.f32.mrf.mxu0
        %v2419 = vadd.f32 0.0, %v2418
        %v2420 = vpop.f32.mrf.mxu0
        %v2421 = vadd.f32 0.0, %v2420
        %v2422 = vpop.f32.mrf.mxu0
        %v2423 = vadd.f32 0.0, %v2422
        %2424 = vmatprep.mubr.bf16.mxu0 %v1423
        %2425 = vmatmul.mubr.bf16.gmra.mxu0 %v1422
        %v2426 = vpop.f32.mrf.mxu0
        %v2427 = vadd.f32 0.0, %v2426
        %v2428 = vpop.f32.mrf.mxu0
        %v2429 = vadd.f32 0.0, %v2428
        %v2430 = vpop.f32.mrf.mxu0
        %v2431 = vadd.f32 0.0, %v2430
        %v2432 = vpop.f32.mrf.mxu0
        %v2433 = vadd.f32 0.0, %v2432
        %2434 = vdwg.mxu0
        %2435 = vmatprep.subr.bf16.mxu0 0
        %2436 = vmatpush1.bf16.msra.mxu0 0
        %2437 = vmatprep.subr.bf16.mxu0 0
        %2438 = vmatpush1.bf16.msra.mxu0 0
        %2439 = vmatprep.subr.bf16.mxu0 0
        %2440 = vmatpush1.bf16.msra.mxu0 0
        %2441 = vmatprep.subr.bf16.mxu0 %v2262
        %2442 = vmatpush1.bf16.msra.mxu0 %v2259
        %2443 = vmatprep.subr.bf16.mxu0 %v2072
        %2444 = vmatpush1.bf16.msra.mxu0 %v2071
        %2445 = vmatprep.subr.bf16.mxu0 %v2064
        %2446 = vmatpush1.bf16.msra.mxu0 %v2063
        %2447 = vmatprep.subr.bf16.mxu0 %v2056
        %2448 = vmatpush1.bf16.msra.mxu0 %v2055
        %2449 = vmatprep.subr.bf16.mxu0 %v2048
        %2450 = vmatpush1.bf16.msra.mxu0 %v2047
        %2451 = vmatprep.subr.bf16.mxu0 0
        %2452 = vmatpush2.bf16.msra.mxu0 0
        %2453 = vmatprep.subr.bf16.mxu0 0
        %2454 = vmatpush2.bf16.msra.mxu0 0
        %2455 = vmatprep.subr.bf16.mxu0 0
        %2456 = vmatpush2.bf16.msra.mxu0 0
        %2457 = vmatprep.subr.bf16.mxu0 0
        %2458 = vmatpush2.bf16.msra.mxu0 0
        %2459 = vmatprep.subr.bf16.mxu0 0
        %2460 = vmatpush2.bf16.msra.mxu0 0
        %2461 = vmatprep.subr.bf16.mxu0 0
        %2462 = vmatpush2.bf16.msra.mxu0 0
        %2463 = vmatprep.subr.bf16.mxu0 0
        %2464 = vmatpush2.bf16.msra.mxu0 0
        %2465 = vmatprep.subr.bf16.mxu0 0
        %2466 = vmatpush2.bf16.msra.mxu0 0
        %2467 = vmatprep.mubr.bf16.mxu0 0
        %2468 = vmatmul.mubr.bf16.gmra.mxu0 %v2247
        %v2469 = vpop.f32.mrf.mxu0
        %v2470 = vadd.f32 %v2417, %v2469
        %v2471 = vpop.f32.mrf.mxu0
        %v2472 = vadd.f32 %v2419, %v2471
        %v2473 = vpop.f32.mrf.mxu0
        %v2474 = vadd.f32 %v2421, %v2473
        %v2475 = vpop.f32.mrf.mxu0
        %v2476 = vadd.f32 %v2423, %v2475
        %2477 = vmatprep.mubr.bf16.mxu0 0
        %2478 = vmatmul.mubr.bf16.gmra.mxu0 %v2250
        %v2479 = vpop.f32.mrf.mxu0
        %v2480 = vadd.f32 %v2427, %v2479
        %v2481 = vpop.f32.mrf.mxu0
        %v2482 = vadd.f32 %v2429, %v2481
        %v2483 = vpop.f32.mrf.mxu0
        %v2484 = vadd.f32 %v2431, %v2483
        %v2485 = vpop.f32.mrf.mxu0
        %v2486 = vadd.f32 %v2433, %v2485
        %2487 = vdwg.mxu0
        %2488 = vmatprep.subr.bf16.mxu0 %v1978
        %2489 = vmatpush1.bf16.msra.mxu0 %v1977
        %2490 = vmatprep.subr.bf16.mxu0 %v1970
        %2491 = vmatpush1.bf16.msra.mxu0 %v1969
        %2492 = vmatprep.subr.bf16.mxu0 %v1962
        %2493 = vmatpush1.bf16.msra.mxu0 %v1961
        %2494 = vmatprep.subr.bf16.mxu0 %v1954
        %2495 = vmatpush1.bf16.msra.mxu0 %v1953
        %2496 = vmatprep.subr.bf16.mxu0 %v1946
        %2497 = vmatpush1.bf16.msra.mxu0 %v1945
        %2498 = vmatprep.subr.bf16.mxu0 %v1938
        %2499 = vmatpush1.bf16.msra.mxu0 %v1937
        %2500 = vmatprep.subr.bf16.mxu0 %v1930
        %2501 = vmatpush1.bf16.msra.mxu0 %v1929
        %2502 = vmatprep.subr.bf16.mxu0 %v1922
        %2503 = vmatpush1.bf16.msra.mxu0 %v1921
        %2504 = vmatprep.subr.bf16.mxu0 %v2042
        %2505 = vmatpush2.bf16.msra.mxu0 %v2041
        %2506 = vmatprep.subr.bf16.mxu0 %v2034
        %2507 = vmatpush2.bf16.msra.mxu0 %v2033
        %2508 = vmatprep.subr.bf16.mxu0 %v2026
        %2509 = vmatpush2.bf16.msra.mxu0 %v2025
        %2510 = vmatprep.subr.bf16.mxu0 %v2018
        %2511 = vmatpush2.bf16.msra.mxu0 %v2017
        %2512 = vmatprep.subr.bf16.mxu0 %v2010
        %2513 = vmatpush2.bf16.msra.mxu0 %v2009
        %2514 = vmatprep.subr.bf16.mxu0 %v2002
        %2515 = vmatpush2.bf16.msra.mxu0 %v2001
        %2516 = vmatprep.subr.bf16.mxu0 %v1994
        %2517 = vmatpush2.bf16.msra.mxu0 %v1993
        %2518 = vmatprep.subr.bf16.mxu0 %v1986
        %2519 = vmatpush2.bf16.msra.mxu0 %v1985
        %2520 = vmatprep.mubr.bf16.mxu0 %v1420
        %2521 = vmatmul.mubr.bf16.gmra.mxu0 %v1419
        %v2522 = vpop.f32.mrf.mxu0
        %v2523 = vadd.f32 0.0, %v2522
        %v2524 = vpop.f32.mrf.mxu0
        %v2525 = vadd.f32 0.0, %v2524
        %v2526 = vpop.f32.mrf.mxu0
        %v2527 = vadd.f32 0.0, %v2526
        %v2528 = vpop.f32.mrf.mxu0
        %v2529 = vadd.f32 0.0, %v2528
        %2530 = vmatprep.mubr.bf16.mxu0 %v1423
        %2531 = vmatmul.mubr.bf16.gmra.mxu0 %v1422
        %v2532 = vpop.f32.mrf.mxu0
        %v2533 = vadd.f32 0.0, %v2532
        %v2534 = vpop.f32.mrf.mxu0
        %v2535 = vadd.f32 0.0, %v2534
        %v2536 = vpop.f32.mrf.mxu0
        %v2537 = vadd.f32 0.0, %v2536
        %v2538 = vpop.f32.mrf.mxu0
        %v2539 = vadd.f32 0.0, %v2538
        %2540 = vdwg.mxu0
        %2541 = vmatprep.subr.bf16.mxu0 0
        %2542 = vmatpush1.bf16.msra.mxu0 0
        %2543 = vmatprep.subr.bf16.mxu0 0
        %2544 = vmatpush1.bf16.msra.mxu0 0
        %2545 = vmatprep.subr.bf16.mxu0 0
        %2546 = vmatpush1.bf16.msra.mxu0 0
        %2547 = vmatprep.subr.bf16.mxu0 %v2268
        %2548 = vmatpush1.bf16.msra.mxu0 %v2265
        %2549 = vmatprep.subr.bf16.mxu0 %v2074
        %2550 = vmatpush1.bf16.msra.mxu0 %v2073
        %2551 = vmatprep.subr.bf16.mxu0 %v2066
        %2552 = vmatpush1.bf16.msra.mxu0 %v2065
        %2553 = vmatprep.subr.bf16.mxu0 %v2058
        %2554 = vmatpush1.bf16.msra.mxu0 %v2057
        %2555 = vmatprep.subr.bf16.mxu0 %v2050
        %2556 = vmatpush1.bf16.msra.mxu0 %v2049
        %2557 = vmatprep.subr.bf16.mxu0 0
        %2558 = vmatpush2.bf16.msra.mxu0 0
        %2559 = vmatprep.subr.bf16.mxu0 0
        %2560 = vmatpush2.bf16.msra.mxu0 0
        %2561 = vmatprep.subr.bf16.mxu0 0
        %2562 = vmatpush2.bf16.msra.mxu0 0
        %2563 = vmatprep.subr.bf16.mxu0 0
        %2564 = vmatpush2.bf16.msra.mxu0 0
        %2565 = vmatprep.subr.bf16.mxu0 0
        %2566 = vmatpush2.bf16.msra.mxu0 0
        %2567 = vmatprep.subr.bf16.mxu0 0
        %2568 = vmatpush2.bf16.msra.mxu0 0
        %2569 = vmatprep.subr.bf16.mxu0 0
        %2570 = vmatpush2.bf16.msra.mxu0 0
        %2571 = vmatprep.subr.bf16.mxu0 0
        %2572 = vmatpush2.bf16.msra.mxu0 0
        %2573 = vmatprep.mubr.bf16.mxu0 0
        %2574 = vmatmul.mubr.bf16.gmra.mxu0 %v2247
        %v2575 = vpop.f32.mrf.mxu0
        %v2576 = vadd.f32 %v2523, %v2575
        %v2577 = vpop.f32.mrf.mxu0
        %v2578 = vadd.f32 %v2525, %v2577
        %v2579 = vpop.f32.mrf.mxu0
        %v2580 = vadd.f32 %v2527, %v2579
        %v2581 = vpop.f32.mrf.mxu0
        %v2582 = vadd.f32 %v2529, %v2581
        %2583 = vmatprep.mubr.bf16.mxu0 0
        %2584 = vmatmul.mubr.bf16.gmra.mxu0 %v2250
        %v2585 = vpop.f32.mrf.mxu0
        %v2586 = vadd.f32 %v2533, %v2585
        %v2587 = vpop.f32.mrf.mxu0
        %v2588 = vadd.f32 %v2535, %v2587
        %v2589 = vpop.f32.mrf.mxu0
        %v2590 = vadd.f32 %v2537, %v2589
        %v2591 = vpop.f32.mrf.mxu0
        %v2592 = vadd.f32 %v2539, %v2591
        %2593 = vdwg.mxu0
        %2594 = vmatprep.subr.bf16.mxu0 %v1980
        %2595 = vmatpush1.bf16.msra.mxu0 %v1979
        %2596 = vmatprep.subr.bf16.mxu0 %v1972
        %2597 = vmatpush1.bf16.msra.mxu0 %v1971
        %2598 = vmatprep.subr.bf16.mxu0 %v1964
        %2599 = vmatpush1.bf16.msra.mxu0 %v1963
        %2600 = vmatprep.subr.bf16.mxu0 %v1956
        %2601 = vmatpush1.bf16.msra.mxu0 %v1955
        %2602 = vmatprep.subr.bf16.mxu0 %v1948
        %2603 = vmatpush1.bf16.msra.mxu0 %v1947
        %2604 = vmatprep.subr.bf16.mxu0 %v1940
        %2605 = vmatpush1.bf16.msra.mxu0 %v1939
        %2606 = vmatprep.subr.bf16.mxu0 %v1932
        %2607 = vmatpush1.bf16.msra.mxu0 %v1931
        %2608 = vmatprep.subr.bf16.mxu0 %v1924
        %2609 = vmatpush1.bf16.msra.mxu0 %v1923
        %2610 = vmatprep.subr.bf16.mxu0 %v2044
        %2611 = vmatpush2.bf16.msra.mxu0 %v2043
        %2612 = vmatprep.subr.bf16.mxu0 %v2036
        %2613 = vmatpush2.bf16.msra.mxu0 %v2035
        %2614 = vmatprep.subr.bf16.mxu0 %v2028
        %2615 = vmatpush2.bf16.msra.mxu0 %v2027
        %2616 = vmatprep.subr.bf16.mxu0 %v2020
        %2617 = vmatpush2.bf16.msra.mxu0 %v2019
        %2618 = vmatprep.subr.bf16.mxu0 %v2012
        %2619 = vmatpush2.bf16.msra.mxu0 %v2011
        %2620 = vmatprep.subr.bf16.mxu0 %v2004
        %2621 = vmatpush2.bf16.msra.mxu0 %v2003
        %2622 = vmatprep.subr.bf16.mxu0 %v1996
        %2623 = vmatpush2.bf16.msra.mxu0 %v1995
        %2624 = vmatprep.subr.bf16.mxu0 %v1988
        %2625 = vmatpush2.bf16.msra.mxu0 %v1987
        %2626 = vmatprep.mubr.bf16.mxu0 %v1420
        %2627 = vmatmul.mubr.bf16.gmra.mxu0 %v1419
        %v2628 = vpop.f32.mrf.mxu0
        %v2629 = vadd.f32 0.0, %v2628
        %v2630 = vpop.f32.mrf.mxu0
        %v2631 = vadd.f32 0.0, %v2630
        %v2632 = vpop.f32.mrf.mxu0
        %v2633 = vadd.f32 0.0, %v2632
        %v2634 = vpop.f32.mrf.mxu0
        %v2635 = vadd.f32 0.0, %v2634
        %2636 = vmatprep.mubr.bf16.mxu0 %v1423
        %2637 = vmatmul.mubr.bf16.gmra.mxu0 %v1422
        %v2638 = vpop.f32.mrf.mxu0
        %v2639 = vadd.f32 0.0, %v2638
        %v2640 = vpop.f32.mrf.mxu0
        %v2641 = vadd.f32 0.0, %v2640
        %v2642 = vpop.f32.mrf.mxu0
        %v2643 = vadd.f32 0.0, %v2642
        %v2644 = vpop.f32.mrf.mxu0
        %v2645 = vadd.f32 0.0, %v2644
        %2646 = vdwg.mxu0
        %2647 = vmatprep.subr.bf16.mxu0 0
        %2648 = vmatpush1.bf16.msra.mxu0 0
        %2649 = vmatprep.subr.bf16.mxu0 0
        %2650 = vmatpush1.bf16.msra.mxu0 0
        %2651 = vmatprep.subr.bf16.mxu0 0
        %2652 = vmatpush1.bf16.msra.mxu0 0
        %2653 = vmatprep.subr.bf16.mxu0 %v2274
        %2654 = vmatpush1.bf16.msra.mxu0 %v2271
        %2655 = vmatprep.subr.bf16.mxu0 %v2076
        %2656 = vmatpush1.bf16.msra.mxu0 %v2075
        %2657 = vmatprep.subr.bf16.mxu0 %v2068
        %2658 = vmatpush1.bf16.msra.mxu0 %v2067
        %2659 = vmatprep.subr.bf16.mxu0 %v2060
        %2660 = vmatpush1.bf16.msra.mxu0 %v2059
        %2661 = vmatprep.subr.bf16.mxu0 %v2052
        %2662 = vmatpush1.bf16.msra.mxu0 %v2051
        %2663 = vmatprep.subr.bf16.mxu0 0
        %2664 = vmatpush2.bf16.msra.mxu0 0
        %2665 = vmatprep.subr.bf16.mxu0 0
        %2666 = vmatpush2.bf16.msra.mxu0 0
        %2667 = vmatprep.subr.bf16.mxu0 0
        %2668 = vmatpush2.bf16.msra.mxu0 0
        %2669 = vmatprep.subr.bf16.mxu0 0
        %2670 = vmatpush2.bf16.msra.mxu0 0
        %2671 = vmatprep.subr.bf16.mxu0 0
        %2672 = vmatpush2.bf16.msra.mxu0 0
        %2673 = vmatprep.subr.bf16.mxu0 0
        %2674 = vmatpush2.bf16.msra.mxu0 0
        %2675 = vmatprep.subr.bf16.mxu0 0
        %2676 = vmatpush2.bf16.msra.mxu0 0
        %2677 = vmatprep.subr.bf16.mxu0 0
        %2678 = vmatpush2.bf16.msra.mxu0 0
        %2679 = vmatprep.mubr.bf16.mxu0 0
        %2680 = vmatmul.mubr.bf16.gmra.mxu0 %v2247
        %v2681 = vpop.f32.mrf.mxu0
        %v2682 = vadd.f32 %v2629, %v2681
        %v2683 = vpop.f32.mrf.mxu0
        %v2684 = vadd.f32 %v2631, %v2683
        %v2685 = vpop.f32.mrf.mxu0
        %v2686 = vadd.f32 %v2633, %v2685
        %v2687 = vpop.f32.mrf.mxu0
        %v2688 = vadd.f32 %v2635, %v2687
        %2689 = vmatprep.mubr.bf16.mxu0 0
        %2690 = vmatmul.mubr.bf16.gmra.mxu0 %v2250
        %v2691 = vpop.f32.mrf.mxu0
        %v2692 = vadd.f32 %v2639, %v2691
        %v2693 = vpop.f32.mrf.mxu0
        %v2694 = vadd.f32 %v2641, %v2693
        %v2695 = vpop.f32.mrf.mxu0
        %v2696 = vadd.f32 %v2643, %v2695
        %v2697 = vpop.f32.mrf.mxu0
        %v2698 = vadd.f32 %v2645, %v2697
        %2699 = vdwg.mxu0
        %v2700 = vmul.f32 %v2364, %v224
        %v2701 = vmul.f32 %v2366, %v225
        %v2702 = vmul.f32 %v2470, %v226
        %v2703 = vmul.f32 %v2472, %v227
        %v2704 = vmul.f32 %v2576, %v228
        %v2705 = vmul.f32 %v2578, %v229
        %v2706 = vmul.f32 %v2682, %v230
        %v2707 = vmul.f32 %v2684, %v231
        %v2708 = vmul.f32 %v2368, %v232
        %v2709 = vmul.f32 %v2370, %v233
        %v2710 = vmul.f32 %v2474, %v234
        %v2711 = vmul.f32 %v2476, %v235
        %v2712 = vmul.f32 %v2580, %v236
        %v2713 = vmul.f32 %v2582, %v237
        %v2714 = vmul.f32 %v2686, %v238
        %v2715 = vmul.f32 %v2688, %v239
        %v2716 = vmul.f32 %v2374, %v240
        %v2717 = vmul.f32 %v2376, %v241
        %v2718 = vmul.f32 %v2480, %v242
        %v2719 = vmul.f32 %v2482, %v243
        %v2720 = vmul.f32 %v2586, %v244
        %v2721 = vmul.f32 %v2588, %v245
        %v2722 = vmul.f32 %v2692, %v246
        %v2723 = vmul.f32 %v2694, %v247
        %v2724 = vmul.f32 %v2378, %v248
        %v2725 = vmul.f32 %v2380, %v249
        %v2726 = vmul.f32 %v2484, %v250
        %v2727 = vmul.f32 %v2486, %v251
        %v2728 = vmul.f32 %v2590, %v252
        %v2729 = vmul.f32 %v2592, %v253
        %v2730 = vmul.f32 %v2696, %v254
        %v2731 = vmul.f32 %v2698, %v255
        %v2732 = vadd.f32 %v2700, %v2708
        %v2733 = vadd.f32 %v2732, %v2716
        %v2734 = vadd.f32 %v2733, %v2724
        %v2735 = vrot.slane %v2734, 4
        %v2736 = vadd.f32 %v2734, %v2735
        %v2737 = vrot.slane %v2736, 2
        %v2738 = vadd.f32 %v2736, %v2737
        %v2739 = vrot.slane %v2738, 1
        %v2740 = vadd.f32 %v2738, %v2739
        %v2741 = vadd.f32 %v2701, %v2709
        %v2742 = vadd.f32 %v2741, %v2717
        %v2743 = vadd.f32 %v2742, %v2725
        %v2744 = vrot.slane %v2743, 4
        %v2745 = vadd.f32 %v2743, %v2744
        %v2746 = vrot.slane %v2745, 2
        %v2747 = vadd.f32 %v2745, %v2746
        %v2748 = vrot.slane %v2747, 1
        %v2749 = vadd.f32 %v2747, %v2748
        %v2750 = vadd.f32 %v2702, %v2710
        %v2751 = vadd.f32 %v2750, %v2718
        %v2752 = vadd.f32 %v2751, %v2726
        %v2753 = vrot.slane %v2752, 4
        %v2754 = vadd.f32 %v2752, %v2753
        %v2755 = vrot.slane %v2754, 2
        %v2756 = vadd.f32 %v2754, %v2755
        %v2757 = vrot.slane %v2756, 1
        %v2758 = vadd.f32 %v2756, %v2757
        %v2759 = vadd.f32 %v2703, %v2711
        %v2760 = vadd.f32 %v2759, %v2719
        %v2761 = vadd.f32 %v2760, %v2727
        %v2762 = vrot.slane %v2761, 4
        %v2763 = vadd.f32 %v2761, %v2762
        %v2764 = vrot.slane %v2763, 2
        %v2765 = vadd.f32 %v2763, %v2764
        %v2766 = vrot.slane %v2765, 1
        %v2767 = vadd.f32 %v2765, %v2766
        %v2768 = vadd.f32 %v2704, %v2712
        %v2769 = vadd.f32 %v2768, %v2720
        %v2770 = vadd.f32 %v2769, %v2728
        %v2771 = vrot.slane %v2770, 4
        %v2772 = vadd.f32 %v2770, %v2771
        %v2773 = vrot.slane %v2772, 2
        %v2774 = vadd.f32 %v2772, %v2773
        %v2775 = vrot.slane %v2774, 1
        %v2776 = vadd.f32 %v2774, %v2775
        %v2777 = vadd.f32 %v2705, %v2713
        %v2778 = vadd.f32 %v2777, %v2721
        %v2779 = vadd.f32 %v2778, %v2729
        %v2780 = vrot.slane %v2779, 4
        %v2781 = vadd.f32 %v2779, %v2780
        %v2782 = vrot.slane %v2781, 2
        %v2783 = vadd.f32 %v2781, %v2782
        %v2784 = vrot.slane %v2783, 1
        %v2785 = vadd.f32 %v2783, %v2784
        %v2786 = vadd.f32 %v2706, %v2714
        %v2787 = vadd.f32 %v2786, %v2722
        %v2788 = vadd.f32 %v2787, %v2730
        %v2789 = vrot.slane %v2788, 4
        %v2790 = vadd.f32 %v2788, %v2789
        %v2791 = vrot.slane %v2790, 2
        %v2792 = vadd.f32 %v2790, %v2791
        %v2793 = vrot.slane %v2792, 1
        %v2794 = vadd.f32 %v2792, %v2793
        %v2795 = vadd.f32 %v2707, %v2715
        %v2796 = vadd.f32 %v2795, %v2723
        %v2797 = vadd.f32 %v2796, %v2731
        %v2798 = vrot.slane %v2797, 4
        %v2799 = vadd.f32 %v2797, %v2798
        %v2800 = vrot.slane %v2799, 2
        %v2801 = vadd.f32 %v2799, %v2800
        %v2802 = vrot.slane %v2801, 1
        %v2803 = vadd.f32 %v2801, %v2802
        %2804 = vmatprep.subr.mxu0 0.0
        %2805 = vmatpush1.msra.mxu0 %v453
        %2806 = vmatprep.subr.mxu0 0.0
        %2807 = vmatpush1.msra.mxu0 %v452
        %2808 = vmatprep.subr.mxu0 0.0
        %2809 = vmatpush1.msra.mxu0 %v451
        %2810 = vmatprep.subr.mxu0 0.0
        %2811 = vmatpush1.msra.mxu0 %v450
        %2812 = vmatprep.subr.mxu0 0.0
        %2813 = vmatpush1.msra.mxu0 %v449
        %2814 = vmatprep.subr.mxu0 0.0
        %2815 = vmatpush1.msra.mxu0 %v448
        %2816 = vmatprep.subr.mxu0 0.0
        %2817 = vmatpush1.msra.mxu0 %v447
        %2818 = vmatprep.subr.mxu0 0.0
        %2819 = vmatpush1.msra.mxu0 %v446
        %2820 = vmatprep.subr.mxu0 0.0
        %2821 = vmatpush1.msra.mxu0 %v445
        %2822 = vmatprep.subr.mxu0 0.0
        %2823 = vmatpush1.msra.mxu0 %v444
        %2824 = vmatprep.subr.mxu0 0.0
        %2825 = vmatpush1.msra.mxu0 %v443
        %2826 = vmatprep.subr.mxu0 0.0
        %2827 = vmatpush1.msra.mxu0 %v442
        %2828 = vmatprep.subr.mxu0 0.0
        %2829 = vmatpush1.msra.mxu0 %v441
        %2830 = vmatprep.subr.mxu0 0.0
        %2831 = vmatpush1.msra.mxu0 %v440
        %2832 = vmatprep.subr.mxu0 0.0
        %2833 = vmatpush1.msra.mxu0 %v439
        %2834 = vmatprep.subr.mxu0 0.0
        %2835 = vmatpush1.msra.mxu0 %v438
        %2836 = vmatprep.subr.mxu0 0.0
        %2837 = vmatpush2.msra.mxu0 %v469
        %2838 = vmatprep.subr.mxu0 0.0
        %2839 = vmatpush2.msra.mxu0 %v468
        %2840 = vmatprep.subr.mxu0 0.0
        %2841 = vmatpush2.msra.mxu0 %v467
        %2842 = vmatprep.subr.mxu0 0.0
        %2843 = vmatpush2.msra.mxu0 %v466
        %2844 = vmatprep.subr.mxu0 0.0
        %2845 = vmatpush2.msra.mxu0 %v465
        %2846 = vmatprep.subr.mxu0 0.0
        %2847 = vmatpush2.msra.mxu0 %v464
        %2848 = vmatprep.subr.mxu0 0.0
        %2849 = vmatpush2.msra.mxu0 %v463
        %2850 = vmatprep.subr.mxu0 0.0
        %2851 = vmatpush2.msra.mxu0 %v462
        %2852 = vmatprep.subr.mxu0 0.0
        %2853 = vmatpush2.msra.mxu0 %v461
        %2854 = vmatprep.subr.mxu0 0.0
        %2855 = vmatpush2.msra.mxu0 %v460
        %2856 = vmatprep.subr.mxu0 0.0
        %2857 = vmatpush2.msra.mxu0 %v459
        %2858 = vmatprep.subr.mxu0 0.0
        %2859 = vmatpush2.msra.mxu0 %v458
        %2860 = vmatprep.subr.mxu0 0.0
        %2861 = vmatpush2.msra.mxu0 %v457
        %2862 = vmatprep.subr.mxu0 0.0
        %2863 = vmatpush2.msra.mxu0 %v456
        %2864 = vmatprep.subr.mxu0 0.0
        %2865 = vmatpush2.msra.mxu0 %v455
        %2866 = vmatprep.subr.mxu0 0.0
        %2867 = vmatpush2.msra.mxu0 %v454
        %2868 = vmatprep.mubr.f32.mxu0 %v2749
        %2869 = vmatmul.mubr.f32.gmra.mxu0 %v2740
        %v2870 = vpop.f32.mrf.mxu0
        %v2871 = vadd.f32 %v258, %v2870
        %v2872 = vpop.f32.mrf.mxu0
        %2873 = vdwg.mxu0
        %2874 = vmatprep.subr.mxu0 0.0
        %2875 = vmatpush1.msra.mxu0 %v485
        %2876 = vmatprep.subr.mxu0 0.0
        %2877 = vmatpush1.msra.mxu0 %v484
        %2878 = vmatprep.subr.mxu0 0.0
        %2879 = vmatpush1.msra.mxu0 %v483
        %2880 = vmatprep.subr.mxu0 0.0
        %2881 = vmatpush1.msra.mxu0 %v482
        %2882 = vmatprep.subr.mxu0 0.0
        %2883 = vmatpush1.msra.mxu0 %v481
        %2884 = vmatprep.subr.mxu0 0.0
        %2885 = vmatpush1.msra.mxu0 %v480
        %2886 = vmatprep.subr.mxu0 0.0
        %2887 = vmatpush1.msra.mxu0 %v479
        %2888 = vmatprep.subr.mxu0 0.0
        %2889 = vmatpush1.msra.mxu0 %v478
        %2890 = vmatprep.subr.mxu0 0.0
        %2891 = vmatpush1.msra.mxu0 %v477
        %2892 = vmatprep.subr.mxu0 0.0
        %2893 = vmatpush1.msra.mxu0 %v476
        %2894 = vmatprep.subr.mxu0 0.0
        %2895 = vmatpush1.msra.mxu0 %v475
        %2896 = vmatprep.subr.mxu0 0.0
        %2897 = vmatpush1.msra.mxu0 %v474
        %2898 = vmatprep.subr.mxu0 0.0
        %2899 = vmatpush1.msra.mxu0 %v473
        %2900 = vmatprep.subr.mxu0 0.0
        %2901 = vmatpush1.msra.mxu0 %v472
        %2902 = vmatprep.subr.mxu0 0.0
        %2903 = vmatpush1.msra.mxu0 %v471
        %2904 = vmatprep.subr.mxu0 0.0
        %2905 = vmatpush1.msra.mxu0 %v470
        %2906 = vmatprep.subr.mxu0 0.0
        %2907 = vmatpush2.msra.mxu0 %v501
        %2908 = vmatprep.subr.mxu0 0.0
        %2909 = vmatpush2.msra.mxu0 %v500
        %2910 = vmatprep.subr.mxu0 0.0
        %2911 = vmatpush2.msra.mxu0 %v499
        %2912 = vmatprep.subr.mxu0 0.0
        %2913 = vmatpush2.msra.mxu0 %v498
        %2914 = vmatprep.subr.mxu0 0.0
        %2915 = vmatpush2.msra.mxu0 %v497
        %2916 = vmatprep.subr.mxu0 0.0
        %2917 = vmatpush2.msra.mxu0 %v496
        %2918 = vmatprep.subr.mxu0 0.0
        %2919 = vmatpush2.msra.mxu0 %v495
        %2920 = vmatprep.subr.mxu0 0.0
        %2921 = vmatpush2.msra.mxu0 %v494
        %2922 = vmatprep.subr.mxu0 0.0
        %2923 = vmatpush2.msra.mxu0 %v493
        %2924 = vmatprep.subr.mxu0 0.0
        %2925 = vmatpush2.msra.mxu0 %v492
        %2926 = vmatprep.subr.mxu0 0.0
        %2927 = vmatpush2.msra.mxu0 %v491
        %2928 = vmatprep.subr.mxu0 0.0
        %2929 = vmatpush2.msra.mxu0 %v490
        %2930 = vmatprep.subr.mxu0 0.0
        %2931 = vmatpush2.msra.mxu0 %v489
        %2932 = vmatprep.subr.mxu0 0.0
        %2933 = vmatpush2.msra.mxu0 %v488
        %2934 = vmatprep.subr.mxu0 0.0
        %2935 = vmatpush2.msra.mxu0 %v487
        %2936 = vmatprep.subr.mxu0 0.0
        %2937 = vmatpush2.msra.mxu0 %v486
        %2938 = vmatprep.mubr.f32.mxu0 %v2767
        %2939 = vmatmul.mubr.f32.gmra.mxu0 %v2758
        %v2940 = vpop.f32.mrf.mxu0
        %v2941 = vadd.f32 %v2871, %v2940
        %v2942 = vpop.f32.mrf.mxu0
        %2943 = vdwg.mxu0
        %2944 = vmatprep.subr.mxu0 0.0
        %2945 = vmatpush1.msra.mxu0 %v517
        %2946 = vmatprep.subr.mxu0 0.0
        %2947 = vmatpush1.msra.mxu0 %v516
        %2948 = vmatprep.subr.mxu0 0.0
        %2949 = vmatpush1.msra.mxu0 %v515
        %2950 = vmatprep.subr.mxu0 0.0
        %2951 = vmatpush1.msra.mxu0 %v514
        %2952 = vmatprep.subr.mxu0 0.0
        %2953 = vmatpush1.msra.mxu0 %v513
        %2954 = vmatprep.subr.mxu0 0.0
        %2955 = vmatpush1.msra.mxu0 %v512
        %2956 = vmatprep.subr.mxu0 0.0
        %2957 = vmatpush1.msra.mxu0 %v511
        %2958 = vmatprep.subr.mxu0 0.0
        %2959 = vmatpush1.msra.mxu0 %v510
        %2960 = vmatprep.subr.mxu0 0.0
        %2961 = vmatpush1.msra.mxu0 %v509
        %2962 = vmatprep.subr.mxu0 0.0
        %2963 = vmatpush1.msra.mxu0 %v508
        %2964 = vmatprep.subr.mxu0 0.0
        %2965 = vmatpush1.msra.mxu0 %v507
        %2966 = vmatprep.subr.mxu0 0.0
        %2967 = vmatpush1.msra.mxu0 %v506
        %2968 = vmatprep.subr.mxu0 0.0
        %2969 = vmatpush1.msra.mxu0 %v505
        %2970 = vmatprep.subr.mxu0 0.0
        %2971 = vmatpush1.msra.mxu0 %v504
        %2972 = vmatprep.subr.mxu0 0.0
        %2973 = vmatpush1.msra.mxu0 %v503
        %2974 = vmatprep.subr.mxu0 0.0
        %2975 = vmatpush1.msra.mxu0 %v502
        %2976 = vmatprep.subr.mxu0 0.0
        %2977 = vmatpush2.msra.mxu0 %v533
        %2978 = vmatprep.subr.mxu0 0.0
        %2979 = vmatpush2.msra.mxu0 %v532
        %2980 = vmatprep.subr.mxu0 0.0
        %2981 = vmatpush2.msra.mxu0 %v531
        %2982 = vmatprep.subr.mxu0 0.0
        %2983 = vmatpush2.msra.mxu0 %v530
        %2984 = vmatprep.subr.mxu0 0.0
        %2985 = vmatpush2.msra.mxu0 %v529
        %2986 = vmatprep.subr.mxu0 0.0
        %2987 = vmatpush2.msra.mxu0 %v528
        %2988 = vmatprep.subr.mxu0 0.0
        %2989 = vmatpush2.msra.mxu0 %v527
        %2990 = vmatprep.subr.mxu0 0.0
        %2991 = vmatpush2.msra.mxu0 %v526
        %2992 = vmatprep.subr.mxu0 0.0
        %2993 = vmatpush2.msra.mxu0 %v525
        %2994 = vmatprep.subr.mxu0 0.0
        %2995 = vmatpush2.msra.mxu0 %v524
        %2996 = vmatprep.subr.mxu0 0.0
        %2997 = vmatpush2.msra.mxu0 %v523
        %2998 = vmatprep.subr.mxu0 0.0
        %2999 = vmatpush2.msra.mxu0 %v522
        %3000 = vmatprep.subr.mxu0 0.0
        %3001 = vmatpush2.msra.mxu0 %v521
        %3002 = vmatprep.subr.mxu0 0.0
        %3003 = vmatpush2.msra.mxu0 %v520
        %3004 = vmatprep.subr.mxu0 0.0
        %3005 = vmatpush2.msra.mxu0 %v519
        %3006 = vmatprep.subr.mxu0 0.0
        %3007 = vmatpush2.msra.mxu0 %v518
        %3008 = vmatprep.mubr.f32.mxu0 %v2785
        %3009 = vmatmul.mubr.f32.gmra.mxu0 %v2776
        %v3010 = vpop.f32.mrf.mxu0
        %v3011 = vadd.f32 %v2941, %v3010
        %v3012 = vpop.f32.mrf.mxu0
        %3013 = vdwg.mxu0
        %3014 = vmatprep.subr.mxu0 0.0
        %3015 = vmatpush1.msra.mxu0 %v549
        %3016 = vmatprep.subr.mxu0 0.0
        %3017 = vmatpush1.msra.mxu0 %v548
        %3018 = vmatprep.subr.mxu0 0.0
        %3019 = vmatpush1.msra.mxu0 %v547
        %3020 = vmatprep.subr.mxu0 0.0
        %3021 = vmatpush1.msra.mxu0 %v546
        %3022 = vmatprep.subr.mxu0 0.0
        %3023 = vmatpush1.msra.mxu0 %v545
        %3024 = vmatprep.subr.mxu0 0.0
        %3025 = vmatpush1.msra.mxu0 %v544
        %3026 = vmatprep.subr.mxu0 0.0
        %3027 = vmatpush1.msra.mxu0 %v543
        %3028 = vmatprep.subr.mxu0 0.0
        %3029 = vmatpush1.msra.mxu0 %v542
        %3030 = vmatprep.subr.mxu0 0.0
        %3031 = vmatpush1.msra.mxu0 %v541
        %3032 = vmatprep.subr.mxu0 0.0
        %3033 = vmatpush1.msra.mxu0 %v540
        %3034 = vmatprep.subr.mxu0 0.0
        %3035 = vmatpush1.msra.mxu0 %v539
        %3036 = vmatprep.subr.mxu0 0.0
        %3037 = vmatpush1.msra.mxu0 %v538
        %3038 = vmatprep.subr.mxu0 0.0
        %3039 = vmatpush1.msra.mxu0 %v537
        %3040 = vmatprep.subr.mxu0 0.0
        %3041 = vmatpush1.msra.mxu0 %v536
        %3042 = vmatprep.subr.mxu0 0.0
        %3043 = vmatpush1.msra.mxu0 %v535
        %3044 = vmatprep.subr.mxu0 0.0
        %3045 = vmatpush1.msra.mxu0 %v534
        %3046 = vmatprep.subr.mxu0 0.0
        %3047 = vmatpush2.msra.mxu0 %v565
        %3048 = vmatprep.subr.mxu0 0.0
        %3049 = vmatpush2.msra.mxu0 %v564
        %3050 = vmatprep.subr.mxu0 0.0
        %3051 = vmatpush2.msra.mxu0 %v563
        %3052 = vmatprep.subr.mxu0 0.0
        %3053 = vmatpush2.msra.mxu0 %v562
        %3054 = vmatprep.subr.mxu0 0.0
        %3055 = vmatpush2.msra.mxu0 %v561
        %3056 = vmatprep.subr.mxu0 0.0
        %3057 = vmatpush2.msra.mxu0 %v560
        %3058 = vmatprep.subr.mxu0 0.0
        %3059 = vmatpush2.msra.mxu0 %v559
        %3060 = vmatprep.subr.mxu0 0.0
        %3061 = vmatpush2.msra.mxu0 %v558
        %3062 = vmatprep.subr.mxu0 0.0
        %3063 = vmatpush2.msra.mxu0 %v557
        %3064 = vmatprep.subr.mxu0 0.0
        %3065 = vmatpush2.msra.mxu0 %v556
        %3066 = vmatprep.subr.mxu0 0.0
        %3067 = vmatpush2.msra.mxu0 %v555
        %3068 = vmatprep.subr.mxu0 0.0
        %3069 = vmatpush2.msra.mxu0 %v554
        %3070 = vmatprep.subr.mxu0 0.0
        %3071 = vmatpush2.msra.mxu0 %v553
        %3072 = vmatprep.subr.mxu0 0.0
        %3073 = vmatpush2.msra.mxu0 %v552
        %3074 = vmatprep.subr.mxu0 0.0
        %3075 = vmatpush2.msra.mxu0 %v551
        %3076 = vmatprep.subr.mxu0 0.0
        %3077 = vmatpush2.msra.mxu0 %v550
        %3078 = vmatprep.mubr.f32.mxu0 %v2803
        %3079 = vmatmul.mubr.f32.gmra.mxu0 %v2794
        %v3080 = vpop.f32.mrf.mxu0
        %v3081 = vadd.f32 %v3011, %v3080
        %v3082 = vpop.f32.mrf.mxu0
        %3083 = vdwg.mxu0
        %v3084 = vmax.f32 %v3081, 0.0
        %v3085 = vpack.c.bf16 %v3084, %v3084
        %v3090 = vunpack.c.l.b16 %v266
        %v3091 = vunpack.c.l.b16 %v267
        %v3092 = vunpack.c.l.b16 %v268
        %v3093 = vunpack.c.l.b16 %v269
        %v3094 = vpack.c.b16 %v3091, %v3090
        %v3095 = vpack.c.b16 %v3093, %v3092
        %3099 = vrot.lane.b32.xlu0 %v258, 96
        %v3100 = vpop.permute.xlu0 %3099
        %vm3102 = vcmask 261120
        %v3104 = vsel %vm3102, %v3085, 0
        %3106 = vmatprep.subr.bf16.mxu0 0
        %3107 = vmatpush1.bf16.msra.mxu0 0
        %3108 = vmatprep.subr.bf16.mxu0 0
        %3109 = vmatpush1.bf16.msra.mxu0 0
        %3110 = vmatprep.subr.bf16.mxu0 0
        %3111 = vmatpush1.bf16.msra.mxu0 0
        %3112 = vmatprep.subr.bf16.mxu0 0
        %3113 = vmatpush1.bf16.msra.mxu0 0
        %3114 = vmatprep.subr.bf16.mxu0 0
        %3115 = vmatpush1.bf16.msra.mxu0 0
        %3116 = vmatprep.subr.bf16.mxu0 0
        %3117 = vmatpush1.bf16.msra.mxu0 0
        %3118 = vmatprep.subr.bf16.mxu0 0
        %3119 = vmatpush1.bf16.msra.mxu0 %v3095
        %3120 = vmatprep.subr.bf16.mxu0 0
        %3121 = vmatpush1.bf16.msra.mxu0 %v3094
        %3122 = vmatprep.subr.bf16.mxu0 0
        %3123 = vmatpush2.bf16.msra.mxu0 0
        %3124 = vmatprep.subr.bf16.mxu0 0
        %3125 = vmatpush2.bf16.msra.mxu0 0
        %3126 = vmatprep.subr.bf16.mxu0 0
        %3127 = vmatpush2.bf16.msra.mxu0 0
        %3128 = vmatprep.subr.bf16.mxu0 0
        %3129 = vmatpush2.bf16.msra.mxu0 0
        %3130 = vmatprep.subr.bf16.mxu0 0
        %3131 = vmatpush2.bf16.msra.mxu0 0
        %3132 = vmatprep.subr.bf16.mxu0 0
        %3133 = vmatpush2.bf16.msra.mxu0 0
        %3134 = vmatprep.subr.bf16.mxu0 0
        %3135 = vmatpush2.bf16.msra.mxu0 0
        %3136 = vmatprep.subr.bf16.mxu0 0
        %3137 = vmatpush2.bf16.msra.mxu0 0
        %3138 = vmatprep.mubr.bf16.mxu0 0
        %3139 = vmatmul.mubr.bf16.gmra.mxu0 %v3104
        %v3140 = vpop.f32.mrf.mxu0
        %v3141 = vadd.f32 %v3100, %v3140
        %v3142 = vpop.f32.mrf.mxu0
        %v3143 = vpop.f32.mrf.mxu0
        %v3144 = vpop.f32.mrf.mxu0
        %3145 = vdwg.mxu0
        %v3146 = vmax.f32 %v3141, 0.0
        %v3147 = vpack.c.bf16 %v3146, %v3146
        %v3152 = vunpack.c.l.b16 %v270
        %v3153 = vunpack.c.l.b16 %v271
        %v3154 = vunpack.c.l.b16 %v272
        %v3155 = vunpack.c.l.b16 %v273
        %v3156 = vpack.c.b16 %v3153, %v3152
        %v3157 = vpack.c.b16 %v3155, %v3154
        %3161 = vrot.lane.b32.xlu0 %v258, 64
        %v3162 = vpop.permute.xlu0 %3161
        %3163 = vrot.lane.b32.xlu0 %v259, 64
        %v3164 = vpop.permute.xlu0 %3163
        %vm3165 = vcmask 523264
        %v3166 = vsel %vm3165, %v3162, %v3164
        %v3169 = vsel %vm3102, %v3147, 0
        %3171 = vmatprep.subr.bf16.mxu0 0
        %3172 = vmatpush1.bf16.msra.mxu0 0
        %3173 = vmatprep.subr.bf16.mxu0 0
        %3174 = vmatpush1.bf16.msra.mxu0 0
        %3175 = vmatprep.subr.bf16.mxu0 0
        %3176 = vmatpush1.bf16.msra.mxu0 0
        %3177 = vmatprep.subr.bf16.mxu0 0
        %3178 = vmatpush1.bf16.msra.mxu0 0
        %3179 = vmatprep.subr.bf16.mxu0 0
        %3180 = vmatpush1.bf16.msra.mxu0 0
        %3181 = vmatprep.subr.bf16.mxu0 0
        %3182 = vmatpush1.bf16.msra.mxu0 0
        %3183 = vmatprep.subr.bf16.mxu0 0
        %3184 = vmatpush1.bf16.msra.mxu0 %v3157
        %3185 = vmatprep.subr.bf16.mxu0 0
        %3186 = vmatpush1.bf16.msra.mxu0 %v3156
        %3187 = vmatprep.subr.bf16.mxu0 0
        %3188 = vmatpush2.bf16.msra.mxu0 0
        %3189 = vmatprep.subr.bf16.mxu0 0
        %3190 = vmatpush2.bf16.msra.mxu0 0
        %3191 = vmatprep.subr.bf16.mxu0 0
        %3192 = vmatpush2.bf16.msra.mxu0 0
        %3193 = vmatprep.subr.bf16.mxu0 0
        %3194 = vmatpush2.bf16.msra.mxu0 0
        %3195 = vmatprep.subr.bf16.mxu0 0
        %3196 = vmatpush2.bf16.msra.mxu0 0
        %3197 = vmatprep.subr.bf16.mxu0 0
        %3198 = vmatpush2.bf16.msra.mxu0 0
        %3199 = vmatprep.subr.bf16.mxu0 0
        %3200 = vmatpush2.bf16.msra.mxu0 0
        %3201 = vmatprep.subr.bf16.mxu0 0
        %3202 = vmatpush2.bf16.msra.mxu0 0
        %3203 = vmatprep.mubr.bf16.mxu0 0
        %3204 = vmatmul.mubr.bf16.gmra.mxu0 %v3169
        %v3205 = vpop.f32.mrf.mxu0
        %v3206 = vadd.f32 %v3166, %v3205
        %v3207 = vpop.f32.mrf.mxu0
        %v3208 = vpop.f32.mrf.mxu0
        %v3209 = vpop.f32.mrf.mxu0
        %3210 = vdwg.mxu0
        %3211 = vst [vmem:[%s216] sm:$0x1] %v3206
        %s3212 = sand.u32 %s137, 1
        %s3213 = scalar_lea.sflag [#allocation5], %s3212
        %s3214 = sand.u32 %s137, 1
        %s3215 = scalar_lea.vmem [#allocation4], %s3214
        // Predicated region
        $region41: #{dqn_map_net_forward.1} parent=39 // pred_check
          %p3216 = pneg %p147
        $region42: #{dqn_map_net_forward.1} parent=39 // pred_check_branch
          %3218 = sbr.rel (%p3216) target = $region44
        $region43: #{dqn_map_net_forward.1} parent=39 // pred_region
          %s3220 = ssub.s32 16, 16
          %3221 = vsyncadd %s3213, %s3220
          %s3222 = smul.addr %s19, 16
          %s3223 = scalar_lea.hbm %s5, %s3222
          %s3225 = sshll.u32 %s3215, 4
          %s3226 = int_to_ptr.vmem [resolvable:$true] %s3225
          %3228 = dma.vmem_to_hbm [thread:$0]  %s3226, 16, %s3223, %s3213
        $region44: #{dqn_map_net_forward.1} parent=39 // pred_fallthru
          _
      $region40: #{dqn_map_net_forward.1} parent=5 // pred_fallthru
        _
      %p3229 = scmp.le.s32.totalorder 2, %s14
      // Predicated region
      $region45: #{dqn_map_net_forward.1} parent=5 // pred_check
        %p3230 = pneg %p3229
      $region46: #{dqn_map_net_forward.1} parent=5 // pred_check_branch
        %3232 = sbr.rel (%p3230) target = $region48
      $region47: #{dqn_map_net_forward.1} parent=5 // pred_region
        %s3233 = ssub.s32 %s14, 2
        // Predicated region
        $region49: #{dqn_map_net_forward.1} parent=47 // pred_check
          %p3234 = pneg %p153
        $region50: #{dqn_map_net_forward.1} parent=47 // pred_check_branch
          %3236 = sbr.rel (%p3234) target = $region52
        $region51: #{dqn_map_net_forward.1} parent=47 // pred_region
          %s3237 = sand.u32 %s138, 1
          %s3238 = scalar_lea.sflag [#allocation5], %s3237
          %s3239 = sand.u32 %s138, 1
          %s3240 = scalar_lea.vmem [#allocation4], %s3239
          %3241 = dma.done %s3238, 16
        $region52: #{dqn_map_net_forward.1} parent=47 // pred_fallthru
          _
      $region48: #{dqn_map_net_forward.1} parent=5 // pred_fallthru
        _
    $region6: #{dqn_map_net_forward.1} parent=1 // loop_footer
      %s18 = sadd.s32 1, %s14
    $region7: #{dqn_map_net_forward.1} parent=1 // loop_footer_branch
      %13 = sbr.rel target = $region3
    $region8: #{dqn_map_net_forward.1} parent=1 // loop_exit
      _
    %3242 = vsyncpa [#allocation5], 1
    %s3243 = scalar_lea.sflag [#allocation5], 1
    %3244 = vsyncpa %s3243, 1

</llo_original>
